<compile_context>
chip_gen: v5e
topology: v5e:2x2
jax: 0.10.0
libtpu: 0.0.40
codegen_flags: <defaults>
</compile_context>

<pallas_src>
import jax
import jax.numpy as jnp
from jax import lax
from jax.experimental import pallas as pl
from jax.experimental.pallas import tpu as pltpu

EPS = 1e-5


def _sfc_kernel(x_ref, wse_ref, bse_ref, whd_ref, bhd_ref, wft_ref, bf_ref,
                out_ref, xpad_ref, hpad_ref):
    _, H, W, Cin = x_ref.shape
    E = wse_ref.shape[2]
    HW = H * W

    # Zero the padded halo frames.  Only the 1-px rim needs to stay zero (the
    # interior is fully overwritten below); re-zeroing each step keeps the
    # kernel correct under "parallel" batch splitting and costs ~15 KB of
    # VMEM stores.
    xpad_ref[...] = jnp.zeros((H + 2, W + 2, Cin), jnp.float32)
    hpad_ref[...] = jnp.zeros((H + 2, W + 2, E), jnp.float32)

    # ---- se_conv: 3x3 grouped conv (densified) + folded se_bn + ReLU -------
    xpad_ref[1:H + 1, 1:W + 1, :] = x_ref[0]
    acc = jnp.zeros((HW, E), jnp.float32)
    for kh in range(3):
        for kw in range(3):
            win = xpad_ref[kh:kh + H, kw:kw + W, :].reshape(HW, Cin)
            acc = acc + jnp.dot(win, wse_ref[kh * 3 + kw],
                                preferred_element_type=jnp.float32)
    acc = jnp.maximum(acc + bse_ref[...], 0.0)

    # ---- hd_conv: 3x3 grouped conv (densified) + folded hd_bn + ReLU -------
    hpad_ref[1:H + 1, 1:W + 1, :] = acc.reshape(H, W, E)
    acc2 = jnp.zeros((HW, E), jnp.float32)
    for kh in range(3):
        for kw in range(3):
            win = hpad_ref[kh:kh + H, kw:kw + W, :].reshape(HW, E)
            acc2 = acc2 + jnp.dot(win, whd_ref[kh * 3 + kw],
                                  preferred_element_type=jnp.float32)
    acc2 = jnp.maximum(acc2 + bhd_ref[...], 0.0)

    # ---- fused cp_conv + cp_bn + pw_conv + pw_bn (single matmul) + ReLU ----
    # NT contraction: wft (O, E) . acc2 (HW, E) contracted on E -> (O, HW).
    # Result is channels-major so the output store / HBM writeback is
    # lane-dense (last dim = HW >= 128) instead of masked 8-lane stores.
    zt = lax.dot_general(wft_ref[...], acc2,
                         dimension_numbers=(((1,), (1,)), ((), ())),
                         preferred_element_type=jnp.float32)
    zt = jnp.maximum(zt + bf_ref[...], 0.0)
    out_ref[0] = zt.astype(out_ref.dtype)


def grouped_to_dense(w, groups):
    """Torch grouped conv weight (O, I//g, KH, KW) -> dense (KH*KW, I, O) with
    exact zeros off the group block-diagonal (numerically identical conv)."""
    Ochs, Ig, KH, KW = w.shape
    Og = Ochs // groups
    I = Ig * groups
    dense = jnp.zeros((KH, KW, I, Ochs), w.dtype)
    for g in range(groups):
        blk = jnp.transpose(w[g * Og:(g + 1) * Og], (2, 3, 1, 0))   # (KH,KW,Ig,Og)
        dense = dense.at[:, :, g * Ig:(g + 1) * Ig,
                         g * Og:(g + 1) * Og].set(blk)
    return dense.reshape(KH * KW, I, Ochs)


def sfc_forward(x_nchw, p, groups):
    """Pallas implementation. Input/output NCHW (PyTorch convention)."""
    N, Cin, H, W = x_nchw.shape
    assert Cin == groups
    f32 = jnp.float32
    x = jnp.transpose(x_nchw, (0, 2, 3, 1)).astype(f32)               # NHWC

    # ---- wrapper-side weight prep: densify groups + fold BN affines --------
    wse = grouped_to_dense(p["w_se"], groups).astype(f32)             # (9, Cin, E)
    whd = grouped_to_dense(p["w_hd"], groups).astype(f32)             # (9, E, E)
    wcp = grouped_to_dense(p["w_cp"], groups)[0].astype(f32)          # (E, O)
    wpw = grouped_to_dense(p["w_pw"], 1)[0].astype(f32)               # (O, O) in->out

    E = wse.shape[2]
    O = wpw.shape[1]

    wse_f = wse * p["s_se"][None, None, :]
    bse_f = (p["b_se"] * p["s_se"] + p["a_se"]).reshape(1, E).astype(f32)
    whd_f = whd * p["s_hd"][None, None, :]
    bhd_f = (p["b_hd"] * p["s_hd"] + p["a_hd"]).reshape(1, E).astype(f32)

    # cp_conv+cp_bn followed directly by pw_conv+pw_bn (no nonlinearity) fuse
    # into a single (E, O) matrix and (O,) bias.  Pass the matrix transposed
    # (O, E) so the kernel's NT contraction yields a channels-major result.
    A = wcp * p["s_cp"][None, :]
    c1 = p["b_cp"] * p["s_cp"] + p["a_cp"]
    B = wpw * p["s_pw"][None, :]
    c2 = p["b_pw"] * p["s_pw"] + p["a_pw"]
    wft = (A @ B).T.astype(f32)                                       # (O, E)
    bf = (c1 @ B + c2).reshape(O, 1).astype(f32)                      # (O, 1)

    def full(shape):
        return pl.BlockSpec(shape, lambda b: (0,) * len(shape))

    out3 = pl.pallas_call(
        _sfc_kernel,
        out_shape=jax.ShapeDtypeStruct((N, O, H * W), jnp.float32),
        grid_spec=pltpu.PrefetchScalarGridSpec(
            num_scalar_prefetch=0,
            grid=(N,),
            in_specs=[
                pl.BlockSpec((1, H, W, Cin), lambda b: (b, 0, 0, 0)),
                full((9, Cin, E)), full((1, E)),
                full((9, E, E)), full((1, E)),
                full((O, E)), full((O, 1)),
            ],
            out_specs=pl.BlockSpec((1, O, H * W), lambda b: (b, 0, 0)),
            scratch_shapes=[pltpu.VMEM((H + 2, W + 2, Cin), jnp.float32),
                            pltpu.VMEM((H + 2, W + 2, E), jnp.float32)],
        ),
        compiler_params=pltpu.CompilerParams(
            dimension_semantics=("parallel",)),
    )(x, wse_f, bse_f, whd_f, bhd_f, wft, bf)

    # Channels-major kernel output reshapes straight into NCHW (no transpose).
    return out3.reshape(N, O, H, W)


def ref_forward(x, p, groups):
    """Pure-JAX reference mirroring the PyTorch forward (eval-mode BN)."""
    def conv(x, w, b, g, pad):
        y = lax.conv_general_dilated(
            x, w, window_strides=(1, 1), padding=[(pad, pad), (pad, pad)],
            dimension_numbers=("NCHW", "OIHW", "NCHW"),
            feature_group_count=g)
        return y + b[None, :, None, None]

    def bn(x, s, a):
        return x * s[None, :, None, None] + a[None, :, None, None]

    x = jnp.maximum(bn(conv(x, p["w_se"], p["b_se"], groups, 1), p["s_se"], p["a_se"]), 0.0)
    x = jnp.maximum(bn(conv(x, p["w_hd"], p["b_hd"], groups, 1), p["s_hd"], p["a_hd"]), 0.0)
    x = bn(conv(x, p["w_cp"], p["b_cp"], groups, 0), p["s_cp"], p["a_cp"])
    x = jnp.maximum(bn(conv(x, p["w_pw"], p["b_pw"], 1, 0), p["s_pw"], p["a_pw"]), 0.0)
    return x


if __name__ == "__main__":
    key = jax.random.PRNGKey(0)
    N, Cin, H, W = 2, 4, 16, 16
    expansion = 2
    out_channels = 8
    E = Cin * expansion
    O = out_channels
    # num == 1 -> stride-1 se_conv (implemented).
    # TODO(synk): num != 1 (stride-2 se_conv) variant not implemented here.

    ks = iter(jax.random.split(key, 16))

    def nrm(k, shape, scale=0.2):
        return scale * jax.random.normal(k, shape, dtype=jnp.float32)

    def bn_params(k, C):
        k1, k2, k3, k4 = jax.random.split(k, 4)
        gamma = 1.0 + 0.1 * jax.random.normal(k1, (C,), jnp.float32)
        beta = 0.1 * jax.random.normal(k2, (C,), jnp.float32)
        mean = 0.1 * jax.random.normal(k3, (C,), jnp.float32)
        var = 0.5 + jnp.abs(jax.random.normal(k4, (C,), jnp.float32))
        scale = gamma / jnp.sqrt(var + EPS)
        bias = beta - mean * scale
        return scale, bias

    params = {
        "w_se": nrm(next(ks), (E, 1, 3, 3)),              # groups=Cin
        "b_se": nrm(next(ks), (E,)),
        "w_hd": nrm(next(ks), (E, E // Cin, 3, 3)),       # groups=Cin
        "b_hd": nrm(next(ks), (E,)),
        "w_cp": nrm(next(ks), (O, E // Cin, 1, 1)),       # groups=Cin
        "b_cp": nrm(next(ks), (O,)),
        "w_pw": nrm(next(ks), (O, O, 1, 1)),              # dense 1x1
        "b_pw": nrm(next(ks), (O,)),
    }
    params["s_se"], params["a_se"] = bn_params(next(ks), E)
    params["s_hd"], params["a_hd"] = bn_params(next(ks), E)
    params["s_cp"], params["a_cp"] = bn_params(next(ks), O)
    params["s_pw"], params["a_pw"] = bn_params(next(ks), O)

    x = jax.random.normal(next(ks), (N, Cin, H, W), dtype=jnp.float32)

    out = sfc_forward(x, params, Cin)
    out = jax.block_until_ready(out)

    ref = ref_forward(x, params, Cin)
    assert out.shape == (N, O, H, W), out.shape
    max_err = float(jnp.max(jnp.abs(out - ref)))
    assert max_err < 1e-3, f"max abs err {max_err}"
    print("KERNEL_OK")
</pallas_src>

<mosaic_0001>
module attributes {stable_mosaic.version = 11 : i64} {
  func.func @_sfc_kernel(%arg0: i32, %arg1: memref<1x16x16x4xf32, #tpu.memory_space<vmem>>, %arg2: memref<9x4x8xf32, #tpu.memory_space<vmem>>, %arg3: memref<1x8xf32, #tpu.memory_space<vmem>>, %arg4: memref<9x8x8xf32, #tpu.memory_space<vmem>>, %arg5: memref<1x8xf32, #tpu.memory_space<vmem>>, %arg6: memref<8x8xf32, #tpu.memory_space<vmem>>, %arg7: memref<8x1xf32, #tpu.memory_space<vmem>>, %arg8: memref<1x8x256xf32, #tpu.memory_space<vmem>>, %arg9: memref<18x18x4xf32, #tpu.memory_space<vmem>>, %arg10: memref<18x18x8xf32, #tpu.memory_space<vmem>>) attributes {dimension_semantics = [#tpu.dimension_semantics<parallel>], iteration_bounds = array<i64: 2>, scalar_prefetch = 0 : i64, scratch_operands = 2 : i64, tpu.core_type = #tpu.core_type<tc>, window_params = [{transform_indices = @transform_0, window_bounds = array<i64: 1, 16, 16, 4>}, {pipeline_mode = #tpu.pipeline_mode<synchronous>, transform_indices = @transform_1, window_bounds = array<i64: 9, 4, 8>}, {pipeline_mode = #tpu.pipeline_mode<synchronous>, transform_indices = @transform_2, window_bounds = array<i64: 1, 8>}, {pipeline_mode = #tpu.pipeline_mode<synchronous>, transform_indices = @transform_3, window_bounds = array<i64: 9, 8, 8>}, {pipeline_mode = #tpu.pipeline_mode<synchronous>, transform_indices = @transform_4, window_bounds = array<i64: 1, 8>}, {pipeline_mode = #tpu.pipeline_mode<synchronous>, transform_indices = @transform_5, window_bounds = array<i64: 8, 8>}, {pipeline_mode = #tpu.pipeline_mode<synchronous>, transform_indices = @transform_6, window_bounds = array<i64: 8, 1>}, {transform_indices = @transform_7, window_bounds = array<i64: 1, 8, 256>}]} {
    %cst = arith.constant 0.000000e+00 : f32
    %0 = vector.broadcast %cst : f32 to vector<18x18x4xf32>
    %c0 = arith.constant 0 : index
    %c0_0 = arith.constant 0 : index
    %c0_1 = arith.constant 0 : index
    %1 = vector.load %arg9[%c0, %c0_0, %c0_1] : memref<18x18x4xf32, #tpu.memory_space<vmem>>, vector<18x18x4xf32>
    tpu.vector_store %arg9[%c0, %c0_0, %c0_1], %0 {strides = array<i32>} : memref<18x18x4xf32, #tpu.memory_space<vmem>>, vector<18x18x4xf32>,
    %cst_2 = arith.constant 0.000000e+00 : f32
    %2 = vector.broadcast %cst_2 : f32 to vector<18x18x8xf32>
    %c0_3 = arith.constant 0 : index
    %c0_4 = arith.constant 0 : index
    %c0_5 = arith.constant 0 : index
    %3 = vector.load %arg10[%c0_3, %c0_4, %c0_5] : memref<18x18x8xf32, #tpu.memory_space<vmem>>, vector<18x18x8xf32>
    tpu.vector_store %arg10[%c0_3, %c0_4, %c0_5], %2 {strides = array<i32>} : memref<18x18x8xf32, #tpu.memory_space<vmem>>, vector<18x18x8xf32>,
    %c0_6 = arith.constant 0 : index
    %c0_7 = arith.constant 0 : index
    %c0_8 = arith.constant 0 : index
    %c0_9 = arith.constant 0 : index
    %4 = vector.load %arg1[%c0_6, %c0_7, %c0_8, %c0_9] : memref<1x16x16x4xf32, #tpu.memory_space<vmem>>, vector<1x16x16x4xf32>
    %5 = vector.shape_cast %4 : vector<1x16x16x4xf32> to vector<16x16x4xf32>
    %c1 = arith.constant 1 : index
    %c1_10 = arith.constant 1 : index
    %c0_11 = arith.constant 0 : index
    %6 = vector.load %arg9[%c1, %c1_10, %c0_11] : memref<18x18x4xf32, #tpu.memory_space<vmem>>, vector<16x16x4xf32>
    tpu.vector_store %arg9[%c1, %c1_10, %c0_11], %5 {strides = array<i32>} : memref<18x18x4xf32, #tpu.memory_space<vmem>>, vector<16x16x4xf32>,
    %cst_12 = arith.constant 0.000000e+00 : f32
    %7 = vector.broadcast %cst_12 : f32 to vector<256x8xf32>
    %c0_13 = arith.constant 0 : index
    %c0_14 = arith.constant 0 : index
    %c0_15 = arith.constant 0 : index
    %8 = vector.load %arg9[%c0_13, %c0_14, %c0_15] : memref<18x18x4xf32, #tpu.memory_space<vmem>>, vector<16x16x4xf32>
    %9 = vector.shape_cast %8 : vector<16x16x4xf32> to vector<256x4xf32>
    %c0_16 = arith.constant 0 : index
    %c0_17 = arith.constant 0 : index
    %c0_18 = arith.constant 0 : index
    %10 = vector.load %arg2[%c0_16, %c0_17, %c0_18] : memref<9x4x8xf32, #tpu.memory_space<vmem>>, vector<1x4x8xf32>
    %11 = vector.shape_cast %10 : vector<1x4x8xf32> to vector<4x8xf32>
    %cst_19 = arith.constant dense<0.000000e+00> : vector<256x8xf32>
    %12 = tpu.matmul %9, %11, %cst_19 {dimension_numbers = #tpu.dot_dimension_numbers<[1], [0], [0], [1], [0, 0, 1, 1], [], []>} : vector<256x4xf32>, vector<4x8xf32>, vector<256x8xf32> -> vector<256x8xf32>
    %13 = arith.addf %7, %12 : vector<256x8xf32>
    %c0_20 = arith.constant 0 : index
    %c1_21 = arith.constant 1 : index
    %c0_22 = arith.constant 0 : index
    %14 = vector.load %arg9[%c0_20, %c1_21, %c0_22] : memref<18x18x4xf32, #tpu.memory_space<vmem>>, vector<16x16x4xf32>
    %15 = vector.shape_cast %14 : vector<16x16x4xf32> to vector<256x4xf32>
    %c1_23 = arith.constant 1 : index
    %c0_24 = arith.constant 0 : index
    %c0_25 = arith.constant 0 : index
    %16 = vector.load %arg2[%c1_23, %c0_24, %c0_25] : memref<9x4x8xf32, #tpu.memory_space<vmem>>, vector<1x4x8xf32>
    %17 = vector.shape_cast %16 : vector<1x4x8xf32> to vector<4x8xf32>
    %cst_26 = arith.constant dense<0.000000e+00> : vector<256x8xf32>
    %18 = tpu.matmul %15, %17, %cst_26 {dimension_numbers = #tpu.dot_dimension_numbers<[1], [0], [0], [1], [0, 0, 1, 1], [], []>} : vector<256x4xf32>, vector<4x8xf32>, vector<256x8xf32> -> vector<256x8xf32>
    %19 = arith.addf %13, %18 : vector<256x8xf32>
    %c0_27 = arith.constant 0 : index
    %c2 = arith.constant 2 : index
    %c0_28 = arith.constant 0 : index
    %20 = vector.load %arg9[%c0_27, %c2, %c0_28] : memref<18x18x4xf32, #tpu.memory_space<vmem>>, vector<16x16x4xf32>
    %21 = vector.shape_cast %20 : vector<16x16x4xf32> to vector<256x4xf32>
    %c2_29 = arith.constant 2 : index
    %c0_30 = arith.constant 0 : index
    %c0_31 = arith.constant 0 : index
    %22 = vector.load %arg2[%c2_29, %c0_30, %c0_31] : memref<9x4x8xf32, #tpu.memory_space<vmem>>, vector<1x4x8xf32>
    %23 = vector.shape_cast %22 : vector<1x4x8xf32> to vector<4x8xf32>
    %cst_32 = arith.constant dense<0.000000e+00> : vector<256x8xf32>
    %24 = tpu.matmul %21, %23, %cst_32 {dimension_numbers = #tpu.dot_dimension_numbers<[1], [0], [0], [1], [0, 0, 1, 1], [], []>} : vector<256x4xf32>, vector<4x8xf32>, vector<256x8xf32> -> vector<256x8xf32>
    %25 = arith.addf %19, %24 : vector<256x8xf32>
    %c1_33 = arith.constant 1 : index
    %c0_34 = arith.constant 0 : index
    %c0_35 = arith.constant 0 : index
    %26 = vector.load %arg9[%c1_33, %c0_34, %c0_35] : memref<18x18x4xf32, #tpu.memory_space<vmem>>, vector<16x16x4xf32>
    %27 = vector.shape_cast %26 : vector<16x16x4xf32> to vector<256x4xf32>
    %c3 = arith.constant 3 : index
    %c0_36 = arith.constant 0 : index
    %c0_37 = arith.constant 0 : index
    %28 = vector.load %arg2[%c3, %c0_36, %c0_37] : memref<9x4x8xf32, #tpu.memory_space<vmem>>, vector<1x4x8xf32>
    %29 = vector.shape_cast %28 : vector<1x4x8xf32> to vector<4x8xf32>
    %cst_38 = arith.constant dense<0.000000e+00> : vector<256x8xf32>
    %30 = tpu.matmul %27, %29, %cst_38 {dimension_numbers = #tpu.dot_dimension_numbers<[1], [0], [0], [1], [0, 0, 1, 1], [], []>} : vector<256x4xf32>, vector<4x8xf32>, vector<256x8xf32> -> vector<256x8xf32>
    %31 = arith.addf %25, %30 : vector<256x8xf32>
    %c1_39 = arith.constant 1 : index
    %c1_40 = arith.constant 1 : index
    %c0_41 = arith.constant 0 : index
    %32 = vector.load %arg9[%c1_39, %c1_40, %c0_41] : memref<18x18x4xf32, #tpu.memory_space<vmem>>, vector<16x16x4xf32>
    %33 = vector.shape_cast %32 : vector<16x16x4xf32> to vector<256x4xf32>
    %c4 = arith.constant 4 : index
    %c0_42 = arith.constant 0 : index
    %c0_43 = arith.constant 0 : index
    %34 = vector.load %arg2[%c4, %c0_42, %c0_43] : memref<9x4x8xf32, #tpu.memory_space<vmem>>, vector<1x4x8xf32>
    %35 = vector.shape_cast %34 : vector<1x4x8xf32> to vector<4x8xf32>
    %cst_44 = arith.constant dense<0.000000e+00> : vector<256x8xf32>
    %36 = tpu.matmul %33, %35, %cst_44 {dimension_numbers = #tpu.dot_dimension_numbers<[1], [0], [0], [1], [0, 0, 1, 1], [], []>} : vector<256x4xf32>, vector<4x8xf32>, vector<256x8xf32> -> vector<256x8xf32>
    %37 = arith.addf %31, %36 : vector<256x8xf32>
    %c1_45 = arith.constant 1 : index
    %c2_46 = arith.constant 2 : index
    %c0_47 = arith.constant 0 : index
    %38 = vector.load %arg9[%c1_45, %c2_46, %c0_47] : memref<18x18x4xf32, #tpu.memory_space<vmem>>, vector<16x16x4xf32>
    %39 = vector.shape_cast %38 : vector<16x16x4xf32> to vector<256x4xf32>
    %c5 = arith.constant 5 : index
    %c0_48 = arith.constant 0 : index
    %c0_49 = arith.constant 0 : index
    %40 = vector.load %arg2[%c5, %c0_48, %c0_49] : memref<9x4x8xf32, #tpu.memory_space<vmem>>, vector<1x4x8xf32>
    %41 = vector.shape_cast %40 : vector<1x4x8xf32> to vector<4x8xf32>
    %cst_50 = arith.constant dense<0.000000e+00> : vector<256x8xf32>
    %42 = tpu.matmul %39, %41, %cst_50 {dimension_numbers = #tpu.dot_dimension_numbers<[1], [0], [0], [1], [0, 0, 1, 1], [], []>} : vector<256x4xf32>, vector<4x8xf32>, vector<256x8xf32> -> vector<256x8xf32>
    %43 = arith.addf %37, %42 : vector<256x8xf32>
    %c2_51 = arith.constant 2 : index
    %c0_52 = arith.constant 0 : index
    %c0_53 = arith.constant 0 : index
    %44 = vector.load %arg9[%c2_51, %c0_52, %c0_53] : memref<18x18x4xf32, #tpu.memory_space<vmem>>, vector<16x16x4xf32>
    %45 = vector.shape_cast %44 : vector<16x16x4xf32> to vector<256x4xf32>
    %c6 = arith.constant 6 : index
    %c0_54 = arith.constant 0 : index
    %c0_55 = arith.constant 0 : index
    %46 = vector.load %arg2[%c6, %c0_54, %c0_55] : memref<9x4x8xf32, #tpu.memory_space<vmem>>, vector<1x4x8xf32>
    %47 = vector.shape_cast %46 : vector<1x4x8xf32> to vector<4x8xf32>
    %cst_56 = arith.constant dense<0.000000e+00> : vector<256x8xf32>
    %48 = tpu.matmul %45, %47, %cst_56 {dimension_numbers = #tpu.dot_dimension_numbers<[1], [0], [0], [1], [0, 0, 1, 1], [], []>} : vector<256x4xf32>, vector<4x8xf32>, vector<256x8xf32> -> vector<256x8xf32>
    %49 = arith.addf %43, %48 : vector<256x8xf32>
    %c2_57 = arith.constant 2 : index
    %c1_58 = arith.constant 1 : index
    %c0_59 = arith.constant 0 : index
    %50 = vector.load %arg9[%c2_57, %c1_58, %c0_59] : memref<18x18x4xf32, #tpu.memory_space<vmem>>, vector<16x16x4xf32>
    %51 = vector.shape_cast %50 : vector<16x16x4xf32> to vector<256x4xf32>
    %c7 = arith.constant 7 : index
    %c0_60 = arith.constant 0 : index
    %c0_61 = arith.constant 0 : index
    %52 = vector.load %arg2[%c7, %c0_60, %c0_61] : memref<9x4x8xf32, #tpu.memory_space<vmem>>, vector<1x4x8xf32>
    %53 = vector.shape_cast %52 : vector<1x4x8xf32> to vector<4x8xf32>
    %cst_62 = arith.constant dense<0.000000e+00> : vector<256x8xf32>
    %54 = tpu.matmul %51, %53, %cst_62 {dimension_numbers = #tpu.dot_dimension_numbers<[1], [0], [0], [1], [0, 0, 1, 1], [], []>} : vector<256x4xf32>, vector<4x8xf32>, vector<256x8xf32> -> vector<256x8xf32>
    %55 = arith.addf %49, %54 : vector<256x8xf32>
    %c2_63 = arith.constant 2 : index
    %c2_64 = arith.constant 2 : index
    %c0_65 = arith.constant 0 : index
    %56 = vector.load %arg9[%c2_63, %c2_64, %c0_65] : memref<18x18x4xf32, #tpu.memory_space<vmem>>, vector<16x16x4xf32>
    %57 = vector.shape_cast %56 : vector<16x16x4xf32> to vector<256x4xf32>
    %c8 = arith.constant 8 : index
    %c0_66 = arith.constant 0 : index
    %c0_67 = arith.constant 0 : index
    %58 = vector.load %arg2[%c8, %c0_66, %c0_67] : memref<9x4x8xf32, #tpu.memory_space<vmem>>, vector<1x4x8xf32>
    %59 = vector.shape_cast %58 : vector<1x4x8xf32> to vector<4x8xf32>
    %cst_68 = arith.constant dense<0.000000e+00> : vector<256x8xf32>
    %60 = tpu.matmul %57, %59, %cst_68 {dimension_numbers = #tpu.dot_dimension_numbers<[1], [0], [0], [1], [0, 0, 1, 1], [], []>} : vector<256x4xf32>, vector<4x8xf32>, vector<256x8xf32> -> vector<256x8xf32>
    %61 = arith.addf %55, %60 : vector<256x8xf32>
    %c0_69 = arith.constant 0 : index
    %c0_70 = arith.constant 0 : index
    %62 = vector.load %arg3[%c0_69, %c0_70] : memref<1x8xf32, #tpu.memory_space<vmem>>, vector<1x8xf32>
    %63 = vector.broadcast %62 : vector<1x8xf32> to vector<256x8xf32>
    %64 = arith.addf %61, %63 : vector<256x8xf32>
    %cst_71 = arith.constant 0.000000e+00 : f32
    %65 = vector.broadcast %cst_71 : f32 to vector<256x8xf32>
    %66 = arith.maximumf %64, %65 : vector<256x8xf32>
    %67 = vector.shape_cast %66 : vector<256x8xf32> to vector<16x16x8xf32>
    %c1_72 = arith.constant 1 : index
    %c1_73 = arith.constant 1 : index
    %c0_74 = arith.constant 0 : index
    %68 = vector.load %arg10[%c1_72, %c1_73, %c0_74] : memref<18x18x8xf32, #tpu.memory_space<vmem>>, vector<16x16x8xf32>
    tpu.vector_store %arg10[%c1_72, %c1_73, %c0_74], %67 {strides = array<i32>} : memref<18x18x8xf32, #tpu.memory_space<vmem>>, vector<16x16x8xf32>,
    %cst_75 = arith.constant 0.000000e+00 : f32
    %69 = vector.broadcast %cst_75 : f32 to vector<256x8xf32>
    %c0_76 = arith.constant 0 : index
    %c0_77 = arith.constant 0 : index
    %c0_78 = arith.constant 0 : index
    %70 = vector.load %arg10[%c0_76, %c0_77, %c0_78] : memref<18x18x8xf32, #tpu.memory_space<vmem>>, vector<16x16x8xf32>
    %71 = vector.shape_cast %70 : vector<16x16x8xf32> to vector<256x8xf32>
    %c0_79 = arith.constant 0 : index
    %c0_80 = arith.constant 0 : index
    %c0_81 = arith.constant 0 : index
    %72 = vector.load %arg4[%c0_79, %c0_80, %c0_81] : memref<9x8x8xf32, #tpu.memory_space<vmem>>, vector<1x8x8xf32>
    %73 = vector.shape_cast %72 : vector<1x8x8xf32> to vector<8x8xf32>
    %cst_82 = arith.constant dense<0.000000e+00> : vector<256x8xf32>
    %74 = tpu.matmul %71, %73, %cst_82 {dimension_numbers = #tpu.dot_dimension_numbers<[1], [0], [0], [1], [0, 0, 1, 1], [], []>} : vector<256x8xf32>, vector<8x8xf32>, vector<256x8xf32> -> vector<256x8xf32>
    %75 = arith.addf %69, %74 : vector<256x8xf32>
    %c0_83 = arith.constant 0 : index
    %c1_84 = arith.constant 1 : index
    %c0_85 = arith.constant 0 : index
    %76 = vector.load %arg10[%c0_83, %c1_84, %c0_85] : memref<18x18x8xf32, #tpu.memory_space<vmem>>, vector<16x16x8xf32>
    %77 = vector.shape_cast %76 : vector<16x16x8xf32> to vector<256x8xf32>
    %c1_86 = arith.constant 1 : index
    %c0_87 = arith.constant 0 : index
    %c0_88 = arith.constant 0 : index
    %78 = vector.load %arg4[%c1_86, %c0_87, %c0_88] : memref<9x8x8xf32, #tpu.memory_space<vmem>>, vector<1x8x8xf32>
    %79 = vector.shape_cast %78 : vector<1x8x8xf32> to vector<8x8xf32>
    %cst_89 = arith.constant dense<0.000000e+00> : vector<256x8xf32>
    %80 = tpu.matmul %77, %79, %cst_89 {dimension_numbers = #tpu.dot_dimension_numbers<[1], [0], [0], [1], [0, 0, 1, 1], [], []>} : vector<256x8xf32>, vector<8x8xf32>, vector<256x8xf32> -> vector<256x8xf32>
    %81 = arith.addf %75, %80 : vector<256x8xf32>
    %c0_90 = arith.constant 0 : index
    %c2_91 = arith.constant 2 : index
    %c0_92 = arith.constant 0 : index
    %82 = vector.load %arg10[%c0_90, %c2_91, %c0_92] : memref<18x18x8xf32, #tpu.memory_space<vmem>>, vector<16x16x8xf32>
    %83 = vector.shape_cast %82 : vector<16x16x8xf32> to vector<256x8xf32>
    %c2_93 = arith.constant 2 : index
    %c0_94 = arith.constant 0 : index
    %c0_95 = arith.constant 0 : index
    %84 = vector.load %arg4[%c2_93, %c0_94, %c0_95] : memref<9x8x8xf32, #tpu.memory_space<vmem>>, vector<1x8x8xf32>
    %85 = vector.shape_cast %84 : vector<1x8x8xf32> to vector<8x8xf32>
    %cst_96 = arith.constant dense<0.000000e+00> : vector<256x8xf32>
    %86 = tpu.matmul %83, %85, %cst_96 {dimension_numbers = #tpu.dot_dimension_numbers<[1], [0], [0], [1], [0, 0, 1, 1], [], []>} : vector<256x8xf32>, vector<8x8xf32>, vector<256x8xf32> -> vector<256x8xf32>
    %87 = arith.addf %81, %86 : vector<256x8xf32>
    %c1_97 = arith.constant 1 : index
    %c0_98 = arith.constant 0 : index
    %c0_99 = arith.constant 0 : index
    %88 = vector.load %arg10[%c1_97, %c0_98, %c0_99] : memref<18x18x8xf32, #tpu.memory_space<vmem>>, vector<16x16x8xf32>
    %89 = vector.shape_cast %88 : vector<16x16x8xf32> to vector<256x8xf32>
    %c3_100 = arith.constant 3 : index
    %c0_101 = arith.constant 0 : index
    %c0_102 = arith.constant 0 : index
    %90 = vector.load %arg4[%c3_100, %c0_101, %c0_102] : memref<9x8x8xf32, #tpu.memory_space<vmem>>, vector<1x8x8xf32>
    %91 = vector.shape_cast %90 : vector<1x8x8xf32> to vector<8x8xf32>
    %cst_103 = arith.constant dense<0.000000e+00> : vector<256x8xf32>
    %92 = tpu.matmul %89, %91, %cst_103 {dimension_numbers = #tpu.dot_dimension_numbers<[1], [0], [0], [1], [0, 0, 1, 1], [], []>} : vector<256x8xf32>, vector<8x8xf32>, vector<256x8xf32> -> vector<256x8xf32>
    %93 = arith.addf %87, %92 : vector<256x8xf32>
    %c1_104 = arith.constant 1 : index
    %c1_105 = arith.constant 1 : index
    %c0_106 = arith.constant 0 : index
    %94 = vector.load %arg10[%c1_104, %c1_105, %c0_106] : memref<18x18x8xf32, #tpu.memory_space<vmem>>, vector<16x16x8xf32>
    %95 = vector.shape_cast %94 : vector<16x16x8xf32> to vector<256x8xf32>
    %c4_107 = arith.constant 4 : index
    %c0_108 = arith.constant 0 : index
    %c0_109 = arith.constant 0 : index
    %96 = vector.load %arg4[%c4_107, %c0_108, %c0_109] : memref<9x8x8xf32, #tpu.memory_space<vmem>>, vector<1x8x8xf32>
    %97 = vector.shape_cast %96 : vector<1x8x8xf32> to vector<8x8xf32>
    %cst_110 = arith.constant dense<0.000000e+00> : vector<256x8xf32>
    %98 = tpu.matmul %95, %97, %cst_110 {dimension_numbers = #tpu.dot_dimension_numbers<[1], [0], [0], [1], [0, 0, 1, 1], [], []>} : vector<256x8xf32>, vector<8x8xf32>, vector<256x8xf32> -> vector<256x8xf32>
    %99 = arith.addf %93, %98 : vector<256x8xf32>
    %c1_111 = arith.constant 1 : index
    %c2_112 = arith.constant 2 : index
    %c0_113 = arith.constant 0 : index
    %100 = vector.load %arg10[%c1_111, %c2_112, %c0_113] : memref<18x18x8xf32, #tpu.memory_space<vmem>>, vector<16x16x8xf32>
    %101 = vector.shape_cast %100 : vector<16x16x8xf32> to vector<256x8xf32>
    %c5_114 = arith.constant 5 : index
    %c0_115 = arith.constant 0 : index
    %c0_116 = arith.constant 0 : index
    %102 = vector.load %arg4[%c5_114, %c0_115, %c0_116] : memref<9x8x8xf32, #tpu.memory_space<vmem>>, vector<1x8x8xf32>
    %103 = vector.shape_cast %102 : vector<1x8x8xf32> to vector<8x8xf32>
    %cst_117 = arith.constant dense<0.000000e+00> : vector<256x8xf32>
    %104 = tpu.matmul %101, %103, %cst_117 {dimension_numbers = #tpu.dot_dimension_numbers<[1], [0], [0], [1], [0, 0, 1, 1], [], []>} : vector<256x8xf32>, vector<8x8xf32>, vector<256x8xf32> -> vector<256x8xf32>
    %105 = arith.addf %99, %104 : vector<256x8xf32>
    %c2_118 = arith.constant 2 : index
    %c0_119 = arith.constant 0 : index
    %c0_120 = arith.constant 0 : index
    %106 = vector.load %arg10[%c2_118, %c0_119, %c0_120] : memref<18x18x8xf32, #tpu.memory_space<vmem>>, vector<16x16x8xf32>
    %107 = vector.shape_cast %106 : vector<16x16x8xf32> to vector<256x8xf32>
    %c6_121 = arith.constant 6 : index
    %c0_122 = arith.constant 0 : index
    %c0_123 = arith.constant 0 : index
    %108 = vector.load %arg4[%c6_121, %c0_122, %c0_123] : memref<9x8x8xf32, #tpu.memory_space<vmem>>, vector<1x8x8xf32>
    %109 = vector.shape_cast %108 : vector<1x8x8xf32> to vector<8x8xf32>
    %cst_124 = arith.constant dense<0.000000e+00> : vector<256x8xf32>
    %110 = tpu.matmul %107, %109, %cst_124 {dimension_numbers = #tpu.dot_dimension_numbers<[1], [0], [0], [1], [0, 0, 1, 1], [], []>} : vector<256x8xf32>, vector<8x8xf32>, vector<256x8xf32> -> vector<256x8xf32>
    %111 = arith.addf %105, %110 : vector<256x8xf32>
    %c2_125 = arith.constant 2 : index
    %c1_126 = arith.constant 1 : index
    %c0_127 = arith.constant 0 : index
    %112 = vector.load %arg10[%c2_125, %c1_126, %c0_127] : memref<18x18x8xf32, #tpu.memory_space<vmem>>, vector<16x16x8xf32>
    %113 = vector.shape_cast %112 : vector<16x16x8xf32> to vector<256x8xf32>
    %c7_128 = arith.constant 7 : index
    %c0_129 = arith.constant 0 : index
    %c0_130 = arith.constant 0 : index
    %114 = vector.load %arg4[%c7_128, %c0_129, %c0_130] : memref<9x8x8xf32, #tpu.memory_space<vmem>>, vector<1x8x8xf32>
    %115 = vector.shape_cast %114 : vector<1x8x8xf32> to vector<8x8xf32>
    %cst_131 = arith.constant dense<0.000000e+00> : vector<256x8xf32>
    %116 = tpu.matmul %113, %115, %cst_131 {dimension_numbers = #tpu.dot_dimension_numbers<[1], [0], [0], [1], [0, 0, 1, 1], [], []>} : vector<256x8xf32>, vector<8x8xf32>, vector<256x8xf32> -> vector<256x8xf32>
    %117 = arith.addf %111, %116 : vector<256x8xf32>
    %c2_132 = arith.constant 2 : index
    %c2_133 = arith.constant 2 : index
    %c0_134 = arith.constant 0 : index
    %118 = vector.load %arg10[%c2_132, %c2_133, %c0_134] : memref<18x18x8xf32, #tpu.memory_space<vmem>>, vector<16x16x8xf32>
    %119 = vector.shape_cast %118 : vector<16x16x8xf32> to vector<256x8xf32>
    %c8_135 = arith.constant 8 : index
    %c0_136 = arith.constant 0 : index
    %c0_137 = arith.constant 0 : index
    %120 = vector.load %arg4[%c8_135, %c0_136, %c0_137] : memref<9x8x8xf32, #tpu.memory_space<vmem>>, vector<1x8x8xf32>
    %121 = vector.shape_cast %120 : vector<1x8x8xf32> to vector<8x8xf32>
    %cst_138 = arith.constant dense<0.000000e+00> : vector<256x8xf32>
    %122 = tpu.matmul %119, %121, %cst_138 {dimension_numbers = #tpu.dot_dimension_numbers<[1], [0], [0], [1], [0, 0, 1, 1], [], []>} : vector<256x8xf32>, vector<8x8xf32>, vector<256x8xf32> -> vector<256x8xf32>
    %123 = arith.addf %117, %122 : vector<256x8xf32>
    %c0_139 = arith.constant 0 : index
    %c0_140 = arith.constant 0 : index
    %124 = vector.load %arg5[%c0_139, %c0_140] : memref<1x8xf32, #tpu.memory_space<vmem>>, vector<1x8xf32>
    %125 = vector.broadcast %124 : vector<1x8xf32> to vector<256x8xf32>
    %126 = arith.addf %123, %125 : vector<256x8xf32>
    %cst_141 = arith.constant 0.000000e+00 : f32
    %127 = vector.broadcast %cst_141 : f32 to vector<256x8xf32>
    %128 = arith.maximumf %126, %127 : vector<256x8xf32>
    %c0_142 = arith.constant 0 : index
    %c0_143 = arith.constant 0 : index
    %129 = vector.load %arg6[%c0_142, %c0_143] : memref<8x8xf32, #tpu.memory_space<vmem>>, vector<8x8xf32>
    %cst_144 = arith.constant dense<0.000000e+00> : vector<8x256xf32>
    %130 = tpu.matmul %129, %128, %cst_144 {dimension_numbers = #tpu.dot_dimension_numbers<[1], [1], [0], [0], [0, 0, 1, 0], [], []>} : vector<8x8xf32>, vector<256x8xf32>, vector<8x256xf32> -> vector<8x256xf32>
    %c0_145 = arith.constant 0 : index
    %c0_146 = arith.constant 0 : index
    %131 = vector.load %arg7[%c0_145, %c0_146] : memref<8x1xf32, #tpu.memory_space<vmem>>, vector<8x1xf32>
    %132 = vector.broadcast %131 : vector<8x1xf32> to vector<8x256xf32>
    %133 = arith.addf %130, %132 : vector<8x256xf32>
    %cst_147 = arith.constant 0.000000e+00 : f32
    %134 = vector.broadcast %cst_147 : f32 to vector<8x256xf32>
    %135 = arith.maximumf %133, %134 : vector<8x256xf32>
    %c0_148 = arith.constant 0 : index
    %c0_149 = arith.constant 0 : index
    %c0_150 = arith.constant 0 : index
    %136 = vector.load %arg8[%c0_148, %c0_149, %c0_150] : memref<1x8x256xf32, #tpu.memory_space<vmem>>, vector<1x8x256xf32>
    %137 = vector.shape_cast %136 : vector<1x8x256xf32> to vector<8x256xf32>
    %138 = vector.shape_cast %135 : vector<8x256xf32> to vector<1x8x256xf32>
    tpu.vector_store %arg8[%c0_148, %c0_149, %c0_150], %138 {strides = array<i32>} : memref<1x8x256xf32, #tpu.memory_space<vmem>>, vector<1x8x256xf32>,
    return
  }
  func.func @transform_0(%arg0: i32) -> (i32, i32, i32, i32) {
    %c0_i32 = arith.constant 0 : i32
    %c0_i32_0 = arith.constant 0 : i32
    %c0_i32_1 = arith.constant 0 : i32
    %c0_i32_2 = arith.constant 0 : i32
    return %arg0, %c0_i32, %c0_i32_0, %c0_i32_1 : i32, i32, i32, i32
  }
  func.func @transform_1(%arg0: i32) -> (i32, i32, i32) {
    %c0_i32 = arith.constant 0 : i32
    %c0_i32_0 = arith.constant 0 : i32
    %c0_i32_1 = arith.constant 0 : i32
    %c0_i32_2 = arith.constant 0 : i32
    return %c0_i32, %c0_i32_0, %c0_i32_1 : i32, i32, i32
  }
  func.func @transform_2(%arg0: i32) -> (i32, i32) {
    %c0_i32 = arith.constant 0 : i32
    %c0_i32_0 = arith.constant 0 : i32
    %c0_i32_1 = arith.constant 0 : i32
    return %c0_i32, %c0_i32_0 : i32, i32
  }
  func.func @transform_3(%arg0: i32) -> (i32, i32, i32) {
    %c0_i32 = arith.constant 0 : i32
    %c0_i32_0 = arith.constant 0 : i32
    %c0_i32_1 = arith.constant 0 : i32
    %c0_i32_2 = arith.constant 0 : i32
    return %c0_i32, %c0_i32_0, %c0_i32_1 : i32, i32, i32
  }
  func.func @transform_4(%arg0: i32) -> (i32, i32) {
    %c0_i32 = arith.constant 0 : i32
    %c0_i32_0 = arith.constant 0 : i32
    %c0_i32_1 = arith.constant 0 : i32
    return %c0_i32, %c0_i32_0 : i32, i32
  }
  func.func @transform_5(%arg0: i32) -> (i32, i32) {
    %c0_i32 = arith.constant 0 : i32
    %c0_i32_0 = arith.constant 0 : i32
    %c0_i32_1 = arith.constant 0 : i32
    return %c0_i32, %c0_i32_0 : i32, i32
  }
  func.func @transform_6(%arg0: i32) -> (i32, i32) {
    %c0_i32 = arith.constant 0 : i32
    %c0_i32_0 = arith.constant 0 : i32
    %c0_i32_1 = arith.constant 0 : i32
    return %c0_i32, %c0_i32_0 : i32, i32
  }
  func.func @transform_7(%arg0: i32) -> (i32, i32, i32) {
    %c0_i32 = arith.constant 0 : i32
    %c0_i32_0 = arith.constant 0 : i32
    %c0_i32_1 = arith.constant 0 : i32
    return %arg0, %c0_i32, %c0_i32_0 : i32, i32, i32
  }
}

</mosaic_0001>

<llo_original>
// kernel: tpu_custom_call.1
$region0: #{tpu_custom_call.1}
  #allocation0 [shape = 'u32[]', space=smem, size = 0x4, offset = 0x4, fixed_abs, tag = 'smem constant byte address 0x4 - core index']
  #allocation1 [shape = 'u32[72,128]{1,0:T(1,128)}', space=vmem, size = 0x9000, scoped, tag = 'internal scratch']
  #allocation2 [shape = 'f32[18,18,4]{2,1,0:T(8,128)}', space=vmem, size = 0x36000, scoped, tag = 'scratch operand']
  #allocation3 [shape = 'f32[18,18,8]{2,1,0:T(8,128)}', space=vmem, size = 0x36000, scoped, tag = 'scratch operand']
  %s0 = inlined_call_operand.vmem [shape: f32[2,16,16,4], index: 0, kind: input, shape index: {}]
  %s1 = inlined_call_operand.vmem [shape: f32[9,4,8], index: 1, kind: input, shape index: {}]
  %s2 = inlined_call_operand.vmem [shape: f32[1,8], index: 2, kind: input, shape index: {}]
  %s3 = inlined_call_operand.vmem [shape: f32[9,8,8], index: 3, kind: input, shape index: {}]
  %s4 = inlined_call_operand.vmem [shape: f32[1,8], index: 4, kind: input, shape index: {}]
  %s5 = inlined_call_operand.vmem [shape: f32[8,8], index: 5, kind: input, shape index: {}]
  %s6 = inlined_call_operand.vmem [shape: f32[8,1], index: 6, kind: input, shape index: {}]
  %s7 = inlined_call_operand.hbm [shape: f32[2,8,256], index: 7, kind: output, shape index: {}]
  %s8 = sld [smem:[#allocation0]]
  $region61: #{tpu_custom_call.1} parent=0
    _
  %s10 = ssub.s32 1, %s8
  %s11 = scalar_select 0, %s10, %s8
  $region1: #{tpu_custom_call.1} parent=0
    #allocation4 [shape = 'u8[16384]{0}', space=vmem, size = 0x4000, scoped, tag = 'output window, operand 0']
    #allocation5 [shape = 's32[2]{0}', space=sflag, size = 0x8, scoped, tag = 'scoped memory for tpu_custom_call.1']
    %12 = vsyncpa [#allocation5], 0
    %s13 = scalar_lea.sflag [#allocation5], 1
    %14 = vsyncpa %s13, 0
    loop: start=0, step=1, limit=4
    $region2: #{tpu_custom_call.1} parent=1 // loop_pre_header
      _
    $region3: #{tpu_custom_call.1} parent=1 // loop_header
      %s16 = sphi 0, %s20
      %p17 = scmp.ge.s32.totalorder %s16, 4
      %s26 = sphi 0, %s28
      %s29 = sphi 0, %s26
      %s30 = sphi 0, %s29
      %s46 = sphi 0, %s30
      %s50 = sphi 0, %s50
      %s52 = sphi 0, %s50
      %s53 = sphi 0, %s52
      %s67 = sphi 0, %s53
      %s71 = sphi 0, %s71
      %s73 = sphi 0, %s71
      %s74 = sphi 0, %s73
      %s88 = sphi 0, %s74
      %s92 = sphi 0, %s92
      %s94 = sphi 0, %s92
      %s95 = sphi 0, %s94
      %s109 = sphi 0, %s95
      %s113 = sphi 0, %s113
      %s115 = sphi 0, %s113
      %s116 = sphi 0, %s115
      %s130 = sphi 0, %s116
      %s134 = sphi 0, %s134
      %s136 = sphi 0, %s134
      %s137 = sphi 0, %s136
      %s151 = sphi 0, %s137
      %s155 = sphi 0, %s155
      %s157 = sphi 0, %s155
      %s158 = sphi 0, %s157
      %s172 = sphi 0, %s158
      %s178 = sphi 0, %s180
      %s181 = sphi 0, %s178
      %s182 = sphi 0, %s181
      %s198 = sphi 0, %s182
    $region4: #{tpu_custom_call.1} parent=1 // loop_header_branch
      %19 = sbr.rel (%p17) target = $region8
    $region5: #{tpu_custom_call.1} parent=1 // loop_body
      %s21 = ssub.s32 %s16, 1
      %s22 = ssub.s32 %s16, 2
      %s23 = sadd.s32 %s16, 1
      %s24 = ssub.s32 %s16, %s23
      %p25 = scmp.eq.s32.totalorder %s24, 0
      %s27 = sadd.s32 %s26, 1
      %s28 = scalar_select %p25, %s26, %s27
      %p31 = pneg %p25
      %p32 = scmp.eq.s32.totalorder %s16, 1
      %p33 = por %p31, %p32
      %p34 = scmp.ne.s32.totalorder %s26, %s29
      %p35 = scmp.eq.s32.totalorder %s16, 0
      %p36 = por %p34, %p35
      %p37 = scmp.ne.s32.totalorder %s26, %s29
      %p38 = scmp.eq.s32.totalorder %s21, 1
      %p39 = por %p37, %p38
      %p40 = scmp.ne.s32.totalorder %s29, %s30
      %p41 = scmp.eq.s32.totalorder %s21, 0
      %p42 = por %p40, %p41
      %p43 = scmp.ne.s32.totalorder %s29, %s30
      %p44 = scmp.eq.s32.totalorder %s22, 1
      %p45 = por %p43, %p44
      %p47 = scmp.ne.s32.totalorder %s30, %s46
      %p48 = scmp.eq.s32.totalorder %s22, 0
      %p49 = por %p47, %p48
      %s51 = sadd.s32 %s50, 1
      %p54 = scmp.eq.s32.totalorder %s16, 1
      %p55 = scmp.ne.s32.totalorder %s50, %s52
      %p56 = scmp.eq.s32.totalorder %s16, 0
      %p57 = por %p55, %p56
      %p58 = scmp.ne.s32.totalorder %s50, %s52
      %p59 = scmp.eq.s32.totalorder %s21, 1
      %p60 = por %p58, %p59
      %p61 = scmp.ne.s32.totalorder %s52, %s53
      %p62 = scmp.eq.s32.totalorder %s21, 0
      %p63 = por %p61, %p62
      %p64 = scmp.ne.s32.totalorder %s52, %s53
      %p65 = scmp.eq.s32.totalorder %s22, 1
      %p66 = por %p64, %p65
      %p68 = scmp.ne.s32.totalorder %s53, %s67
      %p69 = scmp.eq.s32.totalorder %s22, 0
      %p70 = por %p68, %p69
      %s72 = sadd.s32 %s71, 1
      %p75 = scmp.eq.s32.totalorder %s16, 1
      %p76 = scmp.ne.s32.totalorder %s71, %s73
      %p77 = scmp.eq.s32.totalorder %s16, 0
      %p78 = por %p76, %p77
      %p79 = scmp.ne.s32.totalorder %s71, %s73
      %p80 = scmp.eq.s32.totalorder %s21, 1
      %p81 = por %p79, %p80
      %p82 = scmp.ne.s32.totalorder %s73, %s74
      %p83 = scmp.eq.s32.totalorder %s21, 0
      %p84 = por %p82, %p83
      %p85 = scmp.ne.s32.totalorder %s73, %s74
      %p86 = scmp.eq.s32.totalorder %s22, 1
      %p87 = por %p85, %p86
      %p89 = scmp.ne.s32.totalorder %s74, %s88
      %p90 = scmp.eq.s32.totalorder %s22, 0
      %p91 = por %p89, %p90
      %s93 = sadd.s32 %s92, 1
      %p96 = scmp.eq.s32.totalorder %s16, 1
      %p97 = scmp.ne.s32.totalorder %s92, %s94
      %p98 = scmp.eq.s32.totalorder %s16, 0
      %p99 = por %p97, %p98
      %p100 = scmp.ne.s32.totalorder %s92, %s94
      %p101 = scmp.eq.s32.totalorder %s21, 1
      %p102 = por %p100, %p101
      %p103 = scmp.ne.s32.totalorder %s94, %s95
      %p104 = scmp.eq.s32.totalorder %s21, 0
      %p105 = por %p103, %p104
      %p106 = scmp.ne.s32.totalorder %s94, %s95
      %p107 = scmp.eq.s32.totalorder %s22, 1
      %p108 = por %p106, %p107
      %p110 = scmp.ne.s32.totalorder %s95, %s109
      %p111 = scmp.eq.s32.totalorder %s22, 0
      %p112 = por %p110, %p111
      %s114 = sadd.s32 %s113, 1
      %p117 = scmp.eq.s32.totalorder %s16, 1
      %p118 = scmp.ne.s32.totalorder %s113, %s115
      %p119 = scmp.eq.s32.totalorder %s16, 0
      %p120 = por %p118, %p119
      %p121 = scmp.ne.s32.totalorder %s113, %s115
      %p122 = scmp.eq.s32.totalorder %s21, 1
      %p123 = por %p121, %p122
      %p124 = scmp.ne.s32.totalorder %s115, %s116
      %p125 = scmp.eq.s32.totalorder %s21, 0
      %p126 = por %p124, %p125
      %p127 = scmp.ne.s32.totalorder %s115, %s116
      %p128 = scmp.eq.s32.totalorder %s22, 1
      %p129 = por %p127, %p128
      %p131 = scmp.ne.s32.totalorder %s116, %s130
      %p132 = scmp.eq.s32.totalorder %s22, 0
      %p133 = por %p131, %p132
      %s135 = sadd.s32 %s134, 1
      %p138 = scmp.eq.s32.totalorder %s16, 1
      %p139 = scmp.ne.s32.totalorder %s134, %s136
      %p140 = scmp.eq.s32.totalorder %s16, 0
      %p141 = por %p139, %p140
      %p142 = scmp.ne.s32.totalorder %s134, %s136
      %p143 = scmp.eq.s32.totalorder %s21, 1
      %p144 = por %p142, %p143
      %p145 = scmp.ne.s32.totalorder %s136, %s137
      %p146 = scmp.eq.s32.totalorder %s21, 0
      %p147 = por %p145, %p146
      %p148 = scmp.ne.s32.totalorder %s136, %s137
      %p149 = scmp.eq.s32.totalorder %s22, 1
      %p150 = por %p148, %p149
      %p152 = scmp.ne.s32.totalorder %s137, %s151
      %p153 = scmp.eq.s32.totalorder %s22, 0
      %p154 = por %p152, %p153
      %s156 = sadd.s32 %s155, 1
      %p159 = scmp.eq.s32.totalorder %s16, 1
      %p160 = scmp.ne.s32.totalorder %s155, %s157
      %p161 = scmp.eq.s32.totalorder %s16, 0
      %p162 = por %p160, %p161
      %p163 = scmp.ne.s32.totalorder %s155, %s157
      %p164 = scmp.eq.s32.totalorder %s21, 1
      %p165 = por %p163, %p164
      %p166 = scmp.ne.s32.totalorder %s157, %s158
      %p167 = scmp.eq.s32.totalorder %s21, 0
      %p168 = por %p166, %p167
      %p169 = scmp.ne.s32.totalorder %s157, %s158
      %p170 = scmp.eq.s32.totalorder %s22, 1
      %p171 = por %p169, %p170
      %p173 = scmp.ne.s32.totalorder %s158, %s172
      %p174 = scmp.eq.s32.totalorder %s22, 0
      %p175 = por %p173, %p174
      %s176 = ssub.s32 %s16, %s23
      %p177 = scmp.eq.s32.totalorder %s176, 0
      %s179 = sadd.s32 %s178, 1
      %s180 = scalar_select %p177, %s178, %s179
      %p183 = pneg %p177
      %p184 = scmp.eq.s32.totalorder %s16, 1
      %p185 = por %p183, %p184
      %p186 = scmp.ne.s32.totalorder %s178, %s181
      %p187 = scmp.eq.s32.totalorder %s16, 0
      %p188 = por %p186, %p187
      %p189 = scmp.ne.s32.totalorder %s178, %s181
      %p190 = scmp.eq.s32.totalorder %s21, 1
      %p191 = por %p189, %p190
      %p192 = scmp.ne.s32.totalorder %s181, %s182
      %p193 = scmp.eq.s32.totalorder %s21, 0
      %p194 = por %p192, %p193
      %p195 = scmp.ne.s32.totalorder %s181, %s182
      %p196 = scmp.eq.s32.totalorder %s22, 1
      %p197 = por %p195, %p196
      %p199 = scmp.ne.s32.totalorder %s182, %s198
      %p200 = scmp.eq.s32.totalorder %s22, 0
      %p201 = por %p199, %p200
      %p202 = scmp.le.s32.totalorder 1, %s16
      %p203 = scmp.lt.s32.totalorder %s16, 3
      %p204 = pnand %p202, %p203
      %p205 = pneg %p204
      // Predicated region
      $region9: #{tpu_custom_call.1} parent=5 // pred_check
        _
      $region10: #{tpu_custom_call.1} parent=5 // pred_check_branch
        %207 = sbr.rel (%p204) target = $region12
      $region11: #{tpu_custom_call.1} parent=5 // pred_region
        %s208 = ssub.s32 %s16, 1
        // Predicated region
        $region13: #{tpu_custom_call.1} parent=11 // pred_check
          %p209 = pneg %p63
        $region14: #{tpu_custom_call.1} parent=11 // pred_check_branch
          %211 = sbr.rel (%p209) target = $region16
        $region15: #{tpu_custom_call.1} parent=11 // pred_region
          _
        $region16: #{tpu_custom_call.1} parent=11 // pred_fallthru
          _
        // Predicated region
        $region17: #{tpu_custom_call.1} parent=11 // pred_check
          %p212 = pneg %p84
        $region18: #{tpu_custom_call.1} parent=11 // pred_check_branch
          %214 = sbr.rel (%p212) target = $region20
        $region19: #{tpu_custom_call.1} parent=11 // pred_region
          _
        $region20: #{tpu_custom_call.1} parent=11 // pred_fallthru
          _
        // Predicated region
        $region21: #{tpu_custom_call.1} parent=11 // pred_check
          %p215 = pneg %p105
        $region22: #{tpu_custom_call.1} parent=11 // pred_check_branch
          %217 = sbr.rel (%p215) target = $region24
        $region23: #{tpu_custom_call.1} parent=11 // pred_region
          _
        $region24: #{tpu_custom_call.1} parent=11 // pred_fallthru
          _
        // Predicated region
        $region25: #{tpu_custom_call.1} parent=11 // pred_check
          %p218 = pneg %p126
        $region26: #{tpu_custom_call.1} parent=11 // pred_check_branch
          %220 = sbr.rel (%p218) target = $region28
        $region27: #{tpu_custom_call.1} parent=11 // pred_region
          _
        $region28: #{tpu_custom_call.1} parent=11 // pred_fallthru
          _
        // Predicated region
        $region29: #{tpu_custom_call.1} parent=11 // pred_check
          %p221 = pneg %p147
        $region30: #{tpu_custom_call.1} parent=11 // pred_check_branch
          %223 = sbr.rel (%p221) target = $region32
        $region31: #{tpu_custom_call.1} parent=11 // pred_region
          _
        $region32: #{tpu_custom_call.1} parent=11 // pred_fallthru
          _
        // Predicated region
        $region33: #{tpu_custom_call.1} parent=11 // pred_check
          %p224 = pneg %p168
        $region34: #{tpu_custom_call.1} parent=11 // pred_check_branch
          %226 = sbr.rel (%p224) target = $region36
        $region35: #{tpu_custom_call.1} parent=11 // pred_region
          _
        $region36: #{tpu_custom_call.1} parent=11 // pred_fallthru
          _
      $region12: #{tpu_custom_call.1} parent=5 // pred_fallthru
        _
      %p227 = scmp.lt.s32.totalorder %s16, 2
      // Predicated region
      $region37: #{tpu_custom_call.1} parent=5 // pred_check
        %p228 = pneg %p227
      $region38: #{tpu_custom_call.1} parent=5 // pred_check_branch
        %230 = sbr.rel (%p228) target = $region40
      $region39: #{tpu_custom_call.1} parent=5 // pred_region
        // Predicated region
        $region41: #{tpu_custom_call.1} parent=39 // pred_check
          %p231 = pneg %p36
        $region42: #{tpu_custom_call.1} parent=39 // pred_check_branch
          %233 = sbr.rel (%p231) target = $region44
        $region43: #{tpu_custom_call.1} parent=39 // pred_region
          %p234 = scmp.lt.s32.totalorder %s16, 1
          %s235 = scalar_select %p234, %s16, 1
          %s236 = smul.addr %s235, 32
          %s237 = smul.addr %s236, 8
          %s238 = scalar_lea.vmem %s0, %s237
        $region44: #{tpu_custom_call.1} parent=39 // pred_fallthru
          _
      $region40: #{tpu_custom_call.1} parent=5 // pred_fallthru
        _
      %p239 = scmp.le.s32.totalorder 1, %s16
      %p240 = scmp.lt.s32.totalorder %s16, 3
      %p241 = pnand %p239, %p240
      %p242 = pneg %p241
      // Predicated region
      $region45: #{tpu_custom_call.1} parent=5 // pred_check
        _
      $region46: #{tpu_custom_call.1} parent=5 // pred_check_branch
        %244 = sbr.rel (%p241) target = $region48
      $region47: #{tpu_custom_call.1} parent=5 // pred_region
        %s245 = ssub.s32 %s16, 1
        %p246 = scmp.lt.s32.totalorder %s21, 1
        %s247 = scalar_select %p246, %s21, 1
        %s248 = smul.addr %s247, 32
        %s249 = smul.addr %s248, 8
        %s250 = scalar_lea.vmem %s0, %s249
        %p251 = pneg %p42
        %p252 = pneg %p39
        %p253 = pneg %p63
        %p254 = pneg %p60
        %p255 = pneg %p84
        %p256 = pneg %p81
        %p257 = pneg %p105
        %p258 = pneg %p102
        %p259 = pneg %p126
        %p260 = pneg %p123
        %p261 = pneg %p147
        %p262 = pneg %p144
        %p263 = pneg %p168
        %p264 = pneg %p165
        %p265 = pneg %p194
        %p266 = pneg %p191
        %s267 = sand.u32 %s181, 1
        %s268 = scalar_lea.sflag [#allocation5], %s267
        %s269 = sand.u32 %s181, 1
        %s270 = smul.addr %s269, 16
        %s271 = scalar_lea.vmem [#allocation4], %s270
        %p272 = scmp.lt.s32.totalorder %s21, 1
        %s273 = scalar_select %p272, %s21, 1
        %s274 = smul.addr %s273, 32
        %s275 = smul.addr %s274, 8
        %s276 = scalar_lea.vmem %s0, %s275
        %vm277 = vcmask 31744
        %278 = vst.msk [vmem:[#allocation2] sm:$0xff] %vm277, 0.0
        %279 = vst.msk [vmem:[#allocation2 + $0x8] sm:$0xff] %vm277, 0.0
        %vm280 = vcmask 25600
        %281 = vst.msk [vmem:[#allocation2 + $0x10] sm:$0x3] %vm280, 0.0
        %282 = vst.msk [vmem:[#allocation2 + $0x18] sm:$0xff] %vm277, 0.0
        %283 = vst.msk [vmem:[#allocation2 + $0x20] sm:$0xff] %vm277, 0.0
        %284 = vst.msk [vmem:[#allocation2 + $0x28] sm:$0x3] %vm280, 0.0
        %285 = vst.msk [vmem:[#allocation2 + $0x30] sm:$0xff] %vm277, 0.0
        %286 = vst.msk [vmem:[#allocation2 + $0x38] sm:$0xff] %vm277, 0.0
        %287 = vst.msk [vmem:[#allocation2 + $0x40] sm:$0x3] %vm280, 0.0
        %288 = vst.msk [vmem:[#allocation2 + $0x48] sm:$0xff] %vm277, 0.0
        %289 = vst.msk [vmem:[#allocation2 + $0x50] sm:$0xff] %vm277, 0.0
        %290 = vst.msk [vmem:[#allocation2 + $0x58] sm:$0x3] %vm280, 0.0
        %291 = vst.msk [vmem:[#allocation2 + $0x60] sm:$0xff] %vm277, 0.0
        %292 = vst.msk [vmem:[#allocation2 + $0x68] sm:$0xff] %vm277, 0.0
        %293 = vst.msk [vmem:[#allocation2 + $0x70] sm:$0x3] %vm280, 0.0
        %294 = vst.msk [vmem:[#allocation2 + $0x78] sm:$0xff] %vm277, 0.0
        %295 = vst.msk [vmem:[#allocation2 + $0x80] sm:$0xff] %vm277, 0.0
        %296 = vst.msk [vmem:[#allocation2 + $0x88] sm:$0x3] %vm280, 0.0
        %297 = vst.msk [vmem:[#allocation2 + $0x90] sm:$0xff] %vm277, 0.0
        %298 = vst.msk [vmem:[#allocation2 + $0x98] sm:$0xff] %vm277, 0.0
        %299 = vst.msk [vmem:[#allocation2 + $0xa0] sm:$0x3] %vm280, 0.0
        %300 = vst.msk [vmem:[#allocation2 + $0xa8] sm:$0xff] %vm277, 0.0
        %301 = vst.msk [vmem:[#allocation2 + $0xb0] sm:$0xff] %vm277, 0.0
        %302 = vst.msk [vmem:[#allocation2 + $0xb8] sm:$0x3] %vm280, 0.0
        %303 = vst.msk [vmem:[#allocation2 + $0xc0] sm:$0xff] %vm277, 0.0
        %304 = vst.msk [vmem:[#allocation2 + $0xc8] sm:$0xff] %vm277, 0.0
        %305 = vst.msk [vmem:[#allocation2 + $0xd0] sm:$0x3] %vm280, 0.0
        %306 = vst.msk [vmem:[#allocation2 + $0xd8] sm:$0xff] %vm277, 0.0
        %307 = vst.msk [vmem:[#allocation2 + $0xe0] sm:$0xff] %vm277, 0.0
        %308 = vst.msk [vmem:[#allocation2 + $0xe8] sm:$0x3] %vm280, 0.0
        %309 = vst.msk [vmem:[#allocation2 + $0xf0] sm:$0xff] %vm277, 0.0
        %310 = vst.msk [vmem:[#allocation2 + $0xf8] sm:$0xff] %vm277, 0.0
        %311 = vst.msk [vmem:[#allocation2 + $0x100] sm:$0x3] %vm280, 0.0
        %312 = vst.msk [vmem:[#allocation2 + $0x108] sm:$0xff] %vm277, 0.0
        %313 = vst.msk [vmem:[#allocation2 + $0x110] sm:$0xff] %vm277, 0.0
        %314 = vst.msk [vmem:[#allocation2 + $0x118] sm:$0x3] %vm280, 0.0
        %315 = vst.msk [vmem:[#allocation2 + $0x120] sm:$0xff] %vm277, 0.0
        %316 = vst.msk [vmem:[#allocation2 + $0x128] sm:$0xff] %vm277, 0.0
        %317 = vst.msk [vmem:[#allocation2 + $0x130] sm:$0x3] %vm280, 0.0
        %318 = vst.msk [vmem:[#allocation2 + $0x138] sm:$0xff] %vm277, 0.0
        %319 = vst.msk [vmem:[#allocation2 + $0x140] sm:$0xff] %vm277, 0.0
        %320 = vst.msk [vmem:[#allocation2 + $0x148] sm:$0x3] %vm280, 0.0
        %321 = vst.msk [vmem:[#allocation2 + $0x150] sm:$0xff] %vm277, 0.0
        %322 = vst.msk [vmem:[#allocation2 + $0x158] sm:$0xff] %vm277, 0.0
        %323 = vst.msk [vmem:[#allocation2 + $0x160] sm:$0x3] %vm280, 0.0
        %324 = vst.msk [vmem:[#allocation2 + $0x168] sm:$0xff] %vm277, 0.0
        %325 = vst.msk [vmem:[#allocation2 + $0x170] sm:$0xff] %vm277, 0.0
        %326 = vst.msk [vmem:[#allocation2 + $0x178] sm:$0x3] %vm280, 0.0
        %327 = vst.msk [vmem:[#allocation2 + $0x180] sm:$0xff] %vm277, 0.0
        %328 = vst.msk [vmem:[#allocation2 + $0x188] sm:$0xff] %vm277, 0.0
        %329 = vst.msk [vmem:[#allocation2 + $0x190] sm:$0x3] %vm280, 0.0
        %330 = vst.msk [vmem:[#allocation2 + $0x198] sm:$0xff] %vm277, 0.0
        %331 = vst.msk [vmem:[#allocation2 + $0x1a0] sm:$0xff] %vm277, 0.0
        %332 = vst.msk [vmem:[#allocation2 + $0x1a8] sm:$0x3] %vm280, 0.0
        %vm333 = vcmask 64512
        %334 = vst.msk [vmem:[#allocation3] sm:$0xff] %vm333, 0.0
        %335 = vst.msk [vmem:[#allocation3 + $0x8] sm:$0xff] %vm333, 0.0
        %vm336 = vcmask 58368
        %337 = vst.msk [vmem:[#allocation3 + $0x10] sm:$0x3] %vm336, 0.0
        %338 = vst.msk [vmem:[#allocation3 + $0x18] sm:$0xff] %vm333, 0.0
        %339 = vst.msk [vmem:[#allocation3 + $0x20] sm:$0xff] %vm333, 0.0
        %340 = vst.msk [vmem:[#allocation3 + $0x28] sm:$0x3] %vm336, 0.0
        %341 = vst.msk [vmem:[#allocation3 + $0x30] sm:$0xff] %vm333, 0.0
        %342 = vst.msk [vmem:[#allocation3 + $0x38] sm:$0xff] %vm333, 0.0
        %343 = vst.msk [vmem:[#allocation3 + $0x40] sm:$0x3] %vm336, 0.0
        %344 = vst.msk [vmem:[#allocation3 + $0x48] sm:$0xff] %vm333, 0.0
        %345 = vst.msk [vmem:[#allocation3 + $0x50] sm:$0xff] %vm333, 0.0
        %346 = vst.msk [vmem:[#allocation3 + $0x58] sm:$0x3] %vm336, 0.0
        %347 = vst.msk [vmem:[#allocation3 + $0x60] sm:$0xff] %vm333, 0.0
        %348 = vst.msk [vmem:[#allocation3 + $0x68] sm:$0xff] %vm333, 0.0
        %349 = vst.msk [vmem:[#allocation3 + $0x70] sm:$0x3] %vm336, 0.0
        %350 = vst.msk [vmem:[#allocation3 + $0x78] sm:$0xff] %vm333, 0.0
        %351 = vst.msk [vmem:[#allocation3 + $0x80] sm:$0xff] %vm333, 0.0
        %352 = vst.msk [vmem:[#allocation3 + $0x88] sm:$0x3] %vm336, 0.0
        %353 = vst.msk [vmem:[#allocation3 + $0x90] sm:$0xff] %vm333, 0.0
        %354 = vst.msk [vmem:[#allocation3 + $0x98] sm:$0xff] %vm333, 0.0
        %355 = vst.msk [vmem:[#allocation3 + $0xa0] sm:$0x3] %vm336, 0.0
        %356 = vst.msk [vmem:[#allocation3 + $0xa8] sm:$0xff] %vm333, 0.0
        %357 = vst.msk [vmem:[#allocation3 + $0xb0] sm:$0xff] %vm333, 0.0
        %358 = vst.msk [vmem:[#allocation3 + $0xb8] sm:$0x3] %vm336, 0.0
        %359 = vst.msk [vmem:[#allocation3 + $0xc0] sm:$0xff] %vm333, 0.0
        %360 = vst.msk [vmem:[#allocation3 + $0xc8] sm:$0xff] %vm333, 0.0
        %361 = vst.msk [vmem:[#allocation3 + $0xd0] sm:$0x3] %vm336, 0.0
        %362 = vst.msk [vmem:[#allocation3 + $0xd8] sm:$0xff] %vm333, 0.0
        %363 = vst.msk [vmem:[#allocation3 + $0xe0] sm:$0xff] %vm333, 0.0
        %364 = vst.msk [vmem:[#allocation3 + $0xe8] sm:$0x3] %vm336, 0.0
        %365 = vst.msk [vmem:[#allocation3 + $0xf0] sm:$0xff] %vm333, 0.0
        %366 = vst.msk [vmem:[#allocation3 + $0xf8] sm:$0xff] %vm333, 0.0
        %367 = vst.msk [vmem:[#allocation3 + $0x100] sm:$0x3] %vm336, 0.0
        %368 = vst.msk [vmem:[#allocation3 + $0x108] sm:$0xff] %vm333, 0.0
        %369 = vst.msk [vmem:[#allocation3 + $0x110] sm:$0xff] %vm333, 0.0
        %370 = vst.msk [vmem:[#allocation3 + $0x118] sm:$0x3] %vm336, 0.0
        %371 = vst.msk [vmem:[#allocation3 + $0x120] sm:$0xff] %vm333, 0.0
        %372 = vst.msk [vmem:[#allocation3 + $0x128] sm:$0xff] %vm333, 0.0
        %373 = vst.msk [vmem:[#allocation3 + $0x130] sm:$0x3] %vm336, 0.0
        %374 = vst.msk [vmem:[#allocation3 + $0x138] sm:$0xff] %vm333, 0.0
        %375 = vst.msk [vmem:[#allocation3 + $0x140] sm:$0xff] %vm333, 0.0
        %376 = vst.msk [vmem:[#allocation3 + $0x148] sm:$0x3] %vm336, 0.0
        %377 = vst.msk [vmem:[#allocation3 + $0x150] sm:$0xff] %vm333, 0.0
        %378 = vst.msk [vmem:[#allocation3 + $0x158] sm:$0xff] %vm333, 0.0
        %379 = vst.msk [vmem:[#allocation3 + $0x160] sm:$0x3] %vm336, 0.0
        %380 = vst.msk [vmem:[#allocation3 + $0x168] sm:$0xff] %vm333, 0.0
        %381 = vst.msk [vmem:[#allocation3 + $0x170] sm:$0xff] %vm333, 0.0
        %382 = vst.msk [vmem:[#allocation3 + $0x178] sm:$0x3] %vm336, 0.0
        %383 = vst.msk [vmem:[#allocation3 + $0x180] sm:$0xff] %vm333, 0.0
        %384 = vst.msk [vmem:[#allocation3 + $0x188] sm:$0xff] %vm333, 0.0
        %385 = vst.msk [vmem:[#allocation3 + $0x190] sm:$0x3] %vm336, 0.0
        %386 = vst.msk [vmem:[#allocation3 + $0x198] sm:$0xff] %vm333, 0.0
        %387 = vst.msk [vmem:[#allocation3 + $0x1a0] sm:$0xff] %vm333, 0.0
        %388 = vst.msk [vmem:[#allocation3 + $0x1a8] sm:$0x3] %vm336, 0.0
        %v389 = vld [vmem:[%s276] sm:$0xff]
        %v390 = vld [vmem:[%s276 + $0x8] sm:$0xff]
        %v391 = vld [vmem:[%s276 + $0x10] sm:$0xff]
        %v392 = vld [vmem:[%s276 + $0x18] sm:$0xff]
        %v393 = vld [vmem:[%s276 + $0x20] sm:$0xff]
        %v394 = vld [vmem:[%s276 + $0x28] sm:$0xff]
        %v395 = vld [vmem:[%s276 + $0x30] sm:$0xff]
        %v396 = vld [vmem:[%s276 + $0x38] sm:$0xff]
        %v397 = vld [vmem:[%s276 + $0x40] sm:$0xff]
        %v398 = vld [vmem:[%s276 + $0x48] sm:$0xff]
        %v399 = vld [vmem:[%s276 + $0x50] sm:$0xff]
        %v400 = vld [vmem:[%s276 + $0x58] sm:$0xff]
        %v401 = vld [vmem:[%s276 + $0x60] sm:$0xff]
        %v402 = vld [vmem:[%s276 + $0x68] sm:$0xff]
        %v403 = vld [vmem:[%s276 + $0x70] sm:$0xff]
        %v404 = vld [vmem:[%s276 + $0x78] sm:$0xff]
        %v405 = vld [vmem:[%s276 + $0x80] sm:$0xff]
        %v406 = vld [vmem:[%s276 + $0x88] sm:$0xff]
        %v407 = vld [vmem:[%s276 + $0x90] sm:$0xff]
        %v408 = vld [vmem:[%s276 + $0x98] sm:$0xff]
        %v409 = vld [vmem:[%s276 + $0xa0] sm:$0xff]
        %v410 = vld [vmem:[%s276 + $0xa8] sm:$0xff]
        %v411 = vld [vmem:[%s276 + $0xb0] sm:$0xff]
        %v412 = vld [vmem:[%s276 + $0xb8] sm:$0xff]
        %v413 = vld [vmem:[%s276 + $0xc0] sm:$0xff]
        %v414 = vld [vmem:[%s276 + $0xc8] sm:$0xff]
        %v415 = vld [vmem:[%s276 + $0xd0] sm:$0xff]
        %v416 = vld [vmem:[%s276 + $0xd8] sm:$0xff]
        %v417 = vld [vmem:[%s276 + $0xe0] sm:$0xff]
        %v418 = vld [vmem:[%s276 + $0xe8] sm:$0xff]
        %v419 = vld [vmem:[%s276 + $0xf0] sm:$0xff]
        %v420 = vld [vmem:[%s276 + $0xf8] sm:$0xff]
        %s421 = scalar_lea.vmem [#allocation2], 24
        %422 = vst.msk [vmem:[%s421 + $0x1] sm:$0xff] %vm277, %v389
        %423 = vst.msk [vmem:[%s421 + $0x9] sm:$0xff] %vm277, %v390
        %424 = vst.msk [vmem:[%s421 + $0x19] sm:$0xff] %vm277, %v391
        %425 = vst.msk [vmem:[%s421 + $0x21] sm:$0xff] %vm277, %v392
        %426 = vst.msk [vmem:[%s421 + $0x31] sm:$0xff] %vm277, %v393
        %427 = vst.msk [vmem:[%s421 + $0x39] sm:$0xff] %vm277, %v394
        %428 = vst.msk [vmem:[%s421 + $0x49] sm:$0xff] %vm277, %v395
        %429 = vst.msk [vmem:[%s421 + $0x51] sm:$0xff] %vm277, %v396
        %430 = vst.msk [vmem:[%s421 + $0x61] sm:$0xff] %vm277, %v397
        %431 = vst.msk [vmem:[%s421 + $0x69] sm:$0xff] %vm277, %v398
        %432 = vst.msk [vmem:[%s421 + $0x79] sm:$0xff] %vm277, %v399
        %433 = vst.msk [vmem:[%s421 + $0x81] sm:$0xff] %vm277, %v400
        %434 = vst.msk [vmem:[%s421 + $0x91] sm:$0xff] %vm277, %v401
        %435 = vst.msk [vmem:[%s421 + $0x99] sm:$0xff] %vm277, %v402
        %436 = vst.msk [vmem:[%s421 + $0xa9] sm:$0xff] %vm277, %v403
        %437 = vst.msk [vmem:[%s421 + $0xb1] sm:$0xff] %vm277, %v404
        %438 = vst.msk [vmem:[%s421 + $0xc1] sm:$0xff] %vm277, %v405
        %439 = vst.msk [vmem:[%s421 + $0xc9] sm:$0xff] %vm277, %v406
        %440 = vst.msk [vmem:[%s421 + $0xd9] sm:$0xff] %vm277, %v407
        %441 = vst.msk [vmem:[%s421 + $0xe1] sm:$0xff] %vm277, %v408
        %442 = vst.msk [vmem:[%s421 + $0xf1] sm:$0xff] %vm277, %v409
        %443 = vst.msk [vmem:[%s421 + $0xf9] sm:$0xff] %vm277, %v410
        %444 = vst.msk [vmem:[%s421 + $0x109] sm:$0xff] %vm277, %v411
        %445 = vst.msk [vmem:[%s421 + $0x111] sm:$0xff] %vm277, %v412
        %446 = vst.msk [vmem:[%s421 + $0x121] sm:$0xff] %vm277, %v413
        %447 = vst.msk [vmem:[%s421 + $0x129] sm:$0xff] %vm277, %v414
        %448 = vst.msk [vmem:[%s421 + $0x139] sm:$0xff] %vm277, %v415
        %449 = vst.msk [vmem:[%s421 + $0x141] sm:$0xff] %vm277, %v416
        %450 = vst.msk [vmem:[%s421 + $0x151] sm:$0xff] %vm277, %v417
        %451 = vst.msk [vmem:[%s421 + $0x159] sm:$0xff] %vm277, %v418
        %452 = vst.msk [vmem:[%s421 + $0x169] sm:$0xff] %vm277, %v419
        %453 = vst.msk [vmem:[%s421 + $0x171] sm:$0xff] %vm277, %v420
        %v454 = vld [vmem:[#allocation2] sm:$0xff]
        %v455 = vld [vmem:[#allocation2 + $0x8] sm:$0xff]
        %v456 = vld [vmem:[#allocation2 + $0x18] sm:$0xff]
        %v457 = vld [vmem:[#allocation2 + $0x20] sm:$0xff]
        %v458 = vld [vmem:[#allocation2 + $0x30] sm:$0xff]
        %v459 = vld [vmem:[#allocation2 + $0x38] sm:$0xff]
        %v460 = vld [vmem:[#allocation2 + $0x48] sm:$0xff]
        %v461 = vld [vmem:[#allocation2 + $0x50] sm:$0xff]
        %v462 = vld [vmem:[#allocation2 + $0x60] sm:$0xff]
        %v463 = vld [vmem:[#allocation2 + $0x68] sm:$0xff]
        %v464 = vld [vmem:[#allocation2 + $0x78] sm:$0xff]
        %v465 = vld [vmem:[#allocation2 + $0x80] sm:$0xff]
        %v466 = vld [vmem:[#allocation2 + $0x90] sm:$0xff]
        %v467 = vld [vmem:[#allocation2 + $0x98] sm:$0xff]
        %v468 = vld [vmem:[#allocation2 + $0xa8] sm:$0xff]
        %v469 = vld [vmem:[#allocation2 + $0xb0] sm:$0xff]
        %v470 = vld [vmem:[#allocation2 + $0xc0] sm:$0xff]
        %v471 = vld [vmem:[#allocation2 + $0xc8] sm:$0xff]
        %v472 = vld [vmem:[#allocation2 + $0xd8] sm:$0xff]
        %v473 = vld [vmem:[#allocation2 + $0xe0] sm:$0xff]
        %v474 = vld [vmem:[#allocation2 + $0xf0] sm:$0xff]
        %v475 = vld [vmem:[#allocation2 + $0xf8] sm:$0xff]
        %v476 = vld [vmem:[#allocation2 + $0x108] sm:$0xff]
        %v477 = vld [vmem:[#allocation2 + $0x110] sm:$0xff]
        %v478 = vld [vmem:[#allocation2 + $0x120] sm:$0xff]
        %v479 = vld [vmem:[#allocation2 + $0x128] sm:$0xff]
        %v480 = vld [vmem:[#allocation2 + $0x138] sm:$0xff]
        %v481 = vld [vmem:[#allocation2 + $0x140] sm:$0xff]
        %v482 = vld [vmem:[#allocation2 + $0x150] sm:$0xff]
        %v483 = vld [vmem:[#allocation2 + $0x158] sm:$0xff]
        %v484 = vld [vmem:[#allocation2 + $0x168] sm:$0xff]
        %v485 = vld [vmem:[#allocation2 + $0x170] sm:$0xff]
        %v486 = vld [vmem:[%s1] sm:$0xf]
        %v487 = vld [vmem:[#allocation2 + $0x1] sm:$0xff]
        %v488 = vld [vmem:[#allocation2 + $0x9] sm:$0xff]
        %v489 = vld [vmem:[#allocation2 + $0x19] sm:$0xff]
        %v490 = vld [vmem:[#allocation2 + $0x21] sm:$0xff]
        %v491 = vld [vmem:[#allocation2 + $0x31] sm:$0xff]
        %v492 = vld [vmem:[#allocation2 + $0x39] sm:$0xff]
        %v493 = vld [vmem:[#allocation2 + $0x49] sm:$0xff]
        %v494 = vld [vmem:[#allocation2 + $0x51] sm:$0xff]
        %v495 = vld [vmem:[#allocation2 + $0x61] sm:$0xff]
        %v496 = vld [vmem:[#allocation2 + $0x69] sm:$0xff]
        %v497 = vld [vmem:[#allocation2 + $0x79] sm:$0xff]
        %v498 = vld [vmem:[#allocation2 + $0x81] sm:$0xff]
        %v499 = vld [vmem:[#allocation2 + $0x91] sm:$0xff]
        %v500 = vld [vmem:[#allocation2 + $0x99] sm:$0xff]
        %v501 = vld [vmem:[#allocation2 + $0xa9] sm:$0xff]
        %v502 = vld [vmem:[#allocation2 + $0xb1] sm:$0xff]
        %v503 = vld [vmem:[#allocation2 + $0xc1] sm:$0xff]
        %v504 = vld [vmem:[#allocation2 + $0xc9] sm:$0xff]
        %v505 = vld [vmem:[#allocation2 + $0xd9] sm:$0xff]
        %v506 = vld [vmem:[#allocation2 + $0xe1] sm:$0xff]
        %v507 = vld [vmem:[#allocation2 + $0xf1] sm:$0xff]
        %v508 = vld [vmem:[#allocation2 + $0xf9] sm:$0xff]
        %v509 = vld [vmem:[#allocation2 + $0x109] sm:$0xff]
        %v510 = vld [vmem:[#allocation2 + $0x111] sm:$0xff]
        %v511 = vld [vmem:[#allocation2 + $0x121] sm:$0xff]
        %v512 = vld [vmem:[#allocation2 + $0x129] sm:$0xff]
        %v513 = vld [vmem:[#allocation2 + $0x139] sm:$0xff]
        %v514 = vld [vmem:[#allocation2 + $0x141] sm:$0xff]
        %v515 = vld [vmem:[#allocation2 + $0x151] sm:$0xff]
        %v516 = vld [vmem:[#allocation2 + $0x159] sm:$0xff]
        %v517 = vld [vmem:[#allocation2 + $0x169] sm:$0xff]
        %v518 = vld [vmem:[#allocation2 + $0x171] sm:$0xff]
        %s519 = scalar_lea.vmem %s1, 4
        %v520 = vld [vmem:[%s519] sm:$0xf]
        %v522 = vsel %vm277, %v487, 0
        %v525 = vsel %vm277, %v488, 0
        %v528 = vsel %vm277, %v489, 0
        %v531 = vsel %vm277, %v490, 0
        %v534 = vsel %vm277, %v491, 0
        %v537 = vsel %vm277, %v492, 0
        %v540 = vsel %vm277, %v493, 0
        %v543 = vsel %vm277, %v494, 0
        %v546 = vsel %vm277, %v495, 0
        %v549 = vsel %vm277, %v496, 0
        %v552 = vsel %vm277, %v497, 0
        %v555 = vsel %vm277, %v498, 0
        %v558 = vsel %vm277, %v499, 0
        %v561 = vsel %vm277, %v500, 0
        %v564 = vsel %vm277, %v501, 0
        %v567 = vsel %vm277, %v502, 0
        %v570 = vsel %vm277, %v503, 0
        %v573 = vsel %vm277, %v504, 0
        %v576 = vsel %vm277, %v505, 0
        %v579 = vsel %vm277, %v506, 0
        %v582 = vsel %vm277, %v507, 0
        %v585 = vsel %vm277, %v508, 0
        %v588 = vsel %vm277, %v509, 0
        %v591 = vsel %vm277, %v510, 0
        %v594 = vsel %vm277, %v511, 0
        %v597 = vsel %vm277, %v512, 0
        %v600 = vsel %vm277, %v513, 0
        %v603 = vsel %vm277, %v514, 0
        %v606 = vsel %vm277, %v515, 0
        %v609 = vsel %vm277, %v516, 0
        %v612 = vsel %vm277, %v517, 0
        %v615 = vsel %vm277, %v518, 0
        %vm617 = vcmask 1043456
        %v619 = vsel %vm617, %v520, 0
        %621 = vmatpush.msra.mxu0 0.0
        %622 = vmatpush.msra.mxu0 0.0
        %623 = vmatpush.msra.mxu0 0.0
        %624 = vmatpush.msra.mxu0 0.0
        %625 = vmatpush.msra.mxu0 0.0
        %626 = vmatpush.msra.mxu0 0.0
        %627 = vmatpush.msra.mxu0 0.0
        %628 = vmatpush.msra.mxu0 0.0
        %629 = vmatpush.msra.mxu0 0.0
        %630 = vmatpush.msra.mxu0 0.0
        %631 = vmatpush.msra.mxu0 0.0
        %632 = vmatpush.msra.mxu0 0.0
        %633 = vmatpush.msra.mxu0 0.0
        %634 = vmatpush.msra.mxu0 0.0
        %635 = vmatpush.msra.mxu0 0.0
        %636 = vmatpush.msra.mxu0 %v619
        %637 = vmatmul.f32.gmra.mxu0 %v522
        %v638 = vpop.f32.mrf.mxu0
        %v639 = vadd.f32 0.0, %v638
        %640 = vmatmul.f32.gmra.mxu0 %v525
        %v641 = vpop.f32.mrf.mxu0
        %v642 = vadd.f32 0.0, %v641
        %643 = vmatmul.f32.gmra.mxu0 %v528
        %v644 = vpop.f32.mrf.mxu0
        %v645 = vadd.f32 0.0, %v644
        %646 = vmatmul.f32.gmra.mxu0 %v531
        %v647 = vpop.f32.mrf.mxu0
        %v648 = vadd.f32 0.0, %v647
        %649 = vmatmul.f32.gmra.mxu0 %v534
        %v650 = vpop.f32.mrf.mxu0
        %v651 = vadd.f32 0.0, %v650
        %652 = vmatmul.f32.gmra.mxu0 %v537
        %v653 = vpop.f32.mrf.mxu0
        %v654 = vadd.f32 0.0, %v653
        %655 = vmatmul.f32.gmra.mxu0 %v540
        %v656 = vpop.f32.mrf.mxu0
        %v657 = vadd.f32 0.0, %v656
        %658 = vmatmul.f32.gmra.mxu0 %v543
        %v659 = vpop.f32.mrf.mxu0
        %v660 = vadd.f32 0.0, %v659
        %661 = vmatmul.f32.gmra.mxu0 %v546
        %v662 = vpop.f32.mrf.mxu0
        %v663 = vadd.f32 0.0, %v662
        %664 = vmatmul.f32.gmra.mxu0 %v549
        %v665 = vpop.f32.mrf.mxu0
        %v666 = vadd.f32 0.0, %v665
        %667 = vmatmul.f32.gmra.mxu0 %v552
        %v668 = vpop.f32.mrf.mxu0
        %v669 = vadd.f32 0.0, %v668
        %670 = vmatmul.f32.gmra.mxu0 %v555
        %v671 = vpop.f32.mrf.mxu0
        %v672 = vadd.f32 0.0, %v671
        %673 = vmatmul.f32.gmra.mxu0 %v558
        %v674 = vpop.f32.mrf.mxu0
        %v675 = vadd.f32 0.0, %v674
        %676 = vmatmul.f32.gmra.mxu0 %v561
        %v677 = vpop.f32.mrf.mxu0
        %v678 = vadd.f32 0.0, %v677
        %679 = vmatmul.f32.gmra.mxu0 %v564
        %v680 = vpop.f32.mrf.mxu0
        %v681 = vadd.f32 0.0, %v680
        %682 = vmatmul.f32.gmra.mxu0 %v567
        %v683 = vpop.f32.mrf.mxu0
        %v684 = vadd.f32 0.0, %v683
        %685 = vmatmul.f32.gmra.mxu0 %v570
        %v686 = vpop.f32.mrf.mxu0
        %v687 = vadd.f32 0.0, %v686
        %688 = vmatmul.f32.gmra.mxu0 %v573
        %v689 = vpop.f32.mrf.mxu0
        %v690 = vadd.f32 0.0, %v689
        %691 = vmatmul.f32.gmra.mxu0 %v576
        %v692 = vpop.f32.mrf.mxu0
        %v693 = vadd.f32 0.0, %v692
        %694 = vmatmul.f32.gmra.mxu0 %v579
        %v695 = vpop.f32.mrf.mxu0
        %v696 = vadd.f32 0.0, %v695
        %697 = vmatmul.f32.gmra.mxu0 %v582
        %v698 = vpop.f32.mrf.mxu0
        %v699 = vadd.f32 0.0, %v698
        %700 = vmatmul.f32.gmra.mxu0 %v585
        %v701 = vpop.f32.mrf.mxu0
        %v702 = vadd.f32 0.0, %v701
        %703 = vmatmul.f32.gmra.mxu0 %v588
        %v704 = vpop.f32.mrf.mxu0
        %v705 = vadd.f32 0.0, %v704
        %706 = vmatmul.f32.gmra.mxu0 %v591
        %v707 = vpop.f32.mrf.mxu0
        %v708 = vadd.f32 0.0, %v707
        %709 = vmatmul.f32.gmra.mxu0 %v594
        %v710 = vpop.f32.mrf.mxu0
        %v711 = vadd.f32 0.0, %v710
        %712 = vmatmul.f32.gmra.mxu0 %v597
        %v713 = vpop.f32.mrf.mxu0
        %v714 = vadd.f32 0.0, %v713
        %715 = vmatmul.f32.gmra.mxu0 %v600
        %v716 = vpop.f32.mrf.mxu0
        %v717 = vadd.f32 0.0, %v716
        %718 = vmatmul.f32.gmra.mxu0 %v603
        %v719 = vpop.f32.mrf.mxu0
        %v720 = vadd.f32 0.0, %v719
        %721 = vmatmul.f32.gmra.mxu0 %v606
        %v722 = vpop.f32.mrf.mxu0
        %v723 = vadd.f32 0.0, %v722
        %724 = vmatmul.f32.gmra.mxu0 %v609
        %v725 = vpop.f32.mrf.mxu0
        %v726 = vadd.f32 0.0, %v725
        %727 = vmatmul.f32.gmra.mxu0 %v612
        %v728 = vpop.f32.mrf.mxu0
        %v729 = vadd.f32 0.0, %v728
        %730 = vmatmul.f32.gmra.mxu0 %v615
        %v731 = vpop.f32.mrf.mxu0
        %v732 = vadd.f32 0.0, %v731
        %733 = vdwg.mxu0
        %v735 = vsel %vm277, %v454, 0
        %v738 = vsel %vm277, %v455, 0
        %v741 = vsel %vm277, %v456, 0
        %v744 = vsel %vm277, %v457, 0
        %v747 = vsel %vm277, %v458, 0
        %v750 = vsel %vm277, %v459, 0
        %v753 = vsel %vm277, %v460, 0
        %v756 = vsel %vm277, %v461, 0
        %v759 = vsel %vm277, %v462, 0
        %v762 = vsel %vm277, %v463, 0
        %v765 = vsel %vm277, %v464, 0
        %v768 = vsel %vm277, %v465, 0
        %v771 = vsel %vm277, %v466, 0
        %v774 = vsel %vm277, %v467, 0
        %v777 = vsel %vm277, %v468, 0
        %v780 = vsel %vm277, %v469, 0
        %v783 = vsel %vm277, %v470, 0
        %v786 = vsel %vm277, %v471, 0
        %v789 = vsel %vm277, %v472, 0
        %v792 = vsel %vm277, %v473, 0
        %v795 = vsel %vm277, %v474, 0
        %v798 = vsel %vm277, %v475, 0
        %v801 = vsel %vm277, %v476, 0
        %v804 = vsel %vm277, %v477, 0
        %v807 = vsel %vm277, %v478, 0
        %v810 = vsel %vm277, %v479, 0
        %v813 = vsel %vm277, %v480, 0
        %v816 = vsel %vm277, %v481, 0
        %v819 = vsel %vm277, %v482, 0
        %v822 = vsel %vm277, %v483, 0
        %v825 = vsel %vm277, %v484, 0
        %v828 = vsel %vm277, %v485, 0
        %v831 = vsel %vm617, %v486, 0
        %833 = vmatpush.msra.mxu0 0.0
        %834 = vmatpush.msra.mxu0 0.0
        %835 = vmatpush.msra.mxu0 0.0
        %836 = vmatpush.msra.mxu0 0.0
        %837 = vmatpush.msra.mxu0 0.0
        %838 = vmatpush.msra.mxu0 0.0
        %839 = vmatpush.msra.mxu0 0.0
        %840 = vmatpush.msra.mxu0 0.0
        %841 = vmatpush.msra.mxu0 0.0
        %842 = vmatpush.msra.mxu0 0.0
        %843 = vmatpush.msra.mxu0 0.0
        %844 = vmatpush.msra.mxu0 0.0
        %845 = vmatpush.msra.mxu0 0.0
        %846 = vmatpush.msra.mxu0 0.0
        %847 = vmatpush.msra.mxu0 0.0
        %848 = vmatpush.msra.mxu0 %v831
        %849 = vmatmul.f32.gmra.mxu0 %v735
        %v850 = vpop.f32.mrf.mxu0
        %v851 = vadd.f32 %v639, %v850
        %852 = vmatmul.f32.gmra.mxu0 %v738
        %v853 = vpop.f32.mrf.mxu0
        %v854 = vadd.f32 %v642, %v853
        %855 = vmatmul.f32.gmra.mxu0 %v741
        %v856 = vpop.f32.mrf.mxu0
        %v857 = vadd.f32 %v645, %v856
        %858 = vmatmul.f32.gmra.mxu0 %v744
        %v859 = vpop.f32.mrf.mxu0
        %v860 = vadd.f32 %v648, %v859
        %861 = vmatmul.f32.gmra.mxu0 %v747
        %v862 = vpop.f32.mrf.mxu0
        %v863 = vadd.f32 %v651, %v862
        %864 = vmatmul.f32.gmra.mxu0 %v750
        %v865 = vpop.f32.mrf.mxu0
        %v866 = vadd.f32 %v654, %v865
        %867 = vmatmul.f32.gmra.mxu0 %v753
        %v868 = vpop.f32.mrf.mxu0
        %v869 = vadd.f32 %v657, %v868
        %870 = vmatmul.f32.gmra.mxu0 %v756
        %v871 = vpop.f32.mrf.mxu0
        %v872 = vadd.f32 %v660, %v871
        %873 = vmatmul.f32.gmra.mxu0 %v759
        %v874 = vpop.f32.mrf.mxu0
        %v875 = vadd.f32 %v663, %v874
        %876 = vmatmul.f32.gmra.mxu0 %v762
        %v877 = vpop.f32.mrf.mxu0
        %v878 = vadd.f32 %v666, %v877
        %879 = vmatmul.f32.gmra.mxu0 %v765
        %v880 = vpop.f32.mrf.mxu0
        %v881 = vadd.f32 %v669, %v880
        %882 = vmatmul.f32.gmra.mxu0 %v768
        %v883 = vpop.f32.mrf.mxu0
        %v884 = vadd.f32 %v672, %v883
        %885 = vmatmul.f32.gmra.mxu0 %v771
        %v886 = vpop.f32.mrf.mxu0
        %v887 = vadd.f32 %v675, %v886
        %888 = vmatmul.f32.gmra.mxu0 %v774
        %v889 = vpop.f32.mrf.mxu0
        %v890 = vadd.f32 %v678, %v889
        %891 = vmatmul.f32.gmra.mxu0 %v777
        %v892 = vpop.f32.mrf.mxu0
        %v893 = vadd.f32 %v681, %v892
        %894 = vmatmul.f32.gmra.mxu0 %v780
        %v895 = vpop.f32.mrf.mxu0
        %v896 = vadd.f32 %v684, %v895
        %897 = vmatmul.f32.gmra.mxu0 %v783
        %v898 = vpop.f32.mrf.mxu0
        %v899 = vadd.f32 %v687, %v898
        %900 = vmatmul.f32.gmra.mxu0 %v786
        %v901 = vpop.f32.mrf.mxu0
        %v902 = vadd.f32 %v690, %v901
        %903 = vmatmul.f32.gmra.mxu0 %v789
        %v904 = vpop.f32.mrf.mxu0
        %v905 = vadd.f32 %v693, %v904
        %906 = vmatmul.f32.gmra.mxu0 %v792
        %v907 = vpop.f32.mrf.mxu0
        %v908 = vadd.f32 %v696, %v907
        %909 = vmatmul.f32.gmra.mxu0 %v795
        %v910 = vpop.f32.mrf.mxu0
        %v911 = vadd.f32 %v699, %v910
        %912 = vmatmul.f32.gmra.mxu0 %v798
        %v913 = vpop.f32.mrf.mxu0
        %v914 = vadd.f32 %v702, %v913
        %915 = vmatmul.f32.gmra.mxu0 %v801
        %v916 = vpop.f32.mrf.mxu0
        %v917 = vadd.f32 %v705, %v916
        %918 = vmatmul.f32.gmra.mxu0 %v804
        %v919 = vpop.f32.mrf.mxu0
        %v920 = vadd.f32 %v708, %v919
        %921 = vmatmul.f32.gmra.mxu0 %v807
        %v922 = vpop.f32.mrf.mxu0
        %v923 = vadd.f32 %v711, %v922
        %924 = vmatmul.f32.gmra.mxu0 %v810
        %v925 = vpop.f32.mrf.mxu0
        %v926 = vadd.f32 %v714, %v925
        %927 = vmatmul.f32.gmra.mxu0 %v813
        %v928 = vpop.f32.mrf.mxu0
        %v929 = vadd.f32 %v717, %v928
        %930 = vmatmul.f32.gmra.mxu0 %v816
        %v931 = vpop.f32.mrf.mxu0
        %v932 = vadd.f32 %v720, %v931
        %933 = vmatmul.f32.gmra.mxu0 %v819
        %v934 = vpop.f32.mrf.mxu0
        %v935 = vadd.f32 %v723, %v934
        %936 = vmatmul.f32.gmra.mxu0 %v822
        %v937 = vpop.f32.mrf.mxu0
        %v938 = vadd.f32 %v726, %v937
        %939 = vmatmul.f32.gmra.mxu0 %v825
        %v940 = vpop.f32.mrf.mxu0
        %v941 = vadd.f32 %v729, %v940
        %942 = vmatmul.f32.gmra.mxu0 %v828
        %v943 = vpop.f32.mrf.mxu0
        %v944 = vadd.f32 %v732, %v943
        %945 = vdwg.mxu0
        %v946 = vld [vmem:[#allocation2 + $0x2] sm:$0xff]
        %v947 = vld [vmem:[#allocation2 + $0xa] sm:$0xff]
        %v948 = vld [vmem:[#allocation2 + $0x1a] sm:$0xff]
        %v949 = vld [vmem:[#allocation2 + $0x22] sm:$0xff]
        %v950 = vld [vmem:[#allocation2 + $0x32] sm:$0xff]
        %v951 = vld [vmem:[#allocation2 + $0x3a] sm:$0xff]
        %v952 = vld [vmem:[#allocation2 + $0x4a] sm:$0xff]
        %v953 = vld [vmem:[#allocation2 + $0x52] sm:$0xff]
        %v954 = vld [vmem:[#allocation2 + $0x62] sm:$0xff]
        %v955 = vld [vmem:[#allocation2 + $0x6a] sm:$0xff]
        %v956 = vld [vmem:[#allocation2 + $0x7a] sm:$0xff]
        %v957 = vld [vmem:[#allocation2 + $0x82] sm:$0xff]
        %v958 = vld [vmem:[#allocation2 + $0x92] sm:$0xff]
        %v959 = vld [vmem:[#allocation2 + $0x9a] sm:$0xff]
        %v960 = vld [vmem:[#allocation2 + $0xaa] sm:$0xff]
        %v961 = vld [vmem:[#allocation2 + $0xb2] sm:$0xff]
        %v962 = vld [vmem:[#allocation2 + $0xc2] sm:$0xff]
        %v963 = vld [vmem:[#allocation2 + $0xca] sm:$0xff]
        %v964 = vld [vmem:[#allocation2 + $0xda] sm:$0xff]
        %v965 = vld [vmem:[#allocation2 + $0xe2] sm:$0xff]
        %v966 = vld [vmem:[#allocation2 + $0xf2] sm:$0xff]
        %v967 = vld [vmem:[#allocation2 + $0xfa] sm:$0xff]
        %v968 = vld [vmem:[#allocation2 + $0x10a] sm:$0xff]
        %v969 = vld [vmem:[#allocation2 + $0x112] sm:$0xff]
        %v970 = vld [vmem:[#allocation2 + $0x122] sm:$0xff]
        %v971 = vld [vmem:[#allocation2 + $0x12a] sm:$0xff]
        %v972 = vld [vmem:[#allocation2 + $0x13a] sm:$0xff]
        %v973 = vld [vmem:[#allocation2 + $0x142] sm:$0xff]
        %v974 = vld [vmem:[#allocation2 + $0x152] sm:$0xff]
        %v975 = vld [vmem:[#allocation2 + $0x15a] sm:$0xff]
        %v976 = vld [vmem:[#allocation2 + $0x16a] sm:$0xff]
        %v977 = vld [vmem:[#allocation2 + $0x172] sm:$0xff]
        %s978 = scalar_lea.vmem %s1, 8
        %v979 = vld [vmem:[%s978] sm:$0xf]
        %v981 = vsel %vm277, %v946, 0
        %v984 = vsel %vm277, %v947, 0
        %v987 = vsel %vm277, %v948, 0
        %v990 = vsel %vm277, %v949, 0
        %v993 = vsel %vm277, %v950, 0
        %v996 = vsel %vm277, %v951, 0
        %v999 = vsel %vm277, %v952, 0
        %v1002 = vsel %vm277, %v953, 0
        %v1005 = vsel %vm277, %v954, 0
        %v1008 = vsel %vm277, %v955, 0
        %v1011 = vsel %vm277, %v956, 0
        %v1014 = vsel %vm277, %v957, 0
        %v1017 = vsel %vm277, %v958, 0
        %v1020 = vsel %vm277, %v959, 0
        %v1023 = vsel %vm277, %v960, 0
        %v1026 = vsel %vm277, %v961, 0
        %v1029 = vsel %vm277, %v962, 0
        %v1032 = vsel %vm277, %v963, 0
        %v1035 = vsel %vm277, %v964, 0
        %v1038 = vsel %vm277, %v965, 0
        %v1041 = vsel %vm277, %v966, 0
        %v1044 = vsel %vm277, %v967, 0
        %v1047 = vsel %vm277, %v968, 0
        %v1050 = vsel %vm277, %v969, 0
        %v1053 = vsel %vm277, %v970, 0
        %v1056 = vsel %vm277, %v971, 0
        %v1059 = vsel %vm277, %v972, 0
        %v1062 = vsel %vm277, %v973, 0
        %v1065 = vsel %vm277, %v974, 0
        %v1068 = vsel %vm277, %v975, 0
        %v1071 = vsel %vm277, %v976, 0
        %v1074 = vsel %vm277, %v977, 0
        %v1077 = vsel %vm617, %v979, 0
        %1079 = vmatpush.msra.mxu0 0.0
        %1080 = vmatpush.msra.mxu0 0.0
        %1081 = vmatpush.msra.mxu0 0.0
        %1082 = vmatpush.msra.mxu0 0.0
        %1083 = vmatpush.msra.mxu0 0.0
        %1084 = vmatpush.msra.mxu0 0.0
        %1085 = vmatpush.msra.mxu0 0.0
        %1086 = vmatpush.msra.mxu0 0.0
        %1087 = vmatpush.msra.mxu0 0.0
        %1088 = vmatpush.msra.mxu0 0.0
        %1089 = vmatpush.msra.mxu0 0.0
        %1090 = vmatpush.msra.mxu0 0.0
        %1091 = vmatpush.msra.mxu0 0.0
        %1092 = vmatpush.msra.mxu0 0.0
        %1093 = vmatpush.msra.mxu0 0.0
        %1094 = vmatpush.msra.mxu0 %v1077
        %1095 = vmatmul.f32.gmra.mxu0 %v981
        %v1096 = vpop.f32.mrf.mxu0
        %v1097 = vadd.f32 0.0, %v1096
        %1098 = vmatmul.f32.gmra.mxu0 %v984
        %v1099 = vpop.f32.mrf.mxu0
        %v1100 = vadd.f32 0.0, %v1099
        %1101 = vmatmul.f32.gmra.mxu0 %v987
        %v1102 = vpop.f32.mrf.mxu0
        %v1103 = vadd.f32 0.0, %v1102
        %1104 = vmatmul.f32.gmra.mxu0 %v990
        %v1105 = vpop.f32.mrf.mxu0
        %v1106 = vadd.f32 0.0, %v1105
        %1107 = vmatmul.f32.gmra.mxu0 %v993
        %v1108 = vpop.f32.mrf.mxu0
        %v1109 = vadd.f32 0.0, %v1108
        %1110 = vmatmul.f32.gmra.mxu0 %v996
        %v1111 = vpop.f32.mrf.mxu0
        %v1112 = vadd.f32 0.0, %v1111
        %1113 = vmatmul.f32.gmra.mxu0 %v999
        %v1114 = vpop.f32.mrf.mxu0
        %v1115 = vadd.f32 0.0, %v1114
        %1116 = vmatmul.f32.gmra.mxu0 %v1002
        %v1117 = vpop.f32.mrf.mxu0
        %v1118 = vadd.f32 0.0, %v1117
        %1119 = vmatmul.f32.gmra.mxu0 %v1005
        %v1120 = vpop.f32.mrf.mxu0
        %v1121 = vadd.f32 0.0, %v1120
        %1122 = vmatmul.f32.gmra.mxu0 %v1008
        %v1123 = vpop.f32.mrf.mxu0
        %v1124 = vadd.f32 0.0, %v1123
        %1125 = vmatmul.f32.gmra.mxu0 %v1011
        %v1126 = vpop.f32.mrf.mxu0
        %v1127 = vadd.f32 0.0, %v1126
        %1128 = vmatmul.f32.gmra.mxu0 %v1014
        %v1129 = vpop.f32.mrf.mxu0
        %v1130 = vadd.f32 0.0, %v1129
        %1131 = vmatmul.f32.gmra.mxu0 %v1017
        %v1132 = vpop.f32.mrf.mxu0
        %v1133 = vadd.f32 0.0, %v1132
        %1134 = vmatmul.f32.gmra.mxu0 %v1020
        %v1135 = vpop.f32.mrf.mxu0
        %v1136 = vadd.f32 0.0, %v1135
        %1137 = vmatmul.f32.gmra.mxu0 %v1023
        %v1138 = vpop.f32.mrf.mxu0
        %v1139 = vadd.f32 0.0, %v1138
        %1140 = vmatmul.f32.gmra.mxu0 %v1026
        %v1141 = vpop.f32.mrf.mxu0
        %v1142 = vadd.f32 0.0, %v1141
        %1143 = vmatmul.f32.gmra.mxu0 %v1029
        %v1144 = vpop.f32.mrf.mxu0
        %v1145 = vadd.f32 0.0, %v1144
        %1146 = vmatmul.f32.gmra.mxu0 %v1032
        %v1147 = vpop.f32.mrf.mxu0
        %v1148 = vadd.f32 0.0, %v1147
        %1149 = vmatmul.f32.gmra.mxu0 %v1035
        %v1150 = vpop.f32.mrf.mxu0
        %v1151 = vadd.f32 0.0, %v1150
        %1152 = vmatmul.f32.gmra.mxu0 %v1038
        %v1153 = vpop.f32.mrf.mxu0
        %v1154 = vadd.f32 0.0, %v1153
        %1155 = vmatmul.f32.gmra.mxu0 %v1041
        %v1156 = vpop.f32.mrf.mxu0
        %v1157 = vadd.f32 0.0, %v1156
        %1158 = vmatmul.f32.gmra.mxu0 %v1044
        %v1159 = vpop.f32.mrf.mxu0
        %v1160 = vadd.f32 0.0, %v1159
        %1161 = vmatmul.f32.gmra.mxu0 %v1047
        %v1162 = vpop.f32.mrf.mxu0
        %v1163 = vadd.f32 0.0, %v1162
        %1164 = vmatmul.f32.gmra.mxu0 %v1050
        %v1165 = vpop.f32.mrf.mxu0
        %v1166 = vadd.f32 0.0, %v1165
        %1167 = vmatmul.f32.gmra.mxu0 %v1053
        %v1168 = vpop.f32.mrf.mxu0
        %v1169 = vadd.f32 0.0, %v1168
        %1170 = vmatmul.f32.gmra.mxu0 %v1056
        %v1171 = vpop.f32.mrf.mxu0
        %v1172 = vadd.f32 0.0, %v1171
        %1173 = vmatmul.f32.gmra.mxu0 %v1059
        %v1174 = vpop.f32.mrf.mxu0
        %v1175 = vadd.f32 0.0, %v1174
        %1176 = vmatmul.f32.gmra.mxu0 %v1062
        %v1177 = vpop.f32.mrf.mxu0
        %v1178 = vadd.f32 0.0, %v1177
        %1179 = vmatmul.f32.gmra.mxu0 %v1065
        %v1180 = vpop.f32.mrf.mxu0
        %v1181 = vadd.f32 0.0, %v1180
        %1182 = vmatmul.f32.gmra.mxu0 %v1068
        %v1183 = vpop.f32.mrf.mxu0
        %v1184 = vadd.f32 0.0, %v1183
        %1185 = vmatmul.f32.gmra.mxu0 %v1071
        %v1186 = vpop.f32.mrf.mxu0
        %v1187 = vadd.f32 0.0, %v1186
        %1188 = vmatmul.f32.gmra.mxu0 %v1074
        %v1189 = vpop.f32.mrf.mxu0
        %v1190 = vadd.f32 0.0, %v1189
        %1191 = vdwg.mxu0
        %v1192 = vadd.f32 %v851, %v1097
        %v1193 = vadd.f32 %v854, %v1100
        %v1194 = vadd.f32 %v857, %v1103
        %v1195 = vadd.f32 %v860, %v1106
        %v1196 = vadd.f32 %v863, %v1109
        %v1197 = vadd.f32 %v866, %v1112
        %v1198 = vadd.f32 %v869, %v1115
        %v1199 = vadd.f32 %v872, %v1118
        %v1200 = vadd.f32 %v875, %v1121
        %v1201 = vadd.f32 %v878, %v1124
        %v1202 = vadd.f32 %v881, %v1127
        %v1203 = vadd.f32 %v884, %v1130
        %v1204 = vadd.f32 %v887, %v1133
        %v1205 = vadd.f32 %v890, %v1136
        %v1206 = vadd.f32 %v893, %v1139
        %v1207 = vadd.f32 %v896, %v1142
        %v1208 = vadd.f32 %v899, %v1145
        %v1209 = vadd.f32 %v902, %v1148
        %v1210 = vadd.f32 %v905, %v1151
        %v1211 = vadd.f32 %v908, %v1154
        %v1212 = vadd.f32 %v911, %v1157
        %v1213 = vadd.f32 %v914, %v1160
        %v1214 = vadd.f32 %v917, %v1163
        %v1215 = vadd.f32 %v920, %v1166
        %v1216 = vadd.f32 %v923, %v1169
        %v1217 = vadd.f32 %v926, %v1172
        %v1218 = vadd.f32 %v929, %v1175
        %v1219 = vadd.f32 %v932, %v1178
        %v1220 = vadd.f32 %v935, %v1181
        %v1221 = vadd.f32 %v938, %v1184
        %v1222 = vadd.f32 %v941, %v1187
        %v1223 = vadd.f32 %v944, %v1190
        %v1224 = vld [vmem:[%s421] sm:$0xff]
        %v1225 = vld [vmem:[%s421 + $0x8] sm:$0xff]
        %v1226 = vld [vmem:[%s421 + $0x18] sm:$0xff]
        %v1227 = vld [vmem:[%s421 + $0x20] sm:$0xff]
        %v1228 = vld [vmem:[%s421 + $0x30] sm:$0xff]
        %v1229 = vld [vmem:[%s421 + $0x38] sm:$0xff]
        %v1230 = vld [vmem:[%s421 + $0x48] sm:$0xff]
        %v1231 = vld [vmem:[%s421 + $0x50] sm:$0xff]
        %v1232 = vld [vmem:[%s421 + $0x60] sm:$0xff]
        %v1233 = vld [vmem:[%s421 + $0x68] sm:$0xff]
        %v1234 = vld [vmem:[%s421 + $0x78] sm:$0xff]
        %v1235 = vld [vmem:[%s421 + $0x80] sm:$0xff]
        %v1236 = vld [vmem:[%s421 + $0x90] sm:$0xff]
        %v1237 = vld [vmem:[%s421 + $0x98] sm:$0xff]
        %v1238 = vld [vmem:[%s421 + $0xa8] sm:$0xff]
        %v1239 = vld [vmem:[%s421 + $0xb0] sm:$0xff]
        %v1240 = vld [vmem:[%s421 + $0xc0] sm:$0xff]
        %v1241 = vld [vmem:[%s421 + $0xc8] sm:$0xff]
        %v1242 = vld [vmem:[%s421 + $0xd8] sm:$0xff]
        %v1243 = vld [vmem:[%s421 + $0xe0] sm:$0xff]
        %v1244 = vld [vmem:[%s421 + $0xf0] sm:$0xff]
        %v1245 = vld [vmem:[%s421 + $0xf8] sm:$0xff]
        %v1246 = vld [vmem:[%s421 + $0x108] sm:$0xff]
        %v1247 = vld [vmem:[%s421 + $0x110] sm:$0xff]
        %v1248 = vld [vmem:[%s421 + $0x120] sm:$0xff]
        %v1249 = vld [vmem:[%s421 + $0x128] sm:$0xff]
        %v1250 = vld [vmem:[%s421 + $0x138] sm:$0xff]
        %v1251 = vld [vmem:[%s421 + $0x140] sm:$0xff]
        %v1252 = vld [vmem:[%s421 + $0x150] sm:$0xff]
        %v1253 = vld [vmem:[%s421 + $0x158] sm:$0xff]
        %v1254 = vld [vmem:[%s421 + $0x168] sm:$0xff]
        %v1255 = vld [vmem:[%s421 + $0x170] sm:$0xff]
        %s1256 = scalar_lea.vmem %s1, 12
        %v1257 = vld [vmem:[%s1256] sm:$0xf]
        %v1259 = vsel %vm277, %v1224, 0
        %v1262 = vsel %vm277, %v1225, 0
        %v1265 = vsel %vm277, %v1226, 0
        %v1268 = vsel %vm277, %v1227, 0
        %v1271 = vsel %vm277, %v1228, 0
        %v1274 = vsel %vm277, %v1229, 0
        %v1277 = vsel %vm277, %v1230, 0
        %v1280 = vsel %vm277, %v1231, 0
        %v1283 = vsel %vm277, %v1232, 0
        %v1286 = vsel %vm277, %v1233, 0
        %v1289 = vsel %vm277, %v1234, 0
        %v1292 = vsel %vm277, %v1235, 0
        %v1295 = vsel %vm277, %v1236, 0
        %v1298 = vsel %vm277, %v1237, 0
        %v1301 = vsel %vm277, %v1238, 0
        %v1304 = vsel %vm277, %v1239, 0
        %v1307 = vsel %vm277, %v1240, 0
        %v1310 = vsel %vm277, %v1241, 0
        %v1313 = vsel %vm277, %v1242, 0
        %v1316 = vsel %vm277, %v1243, 0
        %v1319 = vsel %vm277, %v1244, 0
        %v1322 = vsel %vm277, %v1245, 0
        %v1325 = vsel %vm277, %v1246, 0
        %v1328 = vsel %vm277, %v1247, 0
        %v1331 = vsel %vm277, %v1248, 0
        %v1334 = vsel %vm277, %v1249, 0
        %v1337 = vsel %vm277, %v1250, 0
        %v1340 = vsel %vm277, %v1251, 0
        %v1343 = vsel %vm277, %v1252, 0
        %v1346 = vsel %vm277, %v1253, 0
        %v1349 = vsel %vm277, %v1254, 0
        %v1352 = vsel %vm277, %v1255, 0
        %v1355 = vsel %vm617, %v1257, 0
        %1357 = vmatpush.msra.mxu0 0.0
        %1358 = vmatpush.msra.mxu0 0.0
        %1359 = vmatpush.msra.mxu0 0.0
        %1360 = vmatpush.msra.mxu0 0.0
        %1361 = vmatpush.msra.mxu0 0.0
        %1362 = vmatpush.msra.mxu0 0.0
        %1363 = vmatpush.msra.mxu0 0.0
        %1364 = vmatpush.msra.mxu0 0.0
        %1365 = vmatpush.msra.mxu0 0.0
        %1366 = vmatpush.msra.mxu0 0.0
        %1367 = vmatpush.msra.mxu0 0.0
        %1368 = vmatpush.msra.mxu0 0.0
        %1369 = vmatpush.msra.mxu0 0.0
        %1370 = vmatpush.msra.mxu0 0.0
        %1371 = vmatpush.msra.mxu0 0.0
        %1372 = vmatpush.msra.mxu0 %v1355
        %1373 = vmatmul.f32.gmra.mxu0 %v1259
        %v1374 = vpop.f32.mrf.mxu0
        %v1375 = vadd.f32 0.0, %v1374
        %1376 = vmatmul.f32.gmra.mxu0 %v1262
        %v1377 = vpop.f32.mrf.mxu0
        %v1378 = vadd.f32 0.0, %v1377
        %1379 = vmatmul.f32.gmra.mxu0 %v1265
        %v1380 = vpop.f32.mrf.mxu0
        %v1381 = vadd.f32 0.0, %v1380
        %1382 = vmatmul.f32.gmra.mxu0 %v1268
        %v1383 = vpop.f32.mrf.mxu0
        %v1384 = vadd.f32 0.0, %v1383
        %1385 = vmatmul.f32.gmra.mxu0 %v1271
        %v1386 = vpop.f32.mrf.mxu0
        %v1387 = vadd.f32 0.0, %v1386
        %1388 = vmatmul.f32.gmra.mxu0 %v1274
        %v1389 = vpop.f32.mrf.mxu0
        %v1390 = vadd.f32 0.0, %v1389
        %1391 = vmatmul.f32.gmra.mxu0 %v1277
        %v1392 = vpop.f32.mrf.mxu0
        %v1393 = vadd.f32 0.0, %v1392
        %1394 = vmatmul.f32.gmra.mxu0 %v1280
        %v1395 = vpop.f32.mrf.mxu0
        %v1396 = vadd.f32 0.0, %v1395
        %1397 = vmatmul.f32.gmra.mxu0 %v1283
        %v1398 = vpop.f32.mrf.mxu0
        %v1399 = vadd.f32 0.0, %v1398
        %1400 = vmatmul.f32.gmra.mxu0 %v1286
        %v1401 = vpop.f32.mrf.mxu0
        %v1402 = vadd.f32 0.0, %v1401
        %1403 = vmatmul.f32.gmra.mxu0 %v1289
        %v1404 = vpop.f32.mrf.mxu0
        %v1405 = vadd.f32 0.0, %v1404
        %1406 = vmatmul.f32.gmra.mxu0 %v1292
        %v1407 = vpop.f32.mrf.mxu0
        %v1408 = vadd.f32 0.0, %v1407
        %1409 = vmatmul.f32.gmra.mxu0 %v1295
        %v1410 = vpop.f32.mrf.mxu0
        %v1411 = vadd.f32 0.0, %v1410
        %1412 = vmatmul.f32.gmra.mxu0 %v1298
        %v1413 = vpop.f32.mrf.mxu0
        %v1414 = vadd.f32 0.0, %v1413
        %1415 = vmatmul.f32.gmra.mxu0 %v1301
        %v1416 = vpop.f32.mrf.mxu0
        %v1417 = vadd.f32 0.0, %v1416
        %1418 = vmatmul.f32.gmra.mxu0 %v1304
        %v1419 = vpop.f32.mrf.mxu0
        %v1420 = vadd.f32 0.0, %v1419
        %1421 = vmatmul.f32.gmra.mxu0 %v1307
        %v1422 = vpop.f32.mrf.mxu0
        %v1423 = vadd.f32 0.0, %v1422
        %1424 = vmatmul.f32.gmra.mxu0 %v1310
        %v1425 = vpop.f32.mrf.mxu0
        %v1426 = vadd.f32 0.0, %v1425
        %1427 = vmatmul.f32.gmra.mxu0 %v1313
        %v1428 = vpop.f32.mrf.mxu0
        %v1429 = vadd.f32 0.0, %v1428
        %1430 = vmatmul.f32.gmra.mxu0 %v1316
        %v1431 = vpop.f32.mrf.mxu0
        %v1432 = vadd.f32 0.0, %v1431
        %1433 = vmatmul.f32.gmra.mxu0 %v1319
        %v1434 = vpop.f32.mrf.mxu0
        %v1435 = vadd.f32 0.0, %v1434
        %1436 = vmatmul.f32.gmra.mxu0 %v1322
        %v1437 = vpop.f32.mrf.mxu0
        %v1438 = vadd.f32 0.0, %v1437
        %1439 = vmatmul.f32.gmra.mxu0 %v1325
        %v1440 = vpop.f32.mrf.mxu0
        %v1441 = vadd.f32 0.0, %v1440
        %1442 = vmatmul.f32.gmra.mxu0 %v1328
        %v1443 = vpop.f32.mrf.mxu0
        %v1444 = vadd.f32 0.0, %v1443
        %1445 = vmatmul.f32.gmra.mxu0 %v1331
        %v1446 = vpop.f32.mrf.mxu0
        %v1447 = vadd.f32 0.0, %v1446
        %1448 = vmatmul.f32.gmra.mxu0 %v1334
        %v1449 = vpop.f32.mrf.mxu0
        %v1450 = vadd.f32 0.0, %v1449
        %1451 = vmatmul.f32.gmra.mxu0 %v1337
        %v1452 = vpop.f32.mrf.mxu0
        %v1453 = vadd.f32 0.0, %v1452
        %1454 = vmatmul.f32.gmra.mxu0 %v1340
        %v1455 = vpop.f32.mrf.mxu0
        %v1456 = vadd.f32 0.0, %v1455
        %1457 = vmatmul.f32.gmra.mxu0 %v1343
        %v1458 = vpop.f32.mrf.mxu0
        %v1459 = vadd.f32 0.0, %v1458
        %1460 = vmatmul.f32.gmra.mxu0 %v1346
        %v1461 = vpop.f32.mrf.mxu0
        %v1462 = vadd.f32 0.0, %v1461
        %1463 = vmatmul.f32.gmra.mxu0 %v1349
        %v1464 = vpop.f32.mrf.mxu0
        %v1465 = vadd.f32 0.0, %v1464
        %1466 = vmatmul.f32.gmra.mxu0 %v1352
        %v1467 = vpop.f32.mrf.mxu0
        %v1468 = vadd.f32 0.0, %v1467
        %1469 = vdwg.mxu0
        %v1470 = vadd.f32 %v1192, %v1375
        %v1471 = vadd.f32 %v1193, %v1378
        %v1472 = vadd.f32 %v1194, %v1381
        %v1473 = vadd.f32 %v1195, %v1384
        %v1474 = vadd.f32 %v1196, %v1387
        %v1475 = vadd.f32 %v1197, %v1390
        %v1476 = vadd.f32 %v1198, %v1393
        %v1477 = vadd.f32 %v1199, %v1396
        %v1478 = vadd.f32 %v1200, %v1399
        %v1479 = vadd.f32 %v1201, %v1402
        %v1480 = vadd.f32 %v1202, %v1405
        %v1481 = vadd.f32 %v1203, %v1408
        %v1482 = vadd.f32 %v1204, %v1411
        %v1483 = vadd.f32 %v1205, %v1414
        %v1484 = vadd.f32 %v1206, %v1417
        %v1485 = vadd.f32 %v1207, %v1420
        %v1486 = vadd.f32 %v1208, %v1423
        %v1487 = vadd.f32 %v1209, %v1426
        %v1488 = vadd.f32 %v1210, %v1429
        %v1489 = vadd.f32 %v1211, %v1432
        %v1490 = vadd.f32 %v1212, %v1435
        %v1491 = vadd.f32 %v1213, %v1438
        %v1492 = vadd.f32 %v1214, %v1441
        %v1493 = vadd.f32 %v1215, %v1444
        %v1494 = vadd.f32 %v1216, %v1447
        %v1495 = vadd.f32 %v1217, %v1450
        %v1496 = vadd.f32 %v1218, %v1453
        %v1497 = vadd.f32 %v1219, %v1456
        %v1498 = vadd.f32 %v1220, %v1459
        %v1499 = vadd.f32 %v1221, %v1462
        %v1500 = vadd.f32 %v1222, %v1465
        %v1501 = vadd.f32 %v1223, %v1468
        %v1502 = vld [vmem:[%s421 + $0x1] sm:$0xff]
        %v1503 = vld [vmem:[%s421 + $0x9] sm:$0xff]
        %v1504 = vld [vmem:[%s421 + $0x19] sm:$0xff]
        %v1505 = vld [vmem:[%s421 + $0x21] sm:$0xff]
        %v1506 = vld [vmem:[%s421 + $0x31] sm:$0xff]
        %v1507 = vld [vmem:[%s421 + $0x39] sm:$0xff]
        %v1508 = vld [vmem:[%s421 + $0x49] sm:$0xff]
        %v1509 = vld [vmem:[%s421 + $0x51] sm:$0xff]
        %v1510 = vld [vmem:[%s421 + $0x61] sm:$0xff]
        %v1511 = vld [vmem:[%s421 + $0x69] sm:$0xff]
        %v1512 = vld [vmem:[%s421 + $0x79] sm:$0xff]
        %v1513 = vld [vmem:[%s421 + $0x81] sm:$0xff]
        %v1514 = vld [vmem:[%s421 + $0x91] sm:$0xff]
        %v1515 = vld [vmem:[%s421 + $0x99] sm:$0xff]
        %v1516 = vld [vmem:[%s421 + $0xa9] sm:$0xff]
        %v1517 = vld [vmem:[%s421 + $0xb1] sm:$0xff]
        %v1518 = vld [vmem:[%s421 + $0xc1] sm:$0xff]
        %v1519 = vld [vmem:[%s421 + $0xc9] sm:$0xff]
        %v1520 = vld [vmem:[%s421 + $0xd9] sm:$0xff]
        %v1521 = vld [vmem:[%s421 + $0xe1] sm:$0xff]
        %v1522 = vld [vmem:[%s421 + $0xf1] sm:$0xff]
        %v1523 = vld [vmem:[%s421 + $0xf9] sm:$0xff]
        %v1524 = vld [vmem:[%s421 + $0x109] sm:$0xff]
        %v1525 = vld [vmem:[%s421 + $0x111] sm:$0xff]
        %v1526 = vld [vmem:[%s421 + $0x121] sm:$0xff]
        %v1527 = vld [vmem:[%s421 + $0x129] sm:$0xff]
        %v1528 = vld [vmem:[%s421 + $0x139] sm:$0xff]
        %v1529 = vld [vmem:[%s421 + $0x141] sm:$0xff]
        %v1530 = vld [vmem:[%s421 + $0x151] sm:$0xff]
        %v1531 = vld [vmem:[%s421 + $0x159] sm:$0xff]
        %v1532 = vld [vmem:[%s421 + $0x169] sm:$0xff]
        %v1533 = vld [vmem:[%s421 + $0x171] sm:$0xff]
        %s1534 = scalar_lea.vmem %s1, 16
        %v1535 = vld [vmem:[%s1534] sm:$0xf]
        %v1537 = vsel %vm277, %v1502, 0
        %v1540 = vsel %vm277, %v1503, 0
        %v1543 = vsel %vm277, %v1504, 0
        %v1546 = vsel %vm277, %v1505, 0
        %v1549 = vsel %vm277, %v1506, 0
        %v1552 = vsel %vm277, %v1507, 0
        %v1555 = vsel %vm277, %v1508, 0
        %v1558 = vsel %vm277, %v1509, 0
        %v1561 = vsel %vm277, %v1510, 0
        %v1564 = vsel %vm277, %v1511, 0
        %v1567 = vsel %vm277, %v1512, 0
        %v1570 = vsel %vm277, %v1513, 0
        %v1573 = vsel %vm277, %v1514, 0
        %v1576 = vsel %vm277, %v1515, 0
        %v1579 = vsel %vm277, %v1516, 0
        %v1582 = vsel %vm277, %v1517, 0
        %v1585 = vsel %vm277, %v1518, 0
        %v1588 = vsel %vm277, %v1519, 0
        %v1591 = vsel %vm277, %v1520, 0
        %v1594 = vsel %vm277, %v1521, 0
        %v1597 = vsel %vm277, %v1522, 0
        %v1600 = vsel %vm277, %v1523, 0
        %v1603 = vsel %vm277, %v1524, 0
        %v1606 = vsel %vm277, %v1525, 0
        %v1609 = vsel %vm277, %v1526, 0
        %v1612 = vsel %vm277, %v1527, 0
        %v1615 = vsel %vm277, %v1528, 0
        %v1618 = vsel %vm277, %v1529, 0
        %v1621 = vsel %vm277, %v1530, 0
        %v1624 = vsel %vm277, %v1531, 0
        %v1627 = vsel %vm277, %v1532, 0
        %v1630 = vsel %vm277, %v1533, 0
        %v1633 = vsel %vm617, %v1535, 0
        %1635 = vmatpush.msra.mxu0 0.0
        %1636 = vmatpush.msra.mxu0 0.0
        %1637 = vmatpush.msra.mxu0 0.0
        %1638 = vmatpush.msra.mxu0 0.0
        %1639 = vmatpush.msra.mxu0 0.0
        %1640 = vmatpush.msra.mxu0 0.0
        %1641 = vmatpush.msra.mxu0 0.0
        %1642 = vmatpush.msra.mxu0 0.0
        %1643 = vmatpush.msra.mxu0 0.0
        %1644 = vmatpush.msra.mxu0 0.0
        %1645 = vmatpush.msra.mxu0 0.0
        %1646 = vmatpush.msra.mxu0 0.0
        %1647 = vmatpush.msra.mxu0 0.0
        %1648 = vmatpush.msra.mxu0 0.0
        %1649 = vmatpush.msra.mxu0 0.0
        %1650 = vmatpush.msra.mxu0 %v1633
        %1651 = vmatmul.f32.gmra.mxu0 %v1537
        %v1652 = vpop.f32.mrf.mxu0
        %v1653 = vadd.f32 0.0, %v1652
        %1654 = vmatmul.f32.gmra.mxu0 %v1540
        %v1655 = vpop.f32.mrf.mxu0
        %v1656 = vadd.f32 0.0, %v1655
        %1657 = vmatmul.f32.gmra.mxu0 %v1543
        %v1658 = vpop.f32.mrf.mxu0
        %v1659 = vadd.f32 0.0, %v1658
        %1660 = vmatmul.f32.gmra.mxu0 %v1546
        %v1661 = vpop.f32.mrf.mxu0
        %v1662 = vadd.f32 0.0, %v1661
        %1663 = vmatmul.f32.gmra.mxu0 %v1549
        %v1664 = vpop.f32.mrf.mxu0
        %v1665 = vadd.f32 0.0, %v1664
        %1666 = vmatmul.f32.gmra.mxu0 %v1552
        %v1667 = vpop.f32.mrf.mxu0
        %v1668 = vadd.f32 0.0, %v1667
        %1669 = vmatmul.f32.gmra.mxu0 %v1555
        %v1670 = vpop.f32.mrf.mxu0
        %v1671 = vadd.f32 0.0, %v1670
        %1672 = vmatmul.f32.gmra.mxu0 %v1558
        %v1673 = vpop.f32.mrf.mxu0
        %v1674 = vadd.f32 0.0, %v1673
        %1675 = vmatmul.f32.gmra.mxu0 %v1561
        %v1676 = vpop.f32.mrf.mxu0
        %v1677 = vadd.f32 0.0, %v1676
        %1678 = vmatmul.f32.gmra.mxu0 %v1564
        %v1679 = vpop.f32.mrf.mxu0
        %v1680 = vadd.f32 0.0, %v1679
        %1681 = vmatmul.f32.gmra.mxu0 %v1567
        %v1682 = vpop.f32.mrf.mxu0
        %v1683 = vadd.f32 0.0, %v1682
        %1684 = vmatmul.f32.gmra.mxu0 %v1570
        %v1685 = vpop.f32.mrf.mxu0
        %v1686 = vadd.f32 0.0, %v1685
        %1687 = vmatmul.f32.gmra.mxu0 %v1573
        %v1688 = vpop.f32.mrf.mxu0
        %v1689 = vadd.f32 0.0, %v1688
        %1690 = vmatmul.f32.gmra.mxu0 %v1576
        %v1691 = vpop.f32.mrf.mxu0
        %v1692 = vadd.f32 0.0, %v1691
        %1693 = vmatmul.f32.gmra.mxu0 %v1579
        %v1694 = vpop.f32.mrf.mxu0
        %v1695 = vadd.f32 0.0, %v1694
        %1696 = vmatmul.f32.gmra.mxu0 %v1582
        %v1697 = vpop.f32.mrf.mxu0
        %v1698 = vadd.f32 0.0, %v1697
        %1699 = vmatmul.f32.gmra.mxu0 %v1585
        %v1700 = vpop.f32.mrf.mxu0
        %v1701 = vadd.f32 0.0, %v1700
        %1702 = vmatmul.f32.gmra.mxu0 %v1588
        %v1703 = vpop.f32.mrf.mxu0
        %v1704 = vadd.f32 0.0, %v1703
        %1705 = vmatmul.f32.gmra.mxu0 %v1591
        %v1706 = vpop.f32.mrf.mxu0
        %v1707 = vadd.f32 0.0, %v1706
        %1708 = vmatmul.f32.gmra.mxu0 %v1594
        %v1709 = vpop.f32.mrf.mxu0
        %v1710 = vadd.f32 0.0, %v1709
        %1711 = vmatmul.f32.gmra.mxu0 %v1597
        %v1712 = vpop.f32.mrf.mxu0
        %v1713 = vadd.f32 0.0, %v1712
        %1714 = vmatmul.f32.gmra.mxu0 %v1600
        %v1715 = vpop.f32.mrf.mxu0
        %v1716 = vadd.f32 0.0, %v1715
        %1717 = vmatmul.f32.gmra.mxu0 %v1603
        %v1718 = vpop.f32.mrf.mxu0
        %v1719 = vadd.f32 0.0, %v1718
        %1720 = vmatmul.f32.gmra.mxu0 %v1606
        %v1721 = vpop.f32.mrf.mxu0
        %v1722 = vadd.f32 0.0, %v1721
        %1723 = vmatmul.f32.gmra.mxu0 %v1609
        %v1724 = vpop.f32.mrf.mxu0
        %v1725 = vadd.f32 0.0, %v1724
        %1726 = vmatmul.f32.gmra.mxu0 %v1612
        %v1727 = vpop.f32.mrf.mxu0
        %v1728 = vadd.f32 0.0, %v1727
        %1729 = vmatmul.f32.gmra.mxu0 %v1615
        %v1730 = vpop.f32.mrf.mxu0
        %v1731 = vadd.f32 0.0, %v1730
        %1732 = vmatmul.f32.gmra.mxu0 %v1618
        %v1733 = vpop.f32.mrf.mxu0
        %v1734 = vadd.f32 0.0, %v1733
        %1735 = vmatmul.f32.gmra.mxu0 %v1621
        %v1736 = vpop.f32.mrf.mxu0
        %v1737 = vadd.f32 0.0, %v1736
        %1738 = vmatmul.f32.gmra.mxu0 %v1624
        %v1739 = vpop.f32.mrf.mxu0
        %v1740 = vadd.f32 0.0, %v1739
        %1741 = vmatmul.f32.gmra.mxu0 %v1627
        %v1742 = vpop.f32.mrf.mxu0
        %v1743 = vadd.f32 0.0, %v1742
        %1744 = vmatmul.f32.gmra.mxu0 %v1630
        %v1745 = vpop.f32.mrf.mxu0
        %v1746 = vadd.f32 0.0, %v1745
        %1747 = vdwg.mxu0
        %v1748 = vadd.f32 %v1470, %v1653
        %v1749 = vadd.f32 %v1471, %v1656
        %v1750 = vadd.f32 %v1472, %v1659
        %v1751 = vadd.f32 %v1473, %v1662
        %v1752 = vadd.f32 %v1474, %v1665
        %v1753 = vadd.f32 %v1475, %v1668
        %v1754 = vadd.f32 %v1476, %v1671
        %v1755 = vadd.f32 %v1477, %v1674
        %v1756 = vadd.f32 %v1478, %v1677
        %v1757 = vadd.f32 %v1479, %v1680
        %v1758 = vadd.f32 %v1480, %v1683
        %v1759 = vadd.f32 %v1481, %v1686
        %v1760 = vadd.f32 %v1482, %v1689
        %v1761 = vadd.f32 %v1483, %v1692
        %v1762 = vadd.f32 %v1484, %v1695
        %v1763 = vadd.f32 %v1485, %v1698
        %v1764 = vadd.f32 %v1486, %v1701
        %v1765 = vadd.f32 %v1487, %v1704
        %v1766 = vadd.f32 %v1488, %v1707
        %v1767 = vadd.f32 %v1489, %v1710
        %v1768 = vadd.f32 %v1490, %v1713
        %v1769 = vadd.f32 %v1491, %v1716
        %v1770 = vadd.f32 %v1492, %v1719
        %v1771 = vadd.f32 %v1493, %v1722
        %v1772 = vadd.f32 %v1494, %v1725
        %v1773 = vadd.f32 %v1495, %v1728
        %v1774 = vadd.f32 %v1496, %v1731
        %v1775 = vadd.f32 %v1497, %v1734
        %v1776 = vadd.f32 %v1498, %v1737
        %v1777 = vadd.f32 %v1499, %v1740
        %v1778 = vadd.f32 %v1500, %v1743
        %v1779 = vadd.f32 %v1501, %v1746
        %v1780 = vld [vmem:[%s421 + $0x2] sm:$0xff]
        %v1781 = vld [vmem:[%s421 + $0xa] sm:$0xff]
        %v1782 = vld [vmem:[%s421 + $0x1a] sm:$0xff]
        %v1783 = vld [vmem:[%s421 + $0x22] sm:$0xff]
        %v1784 = vld [vmem:[%s421 + $0x32] sm:$0xff]
        %v1785 = vld [vmem:[%s421 + $0x3a] sm:$0xff]
        %v1786 = vld [vmem:[%s421 + $0x4a] sm:$0xff]
        %v1787 = vld [vmem:[%s421 + $0x52] sm:$0xff]
        %v1788 = vld [vmem:[%s421 + $0x62] sm:$0xff]
        %v1789 = vld [vmem:[%s421 + $0x6a] sm:$0xff]
        %v1790 = vld [vmem:[%s421 + $0x7a] sm:$0xff]
        %v1791 = vld [vmem:[%s421 + $0x82] sm:$0xff]
        %v1792 = vld [vmem:[%s421 + $0x92] sm:$0xff]
        %v1793 = vld [vmem:[%s421 + $0x9a] sm:$0xff]
        %v1794 = vld [vmem:[%s421 + $0xaa] sm:$0xff]
        %v1795 = vld [vmem:[%s421 + $0xb2] sm:$0xff]
        %v1796 = vld [vmem:[%s421 + $0xc2] sm:$0xff]
        %v1797 = vld [vmem:[%s421 + $0xca] sm:$0xff]
        %v1798 = vld [vmem:[%s421 + $0xda] sm:$0xff]
        %v1799 = vld [vmem:[%s421 + $0xe2] sm:$0xff]
        %v1800 = vld [vmem:[%s421 + $0xf2] sm:$0xff]
        %v1801 = vld [vmem:[%s421 + $0xfa] sm:$0xff]
        %v1802 = vld [vmem:[%s421 + $0x10a] sm:$0xff]
        %v1803 = vld [vmem:[%s421 + $0x112] sm:$0xff]
        %v1804 = vld [vmem:[%s421 + $0x122] sm:$0xff]
        %v1805 = vld [vmem:[%s421 + $0x12a] sm:$0xff]
        %v1806 = vld [vmem:[%s421 + $0x13a] sm:$0xff]
        %v1807 = vld [vmem:[%s421 + $0x142] sm:$0xff]
        %v1808 = vld [vmem:[%s421 + $0x152] sm:$0xff]
        %v1809 = vld [vmem:[%s421 + $0x15a] sm:$0xff]
        %v1810 = vld [vmem:[%s421 + $0x16a] sm:$0xff]
        %v1811 = vld [vmem:[%s421 + $0x172] sm:$0xff]
        %s1812 = scalar_lea.vmem %s1, 20
        %v1813 = vld [vmem:[%s1812] sm:$0xf]
        %v1815 = vsel %vm277, %v1780, 0
        %v1818 = vsel %vm277, %v1781, 0
        %v1821 = vsel %vm277, %v1782, 0
        %v1824 = vsel %vm277, %v1783, 0
        %v1827 = vsel %vm277, %v1784, 0
        %v1830 = vsel %vm277, %v1785, 0
        %v1833 = vsel %vm277, %v1786, 0
        %v1836 = vsel %vm277, %v1787, 0
        %v1839 = vsel %vm277, %v1788, 0
        %v1842 = vsel %vm277, %v1789, 0
        %v1845 = vsel %vm277, %v1790, 0
        %v1848 = vsel %vm277, %v1791, 0
        %v1851 = vsel %vm277, %v1792, 0
        %v1854 = vsel %vm277, %v1793, 0
        %v1857 = vsel %vm277, %v1794, 0
        %v1860 = vsel %vm277, %v1795, 0
        %v1863 = vsel %vm277, %v1796, 0
        %v1866 = vsel %vm277, %v1797, 0
        %v1869 = vsel %vm277, %v1798, 0
        %v1872 = vsel %vm277, %v1799, 0
        %v1875 = vsel %vm277, %v1800, 0
        %v1878 = vsel %vm277, %v1801, 0
        %v1881 = vsel %vm277, %v1802, 0
        %v1884 = vsel %vm277, %v1803, 0
        %v1887 = vsel %vm277, %v1804, 0
        %v1890 = vsel %vm277, %v1805, 0
        %v1893 = vsel %vm277, %v1806, 0
        %v1896 = vsel %vm277, %v1807, 0
        %v1899 = vsel %vm277, %v1808, 0
        %v1902 = vsel %vm277, %v1809, 0
        %v1905 = vsel %vm277, %v1810, 0
        %v1908 = vsel %vm277, %v1811, 0
        %v1911 = vsel %vm617, %v1813, 0
        %1913 = vmatpush.msra.mxu0 0.0
        %1914 = vmatpush.msra.mxu0 0.0
        %1915 = vmatpush.msra.mxu0 0.0
        %1916 = vmatpush.msra.mxu0 0.0
        %1917 = vmatpush.msra.mxu0 0.0
        %1918 = vmatpush.msra.mxu0 0.0
        %1919 = vmatpush.msra.mxu0 0.0
        %1920 = vmatpush.msra.mxu0 0.0
        %1921 = vmatpush.msra.mxu0 0.0
        %1922 = vmatpush.msra.mxu0 0.0
        %1923 = vmatpush.msra.mxu0 0.0
        %1924 = vmatpush.msra.mxu0 0.0
        %1925 = vmatpush.msra.mxu0 0.0
        %1926 = vmatpush.msra.mxu0 0.0
        %1927 = vmatpush.msra.mxu0 0.0
        %1928 = vmatpush.msra.mxu0 %v1911
        %1929 = vmatmul.f32.gmra.mxu0 %v1815
        %v1930 = vpop.f32.mrf.mxu0
        %v1931 = vadd.f32 0.0, %v1930
        %1932 = vmatmul.f32.gmra.mxu0 %v1818
        %v1933 = vpop.f32.mrf.mxu0
        %v1934 = vadd.f32 0.0, %v1933
        %1935 = vmatmul.f32.gmra.mxu0 %v1821
        %v1936 = vpop.f32.mrf.mxu0
        %v1937 = vadd.f32 0.0, %v1936
        %1938 = vmatmul.f32.gmra.mxu0 %v1824
        %v1939 = vpop.f32.mrf.mxu0
        %v1940 = vadd.f32 0.0, %v1939
        %1941 = vmatmul.f32.gmra.mxu0 %v1827
        %v1942 = vpop.f32.mrf.mxu0
        %v1943 = vadd.f32 0.0, %v1942
        %1944 = vmatmul.f32.gmra.mxu0 %v1830
        %v1945 = vpop.f32.mrf.mxu0
        %v1946 = vadd.f32 0.0, %v1945
        %1947 = vmatmul.f32.gmra.mxu0 %v1833
        %v1948 = vpop.f32.mrf.mxu0
        %v1949 = vadd.f32 0.0, %v1948
        %1950 = vmatmul.f32.gmra.mxu0 %v1836
        %v1951 = vpop.f32.mrf.mxu0
        %v1952 = vadd.f32 0.0, %v1951
        %1953 = vmatmul.f32.gmra.mxu0 %v1839
        %v1954 = vpop.f32.mrf.mxu0
        %v1955 = vadd.f32 0.0, %v1954
        %1956 = vmatmul.f32.gmra.mxu0 %v1842
        %v1957 = vpop.f32.mrf.mxu0
        %v1958 = vadd.f32 0.0, %v1957
        %1959 = vmatmul.f32.gmra.mxu0 %v1845
        %v1960 = vpop.f32.mrf.mxu0
        %v1961 = vadd.f32 0.0, %v1960
        %1962 = vmatmul.f32.gmra.mxu0 %v1848
        %v1963 = vpop.f32.mrf.mxu0
        %v1964 = vadd.f32 0.0, %v1963
        %1965 = vmatmul.f32.gmra.mxu0 %v1851
        %v1966 = vpop.f32.mrf.mxu0
        %v1967 = vadd.f32 0.0, %v1966
        %1968 = vmatmul.f32.gmra.mxu0 %v1854
        %v1969 = vpop.f32.mrf.mxu0
        %v1970 = vadd.f32 0.0, %v1969
        %1971 = vmatmul.f32.gmra.mxu0 %v1857
        %v1972 = vpop.f32.mrf.mxu0
        %v1973 = vadd.f32 0.0, %v1972
        %1974 = vmatmul.f32.gmra.mxu0 %v1860
        %v1975 = vpop.f32.mrf.mxu0
        %v1976 = vadd.f32 0.0, %v1975
        %1977 = vmatmul.f32.gmra.mxu0 %v1863
        %v1978 = vpop.f32.mrf.mxu0
        %v1979 = vadd.f32 0.0, %v1978
        %1980 = vmatmul.f32.gmra.mxu0 %v1866
        %v1981 = vpop.f32.mrf.mxu0
        %v1982 = vadd.f32 0.0, %v1981
        %1983 = vmatmul.f32.gmra.mxu0 %v1869
        %v1984 = vpop.f32.mrf.mxu0
        %v1985 = vadd.f32 0.0, %v1984
        %1986 = vmatmul.f32.gmra.mxu0 %v1872
        %v1987 = vpop.f32.mrf.mxu0
        %v1988 = vadd.f32 0.0, %v1987
        %1989 = vmatmul.f32.gmra.mxu0 %v1875
        %v1990 = vpop.f32.mrf.mxu0
        %v1991 = vadd.f32 0.0, %v1990
        %1992 = vmatmul.f32.gmra.mxu0 %v1878
        %v1993 = vpop.f32.mrf.mxu0
        %v1994 = vadd.f32 0.0, %v1993
        %1995 = vmatmul.f32.gmra.mxu0 %v1881
        %v1996 = vpop.f32.mrf.mxu0
        %v1997 = vadd.f32 0.0, %v1996
        %1998 = vmatmul.f32.gmra.mxu0 %v1884
        %v1999 = vpop.f32.mrf.mxu0
        %v2000 = vadd.f32 0.0, %v1999
        %2001 = vmatmul.f32.gmra.mxu0 %v1887
        %v2002 = vpop.f32.mrf.mxu0
        %v2003 = vadd.f32 0.0, %v2002
        %2004 = vmatmul.f32.gmra.mxu0 %v1890
        %v2005 = vpop.f32.mrf.mxu0
        %v2006 = vadd.f32 0.0, %v2005
        %2007 = vmatmul.f32.gmra.mxu0 %v1893
        %v2008 = vpop.f32.mrf.mxu0
        %v2009 = vadd.f32 0.0, %v2008
        %2010 = vmatmul.f32.gmra.mxu0 %v1896
        %v2011 = vpop.f32.mrf.mxu0
        %v2012 = vadd.f32 0.0, %v2011
        %2013 = vmatmul.f32.gmra.mxu0 %v1899
        %v2014 = vpop.f32.mrf.mxu0
        %v2015 = vadd.f32 0.0, %v2014
        %2016 = vmatmul.f32.gmra.mxu0 %v1902
        %v2017 = vpop.f32.mrf.mxu0
        %v2018 = vadd.f32 0.0, %v2017
        %2019 = vmatmul.f32.gmra.mxu0 %v1905
        %v2020 = vpop.f32.mrf.mxu0
        %v2021 = vadd.f32 0.0, %v2020
        %2022 = vmatmul.f32.gmra.mxu0 %v1908
        %v2023 = vpop.f32.mrf.mxu0
        %v2024 = vadd.f32 0.0, %v2023
        %2025 = vdwg.mxu0
        %v2026 = vadd.f32 %v1748, %v1931
        %v2027 = vadd.f32 %v1749, %v1934
        %v2028 = vadd.f32 %v1750, %v1937
        %v2029 = vadd.f32 %v1751, %v1940
        %v2030 = vadd.f32 %v1752, %v1943
        %v2031 = vadd.f32 %v1753, %v1946
        %v2032 = vadd.f32 %v1754, %v1949
        %v2033 = vadd.f32 %v1755, %v1952
        %v2034 = vadd.f32 %v1756, %v1955
        %v2035 = vadd.f32 %v1757, %v1958
        %v2036 = vadd.f32 %v1758, %v1961
        %v2037 = vadd.f32 %v1759, %v1964
        %v2038 = vadd.f32 %v1760, %v1967
        %v2039 = vadd.f32 %v1761, %v1970
        %v2040 = vadd.f32 %v1762, %v1973
        %v2041 = vadd.f32 %v1763, %v1976
        %v2042 = vadd.f32 %v1764, %v1979
        %v2043 = vadd.f32 %v1765, %v1982
        %v2044 = vadd.f32 %v1766, %v1985
        %v2045 = vadd.f32 %v1767, %v1988
        %v2046 = vadd.f32 %v1768, %v1991
        %v2047 = vadd.f32 %v1769, %v1994
        %v2048 = vadd.f32 %v1770, %v1997
        %v2049 = vadd.f32 %v1771, %v2000
        %v2050 = vadd.f32 %v1772, %v2003
        %v2051 = vadd.f32 %v1773, %v2006
        %v2052 = vadd.f32 %v1774, %v2009
        %v2053 = vadd.f32 %v1775, %v2012
        %v2054 = vadd.f32 %v1776, %v2015
        %v2055 = vadd.f32 %v1777, %v2018
        %v2056 = vadd.f32 %v1778, %v2021
        %v2057 = vadd.f32 %v1779, %v2024
        %s2058 = scalar_lea.vmem [#allocation2], 48
        %v2059 = vld [vmem:[%s2058] sm:$0xff]
        %v2060 = vld [vmem:[%s2058 + $0x8] sm:$0xff]
        %v2061 = vld [vmem:[%s2058 + $0x18] sm:$0xff]
        %v2062 = vld [vmem:[%s2058 + $0x20] sm:$0xff]
        %v2063 = vld [vmem:[%s2058 + $0x30] sm:$0xff]
        %v2064 = vld [vmem:[%s2058 + $0x38] sm:$0xff]
        %v2065 = vld [vmem:[%s2058 + $0x48] sm:$0xff]
        %v2066 = vld [vmem:[%s2058 + $0x50] sm:$0xff]
        %v2067 = vld [vmem:[%s2058 + $0x60] sm:$0xff]
        %v2068 = vld [vmem:[%s2058 + $0x68] sm:$0xff]
        %v2069 = vld [vmem:[%s2058 + $0x78] sm:$0xff]
        %v2070 = vld [vmem:[%s2058 + $0x80] sm:$0xff]
        %v2071 = vld [vmem:[%s2058 + $0x90] sm:$0xff]
        %v2072 = vld [vmem:[%s2058 + $0x98] sm:$0xff]
        %v2073 = vld [vmem:[%s2058 + $0xa8] sm:$0xff]
        %v2074 = vld [vmem:[%s2058 + $0xb0] sm:$0xff]
        %v2075 = vld [vmem:[%s2058 + $0xc0] sm:$0xff]
        %v2076 = vld [vmem:[%s2058 + $0xc8] sm:$0xff]
        %v2077 = vld [vmem:[%s2058 + $0xd8] sm:$0xff]
        %v2078 = vld [vmem:[%s2058 + $0xe0] sm:$0xff]
        %v2079 = vld [vmem:[%s2058 + $0xf0] sm:$0xff]
        %v2080 = vld [vmem:[%s2058 + $0xf8] sm:$0xff]
        %v2081 = vld [vmem:[%s2058 + $0x108] sm:$0xff]
        %v2082 = vld [vmem:[%s2058 + $0x110] sm:$0xff]
        %v2083 = vld [vmem:[%s2058 + $0x120] sm:$0xff]
        %v2084 = vld [vmem:[%s2058 + $0x128] sm:$0xff]
        %v2085 = vld [vmem:[%s2058 + $0x138] sm:$0xff]
        %v2086 = vld [vmem:[%s2058 + $0x140] sm:$0xff]
        %v2087 = vld [vmem:[%s2058 + $0x150] sm:$0xff]
        %v2088 = vld [vmem:[%s2058 + $0x158] sm:$0xff]
        %v2089 = vld [vmem:[%s2058 + $0x168] sm:$0xff]
        %v2090 = vld [vmem:[%s2058 + $0x170] sm:$0xff]
        %s2091 = scalar_lea.vmem %s1, 24
        %v2092 = vld [vmem:[%s2091] sm:$0xf]
        %v2094 = vsel %vm277, %v2059, 0
        %v2097 = vsel %vm277, %v2060, 0
        %v2100 = vsel %vm277, %v2061, 0
        %v2103 = vsel %vm277, %v2062, 0
        %v2106 = vsel %vm277, %v2063, 0
        %v2109 = vsel %vm277, %v2064, 0
        %v2112 = vsel %vm277, %v2065, 0
        %v2115 = vsel %vm277, %v2066, 0
        %v2118 = vsel %vm277, %v2067, 0
        %v2121 = vsel %vm277, %v2068, 0
        %v2124 = vsel %vm277, %v2069, 0
        %v2127 = vsel %vm277, %v2070, 0
        %v2130 = vsel %vm277, %v2071, 0
        %v2133 = vsel %vm277, %v2072, 0
        %v2136 = vsel %vm277, %v2073, 0
        %v2139 = vsel %vm277, %v2074, 0
        %v2142 = vsel %vm277, %v2075, 0
        %v2145 = vsel %vm277, %v2076, 0
        %v2148 = vsel %vm277, %v2077, 0
        %v2151 = vsel %vm277, %v2078, 0
        %v2154 = vsel %vm277, %v2079, 0
        %v2157 = vsel %vm277, %v2080, 0
        %v2160 = vsel %vm277, %v2081, 0
        %v2163 = vsel %vm277, %v2082, 0
        %v2166 = vsel %vm277, %v2083, 0
        %v2169 = vsel %vm277, %v2084, 0
        %v2172 = vsel %vm277, %v2085, 0
        %v2175 = vsel %vm277, %v2086, 0
        %v2178 = vsel %vm277, %v2087, 0
        %v2181 = vsel %vm277, %v2088, 0
        %v2184 = vsel %vm277, %v2089, 0
        %v2187 = vsel %vm277, %v2090, 0
        %v2190 = vsel %vm617, %v2092, 0
        %2192 = vmatpush.msra.mxu0 0.0
        %2193 = vmatpush.msra.mxu0 0.0
        %2194 = vmatpush.msra.mxu0 0.0
        %2195 = vmatpush.msra.mxu0 0.0
        %2196 = vmatpush.msra.mxu0 0.0
        %2197 = vmatpush.msra.mxu0 0.0
        %2198 = vmatpush.msra.mxu0 0.0
        %2199 = vmatpush.msra.mxu0 0.0
        %2200 = vmatpush.msra.mxu0 0.0
        %2201 = vmatpush.msra.mxu0 0.0
        %2202 = vmatpush.msra.mxu0 0.0
        %2203 = vmatpush.msra.mxu0 0.0
        %2204 = vmatpush.msra.mxu0 0.0
        %2205 = vmatpush.msra.mxu0 0.0
        %2206 = vmatpush.msra.mxu0 0.0
        %2207 = vmatpush.msra.mxu0 %v2190
        %2208 = vmatmul.f32.gmra.mxu0 %v2094
        %v2209 = vpop.f32.mrf.mxu0
        %v2210 = vadd.f32 0.0, %v2209
        %2211 = vmatmul.f32.gmra.mxu0 %v2097
        %v2212 = vpop.f32.mrf.mxu0
        %v2213 = vadd.f32 0.0, %v2212
        %2214 = vmatmul.f32.gmra.mxu0 %v2100
        %v2215 = vpop.f32.mrf.mxu0
        %v2216 = vadd.f32 0.0, %v2215
        %2217 = vmatmul.f32.gmra.mxu0 %v2103
        %v2218 = vpop.f32.mrf.mxu0
        %v2219 = vadd.f32 0.0, %v2218
        %2220 = vmatmul.f32.gmra.mxu0 %v2106
        %v2221 = vpop.f32.mrf.mxu0
        %v2222 = vadd.f32 0.0, %v2221
        %2223 = vmatmul.f32.gmra.mxu0 %v2109
        %v2224 = vpop.f32.mrf.mxu0
        %v2225 = vadd.f32 0.0, %v2224
        %2226 = vmatmul.f32.gmra.mxu0 %v2112
        %v2227 = vpop.f32.mrf.mxu0
        %v2228 = vadd.f32 0.0, %v2227
        %2229 = vmatmul.f32.gmra.mxu0 %v2115
        %v2230 = vpop.f32.mrf.mxu0
        %v2231 = vadd.f32 0.0, %v2230
        %2232 = vmatmul.f32.gmra.mxu0 %v2118
        %v2233 = vpop.f32.mrf.mxu0
        %v2234 = vadd.f32 0.0, %v2233
        %2235 = vmatmul.f32.gmra.mxu0 %v2121
        %v2236 = vpop.f32.mrf.mxu0
        %v2237 = vadd.f32 0.0, %v2236
        %2238 = vmatmul.f32.gmra.mxu0 %v2124
        %v2239 = vpop.f32.mrf.mxu0
        %v2240 = vadd.f32 0.0, %v2239
        %2241 = vmatmul.f32.gmra.mxu0 %v2127
        %v2242 = vpop.f32.mrf.mxu0
        %v2243 = vadd.f32 0.0, %v2242
        %2244 = vmatmul.f32.gmra.mxu0 %v2130
        %v2245 = vpop.f32.mrf.mxu0
        %v2246 = vadd.f32 0.0, %v2245
        %2247 = vmatmul.f32.gmra.mxu0 %v2133
        %v2248 = vpop.f32.mrf.mxu0
        %v2249 = vadd.f32 0.0, %v2248
        %2250 = vmatmul.f32.gmra.mxu0 %v2136
        %v2251 = vpop.f32.mrf.mxu0
        %v2252 = vadd.f32 0.0, %v2251
        %2253 = vmatmul.f32.gmra.mxu0 %v2139
        %v2254 = vpop.f32.mrf.mxu0
        %v2255 = vadd.f32 0.0, %v2254
        %2256 = vmatmul.f32.gmra.mxu0 %v2142
        %v2257 = vpop.f32.mrf.mxu0
        %v2258 = vadd.f32 0.0, %v2257
        %2259 = vmatmul.f32.gmra.mxu0 %v2145
        %v2260 = vpop.f32.mrf.mxu0
        %v2261 = vadd.f32 0.0, %v2260
        %2262 = vmatmul.f32.gmra.mxu0 %v2148
        %v2263 = vpop.f32.mrf.mxu0
        %v2264 = vadd.f32 0.0, %v2263
        %2265 = vmatmul.f32.gmra.mxu0 %v2151
        %v2266 = vpop.f32.mrf.mxu0
        %v2267 = vadd.f32 0.0, %v2266
        %2268 = vmatmul.f32.gmra.mxu0 %v2154
        %v2269 = vpop.f32.mrf.mxu0
        %v2270 = vadd.f32 0.0, %v2269
        %2271 = vmatmul.f32.gmra.mxu0 %v2157
        %v2272 = vpop.f32.mrf.mxu0
        %v2273 = vadd.f32 0.0, %v2272
        %2274 = vmatmul.f32.gmra.mxu0 %v2160
        %v2275 = vpop.f32.mrf.mxu0
        %v2276 = vadd.f32 0.0, %v2275
        %2277 = vmatmul.f32.gmra.mxu0 %v2163
        %v2278 = vpop.f32.mrf.mxu0
        %v2279 = vadd.f32 0.0, %v2278
        %2280 = vmatmul.f32.gmra.mxu0 %v2166
        %v2281 = vpop.f32.mrf.mxu0
        %v2282 = vadd.f32 0.0, %v2281
        %2283 = vmatmul.f32.gmra.mxu0 %v2169
        %v2284 = vpop.f32.mrf.mxu0
        %v2285 = vadd.f32 0.0, %v2284
        %2286 = vmatmul.f32.gmra.mxu0 %v2172
        %v2287 = vpop.f32.mrf.mxu0
        %v2288 = vadd.f32 0.0, %v2287
        %2289 = vmatmul.f32.gmra.mxu0 %v2175
        %v2290 = vpop.f32.mrf.mxu0
        %v2291 = vadd.f32 0.0, %v2290
        %2292 = vmatmul.f32.gmra.mxu0 %v2178
        %v2293 = vpop.f32.mrf.mxu0
        %v2294 = vadd.f32 0.0, %v2293
        %2295 = vmatmul.f32.gmra.mxu0 %v2181
        %v2296 = vpop.f32.mrf.mxu0
        %v2297 = vadd.f32 0.0, %v2296
        %2298 = vmatmul.f32.gmra.mxu0 %v2184
        %v2299 = vpop.f32.mrf.mxu0
        %v2300 = vadd.f32 0.0, %v2299
        %2301 = vmatmul.f32.gmra.mxu0 %v2187
        %v2302 = vpop.f32.mrf.mxu0
        %v2303 = vadd.f32 0.0, %v2302
        %2304 = vdwg.mxu0
        %v2305 = vadd.f32 %v2026, %v2210
        %v2306 = vadd.f32 %v2027, %v2213
        %v2307 = vadd.f32 %v2028, %v2216
        %v2308 = vadd.f32 %v2029, %v2219
        %v2309 = vadd.f32 %v2030, %v2222
        %v2310 = vadd.f32 %v2031, %v2225
        %v2311 = vadd.f32 %v2032, %v2228
        %v2312 = vadd.f32 %v2033, %v2231
        %v2313 = vadd.f32 %v2034, %v2234
        %v2314 = vadd.f32 %v2035, %v2237
        %v2315 = vadd.f32 %v2036, %v2240
        %v2316 = vadd.f32 %v2037, %v2243
        %v2317 = vadd.f32 %v2038, %v2246
        %v2318 = vadd.f32 %v2039, %v2249
        %v2319 = vadd.f32 %v2040, %v2252
        %v2320 = vadd.f32 %v2041, %v2255
        %v2321 = vadd.f32 %v2042, %v2258
        %v2322 = vadd.f32 %v2043, %v2261
        %v2323 = vadd.f32 %v2044, %v2264
        %v2324 = vadd.f32 %v2045, %v2267
        %v2325 = vadd.f32 %v2046, %v2270
        %v2326 = vadd.f32 %v2047, %v2273
        %v2327 = vadd.f32 %v2048, %v2276
        %v2328 = vadd.f32 %v2049, %v2279
        %v2329 = vadd.f32 %v2050, %v2282
        %v2330 = vadd.f32 %v2051, %v2285
        %v2331 = vadd.f32 %v2052, %v2288
        %v2332 = vadd.f32 %v2053, %v2291
        %v2333 = vadd.f32 %v2054, %v2294
        %v2334 = vadd.f32 %v2055, %v2297
        %v2335 = vadd.f32 %v2056, %v2300
        %v2336 = vadd.f32 %v2057, %v2303
        %v2337 = vld [vmem:[%s2058 + $0x1] sm:$0xff]
        %v2338 = vld [vmem:[%s2058 + $0x9] sm:$0xff]
        %v2339 = vld [vmem:[%s2058 + $0x19] sm:$0xff]
        %v2340 = vld [vmem:[%s2058 + $0x21] sm:$0xff]
        %v2341 = vld [vmem:[%s2058 + $0x31] sm:$0xff]
        %v2342 = vld [vmem:[%s2058 + $0x39] sm:$0xff]
        %v2343 = vld [vmem:[%s2058 + $0x49] sm:$0xff]
        %v2344 = vld [vmem:[%s2058 + $0x51] sm:$0xff]
        %v2345 = vld [vmem:[%s2058 + $0x61] sm:$0xff]
        %v2346 = vld [vmem:[%s2058 + $0x69] sm:$0xff]
        %v2347 = vld [vmem:[%s2058 + $0x79] sm:$0xff]
        %v2348 = vld [vmem:[%s2058 + $0x81] sm:$0xff]
        %v2349 = vld [vmem:[%s2058 + $0x91] sm:$0xff]
        %v2350 = vld [vmem:[%s2058 + $0x99] sm:$0xff]
        %v2351 = vld [vmem:[%s2058 + $0xa9] sm:$0xff]
        %v2352 = vld [vmem:[%s2058 + $0xb1] sm:$0xff]
        %v2353 = vld [vmem:[%s2058 + $0xc1] sm:$0xff]
        %v2354 = vld [vmem:[%s2058 + $0xc9] sm:$0xff]
        %v2355 = vld [vmem:[%s2058 + $0xd9] sm:$0xff]
        %v2356 = vld [vmem:[%s2058 + $0xe1] sm:$0xff]
        %v2357 = vld [vmem:[%s2058 + $0xf1] sm:$0xff]
        %v2358 = vld [vmem:[%s2058 + $0xf9] sm:$0xff]
        %v2359 = vld [vmem:[%s2058 + $0x109] sm:$0xff]
        %v2360 = vld [vmem:[%s2058 + $0x111] sm:$0xff]
        %v2361 = vld [vmem:[%s2058 + $0x121] sm:$0xff]
        %v2362 = vld [vmem:[%s2058 + $0x129] sm:$0xff]
        %v2363 = vld [vmem:[%s2058 + $0x139] sm:$0xff]
        %v2364 = vld [vmem:[%s2058 + $0x141] sm:$0xff]
        %v2365 = vld [vmem:[%s2058 + $0x151] sm:$0xff]
        %v2366 = vld [vmem:[%s2058 + $0x159] sm:$0xff]
        %v2367 = vld [vmem:[%s2058 + $0x169] sm:$0xff]
        %v2368 = vld [vmem:[%s2058 + $0x171] sm:$0xff]
        %s2369 = scalar_lea.vmem %s1, 28
        %v2370 = vld [vmem:[%s2369] sm:$0xf]
        %v2372 = vsel %vm277, %v2337, 0
        %v2375 = vsel %vm277, %v2338, 0
        %v2378 = vsel %vm277, %v2339, 0
        %v2381 = vsel %vm277, %v2340, 0
        %v2384 = vsel %vm277, %v2341, 0
        %v2387 = vsel %vm277, %v2342, 0
        %v2390 = vsel %vm277, %v2343, 0
        %v2393 = vsel %vm277, %v2344, 0
        %v2396 = vsel %vm277, %v2345, 0
        %v2399 = vsel %vm277, %v2346, 0
        %v2402 = vsel %vm277, %v2347, 0
        %v2405 = vsel %vm277, %v2348, 0
        %v2408 = vsel %vm277, %v2349, 0
        %v2411 = vsel %vm277, %v2350, 0
        %v2414 = vsel %vm277, %v2351, 0
        %v2417 = vsel %vm277, %v2352, 0
        %v2420 = vsel %vm277, %v2353, 0
        %v2423 = vsel %vm277, %v2354, 0
        %v2426 = vsel %vm277, %v2355, 0
        %v2429 = vsel %vm277, %v2356, 0
        %v2432 = vsel %vm277, %v2357, 0
        %v2435 = vsel %vm277, %v2358, 0
        %v2438 = vsel %vm277, %v2359, 0
        %v2441 = vsel %vm277, %v2360, 0
        %v2444 = vsel %vm277, %v2361, 0
        %v2447 = vsel %vm277, %v2362, 0
        %v2450 = vsel %vm277, %v2363, 0
        %v2453 = vsel %vm277, %v2364, 0
        %v2456 = vsel %vm277, %v2365, 0
        %v2459 = vsel %vm277, %v2366, 0
        %v2462 = vsel %vm277, %v2367, 0
        %v2465 = vsel %vm277, %v2368, 0
        %v2468 = vsel %vm617, %v2370, 0
        %2470 = vmatpush.msra.mxu0 0.0
        %2471 = vmatpush.msra.mxu0 0.0
        %2472 = vmatpush.msra.mxu0 0.0
        %2473 = vmatpush.msra.mxu0 0.0
        %2474 = vmatpush.msra.mxu0 0.0
        %2475 = vmatpush.msra.mxu0 0.0
        %2476 = vmatpush.msra.mxu0 0.0
        %2477 = vmatpush.msra.mxu0 0.0
        %2478 = vmatpush.msra.mxu0 0.0
        %2479 = vmatpush.msra.mxu0 0.0
        %2480 = vmatpush.msra.mxu0 0.0
        %2481 = vmatpush.msra.mxu0 0.0
        %2482 = vmatpush.msra.mxu0 0.0
        %2483 = vmatpush.msra.mxu0 0.0
        %2484 = vmatpush.msra.mxu0 0.0
        %2485 = vmatpush.msra.mxu0 %v2468
        %2486 = vmatmul.f32.gmra.mxu0 %v2372
        %v2487 = vpop.f32.mrf.mxu0
        %v2488 = vadd.f32 0.0, %v2487
        %2489 = vmatmul.f32.gmra.mxu0 %v2375
        %v2490 = vpop.f32.mrf.mxu0
        %v2491 = vadd.f32 0.0, %v2490
        %2492 = vmatmul.f32.gmra.mxu0 %v2378
        %v2493 = vpop.f32.mrf.mxu0
        %v2494 = vadd.f32 0.0, %v2493
        %2495 = vmatmul.f32.gmra.mxu0 %v2381
        %v2496 = vpop.f32.mrf.mxu0
        %v2497 = vadd.f32 0.0, %v2496
        %2498 = vmatmul.f32.gmra.mxu0 %v2384
        %v2499 = vpop.f32.mrf.mxu0
        %v2500 = vadd.f32 0.0, %v2499
        %2501 = vmatmul.f32.gmra.mxu0 %v2387
        %v2502 = vpop.f32.mrf.mxu0
        %v2503 = vadd.f32 0.0, %v2502
        %2504 = vmatmul.f32.gmra.mxu0 %v2390
        %v2505 = vpop.f32.mrf.mxu0
        %v2506 = vadd.f32 0.0, %v2505
        %2507 = vmatmul.f32.gmra.mxu0 %v2393
        %v2508 = vpop.f32.mrf.mxu0
        %v2509 = vadd.f32 0.0, %v2508
        %2510 = vmatmul.f32.gmra.mxu0 %v2396
        %v2511 = vpop.f32.mrf.mxu0
        %v2512 = vadd.f32 0.0, %v2511
        %2513 = vmatmul.f32.gmra.mxu0 %v2399
        %v2514 = vpop.f32.mrf.mxu0
        %v2515 = vadd.f32 0.0, %v2514
        %2516 = vmatmul.f32.gmra.mxu0 %v2402
        %v2517 = vpop.f32.mrf.mxu0
        %v2518 = vadd.f32 0.0, %v2517
        %2519 = vmatmul.f32.gmra.mxu0 %v2405
        %v2520 = vpop.f32.mrf.mxu0
        %v2521 = vadd.f32 0.0, %v2520
        %2522 = vmatmul.f32.gmra.mxu0 %v2408
        %v2523 = vpop.f32.mrf.mxu0
        %v2524 = vadd.f32 0.0, %v2523
        %2525 = vmatmul.f32.gmra.mxu0 %v2411
        %v2526 = vpop.f32.mrf.mxu0
        %v2527 = vadd.f32 0.0, %v2526
        %2528 = vmatmul.f32.gmra.mxu0 %v2414
        %v2529 = vpop.f32.mrf.mxu0
        %v2530 = vadd.f32 0.0, %v2529
        %2531 = vmatmul.f32.gmra.mxu0 %v2417
        %v2532 = vpop.f32.mrf.mxu0
        %v2533 = vadd.f32 0.0, %v2532
        %2534 = vmatmul.f32.gmra.mxu0 %v2420
        %v2535 = vpop.f32.mrf.mxu0
        %v2536 = vadd.f32 0.0, %v2535
        %2537 = vmatmul.f32.gmra.mxu0 %v2423
        %v2538 = vpop.f32.mrf.mxu0
        %v2539 = vadd.f32 0.0, %v2538
        %2540 = vmatmul.f32.gmra.mxu0 %v2426
        %v2541 = vpop.f32.mrf.mxu0
        %v2542 = vadd.f32 0.0, %v2541
        %2543 = vmatmul.f32.gmra.mxu0 %v2429
        %v2544 = vpop.f32.mrf.mxu0
        %v2545 = vadd.f32 0.0, %v2544
        %2546 = vmatmul.f32.gmra.mxu0 %v2432
        %v2547 = vpop.f32.mrf.mxu0
        %v2548 = vadd.f32 0.0, %v2547
        %2549 = vmatmul.f32.gmra.mxu0 %v2435
        %v2550 = vpop.f32.mrf.mxu0
        %v2551 = vadd.f32 0.0, %v2550
        %2552 = vmatmul.f32.gmra.mxu0 %v2438
        %v2553 = vpop.f32.mrf.mxu0
        %v2554 = vadd.f32 0.0, %v2553
        %2555 = vmatmul.f32.gmra.mxu0 %v2441
        %v2556 = vpop.f32.mrf.mxu0
        %v2557 = vadd.f32 0.0, %v2556
        %2558 = vmatmul.f32.gmra.mxu0 %v2444
        %v2559 = vpop.f32.mrf.mxu0
        %v2560 = vadd.f32 0.0, %v2559
        %2561 = vmatmul.f32.gmra.mxu0 %v2447
        %v2562 = vpop.f32.mrf.mxu0
        %v2563 = vadd.f32 0.0, %v2562
        %2564 = vmatmul.f32.gmra.mxu0 %v2450
        %v2565 = vpop.f32.mrf.mxu0
        %v2566 = vadd.f32 0.0, %v2565
        %2567 = vmatmul.f32.gmra.mxu0 %v2453
        %v2568 = vpop.f32.mrf.mxu0
        %v2569 = vadd.f32 0.0, %v2568
        %2570 = vmatmul.f32.gmra.mxu0 %v2456
        %v2571 = vpop.f32.mrf.mxu0
        %v2572 = vadd.f32 0.0, %v2571
        %2573 = vmatmul.f32.gmra.mxu0 %v2459
        %v2574 = vpop.f32.mrf.mxu0
        %v2575 = vadd.f32 0.0, %v2574
        %2576 = vmatmul.f32.gmra.mxu0 %v2462
        %v2577 = vpop.f32.mrf.mxu0
        %v2578 = vadd.f32 0.0, %v2577
        %2579 = vmatmul.f32.gmra.mxu0 %v2465
        %v2580 = vpop.f32.mrf.mxu0
        %v2581 = vadd.f32 0.0, %v2580
        %2582 = vdwg.mxu0
        %v2583 = vadd.f32 %v2305, %v2488
        %v2584 = vadd.f32 %v2306, %v2491
        %v2585 = vadd.f32 %v2307, %v2494
        %v2586 = vadd.f32 %v2308, %v2497
        %v2587 = vadd.f32 %v2309, %v2500
        %v2588 = vadd.f32 %v2310, %v2503
        %v2589 = vadd.f32 %v2311, %v2506
        %v2590 = vadd.f32 %v2312, %v2509
        %v2591 = vadd.f32 %v2313, %v2512
        %v2592 = vadd.f32 %v2314, %v2515
        %v2593 = vadd.f32 %v2315, %v2518
        %v2594 = vadd.f32 %v2316, %v2521
        %v2595 = vadd.f32 %v2317, %v2524
        %v2596 = vadd.f32 %v2318, %v2527
        %v2597 = vadd.f32 %v2319, %v2530
        %v2598 = vadd.f32 %v2320, %v2533
        %v2599 = vadd.f32 %v2321, %v2536
        %v2600 = vadd.f32 %v2322, %v2539
        %v2601 = vadd.f32 %v2323, %v2542
        %v2602 = vadd.f32 %v2324, %v2545
        %v2603 = vadd.f32 %v2325, %v2548
        %v2604 = vadd.f32 %v2326, %v2551
        %v2605 = vadd.f32 %v2327, %v2554
        %v2606 = vadd.f32 %v2328, %v2557
        %v2607 = vadd.f32 %v2329, %v2560
        %v2608 = vadd.f32 %v2330, %v2563
        %v2609 = vadd.f32 %v2331, %v2566
        %v2610 = vadd.f32 %v2332, %v2569
        %v2611 = vadd.f32 %v2333, %v2572
        %v2612 = vadd.f32 %v2334, %v2575
        %v2613 = vadd.f32 %v2335, %v2578
        %v2614 = vadd.f32 %v2336, %v2581
        %v2615 = vld [vmem:[%s2058 + $0x2] sm:$0xff]
        %v2616 = vld [vmem:[%s2058 + $0xa] sm:$0xff]
        %v2617 = vld [vmem:[%s2058 + $0x1a] sm:$0xff]
        %v2618 = vld [vmem:[%s2058 + $0x22] sm:$0xff]
        %v2619 = vld [vmem:[%s2058 + $0x32] sm:$0xff]
        %v2620 = vld [vmem:[%s2058 + $0x3a] sm:$0xff]
        %v2621 = vld [vmem:[%s2058 + $0x4a] sm:$0xff]
        %v2622 = vld [vmem:[%s2058 + $0x52] sm:$0xff]
        %v2623 = vld [vmem:[%s2058 + $0x62] sm:$0xff]
        %v2624 = vld [vmem:[%s2058 + $0x6a] sm:$0xff]
        %v2625 = vld [vmem:[%s2058 + $0x7a] sm:$0xff]
        %v2626 = vld [vmem:[%s2058 + $0x82] sm:$0xff]
        %v2627 = vld [vmem:[%s2058 + $0x92] sm:$0xff]
        %v2628 = vld [vmem:[%s2058 + $0x9a] sm:$0xff]
        %v2629 = vld [vmem:[%s2058 + $0xaa] sm:$0xff]
        %v2630 = vld [vmem:[%s2058 + $0xb2] sm:$0xff]
        %v2631 = vld [vmem:[%s2058 + $0xc2] sm:$0xff]
        %v2632 = vld [vmem:[%s2058 + $0xca] sm:$0xff]
        %v2633 = vld [vmem:[%s2058 + $0xda] sm:$0xff]
        %v2634 = vld [vmem:[%s2058 + $0xe2] sm:$0xff]
        %v2635 = vld [vmem:[%s2058 + $0xf2] sm:$0xff]
        %v2636 = vld [vmem:[%s2058 + $0xfa] sm:$0xff]
        %v2637 = vld [vmem:[%s2058 + $0x10a] sm:$0xff]
        %v2638 = vld [vmem:[%s2058 + $0x112] sm:$0xff]
        %v2639 = vld [vmem:[%s2058 + $0x122] sm:$0xff]
        %v2640 = vld [vmem:[%s2058 + $0x12a] sm:$0xff]
        %v2641 = vld [vmem:[%s2058 + $0x13a] sm:$0xff]
        %v2642 = vld [vmem:[%s2058 + $0x142] sm:$0xff]
        %v2643 = vld [vmem:[%s2058 + $0x152] sm:$0xff]
        %v2644 = vld [vmem:[%s2058 + $0x15a] sm:$0xff]
        %v2645 = vld [vmem:[%s2058 + $0x16a] sm:$0xff]
        %v2646 = vld [vmem:[%s2058 + $0x172] sm:$0xff]
        %s2647 = scalar_lea.vmem %s1, 32
        %v2648 = vld [vmem:[%s2647] sm:$0xf]
        %v2650 = vsel %vm277, %v2615, 0
        %v2653 = vsel %vm277, %v2616, 0
        %v2656 = vsel %vm277, %v2617, 0
        %v2659 = vsel %vm277, %v2618, 0
        %v2662 = vsel %vm277, %v2619, 0
        %v2665 = vsel %vm277, %v2620, 0
        %v2668 = vsel %vm277, %v2621, 0
        %v2671 = vsel %vm277, %v2622, 0
        %v2674 = vsel %vm277, %v2623, 0
        %v2677 = vsel %vm277, %v2624, 0
        %v2680 = vsel %vm277, %v2625, 0
        %v2683 = vsel %vm277, %v2626, 0
        %v2686 = vsel %vm277, %v2627, 0
        %v2689 = vsel %vm277, %v2628, 0
        %v2692 = vsel %vm277, %v2629, 0
        %v2695 = vsel %vm277, %v2630, 0
        %v2698 = vsel %vm277, %v2631, 0
        %v2701 = vsel %vm277, %v2632, 0
        %v2704 = vsel %vm277, %v2633, 0
        %v2707 = vsel %vm277, %v2634, 0
        %v2710 = vsel %vm277, %v2635, 0
        %v2713 = vsel %vm277, %v2636, 0
        %v2716 = vsel %vm277, %v2637, 0
        %v2719 = vsel %vm277, %v2638, 0
        %v2722 = vsel %vm277, %v2639, 0
        %v2725 = vsel %vm277, %v2640, 0
        %v2728 = vsel %vm277, %v2641, 0
        %v2731 = vsel %vm277, %v2642, 0
        %v2734 = vsel %vm277, %v2643, 0
        %v2737 = vsel %vm277, %v2644, 0
        %v2740 = vsel %vm277, %v2645, 0
        %v2743 = vsel %vm277, %v2646, 0
        %v2746 = vsel %vm617, %v2648, 0
        %2748 = vmatpush.msra.mxu0 0.0
        %2749 = vmatpush.msra.mxu0 0.0
        %2750 = vmatpush.msra.mxu0 0.0
        %2751 = vmatpush.msra.mxu0 0.0
        %2752 = vmatpush.msra.mxu0 0.0
        %2753 = vmatpush.msra.mxu0 0.0
        %2754 = vmatpush.msra.mxu0 0.0
        %2755 = vmatpush.msra.mxu0 0.0
        %2756 = vmatpush.msra.mxu0 0.0
        %2757 = vmatpush.msra.mxu0 0.0
        %2758 = vmatpush.msra.mxu0 0.0
        %2759 = vmatpush.msra.mxu0 0.0
        %2760 = vmatpush.msra.mxu0 0.0
        %2761 = vmatpush.msra.mxu0 0.0
        %2762 = vmatpush.msra.mxu0 0.0
        %2763 = vmatpush.msra.mxu0 %v2746
        %2764 = vmatmul.f32.gmra.mxu0 %v2650
        %v2765 = vpop.f32.mrf.mxu0
        %v2766 = vadd.f32 0.0, %v2765
        %2767 = vmatmul.f32.gmra.mxu0 %v2653
        %v2768 = vpop.f32.mrf.mxu0
        %v2769 = vadd.f32 0.0, %v2768
        %2770 = vmatmul.f32.gmra.mxu0 %v2656
        %v2771 = vpop.f32.mrf.mxu0
        %v2772 = vadd.f32 0.0, %v2771
        %2773 = vmatmul.f32.gmra.mxu0 %v2659
        %v2774 = vpop.f32.mrf.mxu0
        %v2775 = vadd.f32 0.0, %v2774
        %2776 = vmatmul.f32.gmra.mxu0 %v2662
        %v2777 = vpop.f32.mrf.mxu0
        %v2778 = vadd.f32 0.0, %v2777
        %2779 = vmatmul.f32.gmra.mxu0 %v2665
        %v2780 = vpop.f32.mrf.mxu0
        %v2781 = vadd.f32 0.0, %v2780
        %2782 = vmatmul.f32.gmra.mxu0 %v2668
        %v2783 = vpop.f32.mrf.mxu0
        %v2784 = vadd.f32 0.0, %v2783
        %2785 = vmatmul.f32.gmra.mxu0 %v2671
        %v2786 = vpop.f32.mrf.mxu0
        %v2787 = vadd.f32 0.0, %v2786
        %2788 = vmatmul.f32.gmra.mxu0 %v2674
        %v2789 = vpop.f32.mrf.mxu0
        %v2790 = vadd.f32 0.0, %v2789
        %2791 = vmatmul.f32.gmra.mxu0 %v2677
        %v2792 = vpop.f32.mrf.mxu0
        %v2793 = vadd.f32 0.0, %v2792
        %2794 = vmatmul.f32.gmra.mxu0 %v2680
        %v2795 = vpop.f32.mrf.mxu0
        %v2796 = vadd.f32 0.0, %v2795
        %2797 = vmatmul.f32.gmra.mxu0 %v2683
        %v2798 = vpop.f32.mrf.mxu0
        %v2799 = vadd.f32 0.0, %v2798
        %2800 = vmatmul.f32.gmra.mxu0 %v2686
        %v2801 = vpop.f32.mrf.mxu0
        %v2802 = vadd.f32 0.0, %v2801
        %2803 = vmatmul.f32.gmra.mxu0 %v2689
        %v2804 = vpop.f32.mrf.mxu0
        %v2805 = vadd.f32 0.0, %v2804
        %2806 = vmatmul.f32.gmra.mxu0 %v2692
        %v2807 = vpop.f32.mrf.mxu0
        %v2808 = vadd.f32 0.0, %v2807
        %2809 = vmatmul.f32.gmra.mxu0 %v2695
        %v2810 = vpop.f32.mrf.mxu0
        %v2811 = vadd.f32 0.0, %v2810
        %2812 = vmatmul.f32.gmra.mxu0 %v2698
        %v2813 = vpop.f32.mrf.mxu0
        %v2814 = vadd.f32 0.0, %v2813
        %2815 = vmatmul.f32.gmra.mxu0 %v2701
        %v2816 = vpop.f32.mrf.mxu0
        %v2817 = vadd.f32 0.0, %v2816
        %2818 = vmatmul.f32.gmra.mxu0 %v2704
        %v2819 = vpop.f32.mrf.mxu0
        %v2820 = vadd.f32 0.0, %v2819
        %2821 = vmatmul.f32.gmra.mxu0 %v2707
        %v2822 = vpop.f32.mrf.mxu0
        %v2823 = vadd.f32 0.0, %v2822
        %2824 = vmatmul.f32.gmra.mxu0 %v2710
        %v2825 = vpop.f32.mrf.mxu0
        %v2826 = vadd.f32 0.0, %v2825
        %2827 = vmatmul.f32.gmra.mxu0 %v2713
        %v2828 = vpop.f32.mrf.mxu0
        %v2829 = vadd.f32 0.0, %v2828
        %2830 = vmatmul.f32.gmra.mxu0 %v2716
        %v2831 = vpop.f32.mrf.mxu0
        %v2832 = vadd.f32 0.0, %v2831
        %2833 = vmatmul.f32.gmra.mxu0 %v2719
        %v2834 = vpop.f32.mrf.mxu0
        %v2835 = vadd.f32 0.0, %v2834
        %2836 = vmatmul.f32.gmra.mxu0 %v2722
        %v2837 = vpop.f32.mrf.mxu0
        %v2838 = vadd.f32 0.0, %v2837
        %2839 = vmatmul.f32.gmra.mxu0 %v2725
        %v2840 = vpop.f32.mrf.mxu0
        %v2841 = vadd.f32 0.0, %v2840
        %2842 = vmatmul.f32.gmra.mxu0 %v2728
        %v2843 = vpop.f32.mrf.mxu0
        %v2844 = vadd.f32 0.0, %v2843
        %2845 = vmatmul.f32.gmra.mxu0 %v2731
        %v2846 = vpop.f32.mrf.mxu0
        %v2847 = vadd.f32 0.0, %v2846
        %2848 = vmatmul.f32.gmra.mxu0 %v2734
        %v2849 = vpop.f32.mrf.mxu0
        %v2850 = vadd.f32 0.0, %v2849
        %2851 = vmatmul.f32.gmra.mxu0 %v2737
        %v2852 = vpop.f32.mrf.mxu0
        %v2853 = vadd.f32 0.0, %v2852
        %2854 = vmatmul.f32.gmra.mxu0 %v2740
        %v2855 = vpop.f32.mrf.mxu0
        %v2856 = vadd.f32 0.0, %v2855
        %2857 = vmatmul.f32.gmra.mxu0 %v2743
        %v2858 = vpop.f32.mrf.mxu0
        %v2859 = vadd.f32 0.0, %v2858
        %2860 = vdwg.mxu0
        %v2861 = vadd.f32 %v2583, %v2766
        %v2862 = vadd.f32 %v2584, %v2769
        %v2863 = vadd.f32 %v2585, %v2772
        %v2864 = vadd.f32 %v2586, %v2775
        %v2865 = vadd.f32 %v2587, %v2778
        %v2866 = vadd.f32 %v2588, %v2781
        %v2867 = vadd.f32 %v2589, %v2784
        %v2868 = vadd.f32 %v2590, %v2787
        %v2869 = vadd.f32 %v2591, %v2790
        %v2870 = vadd.f32 %v2592, %v2793
        %v2871 = vadd.f32 %v2593, %v2796
        %v2872 = vadd.f32 %v2594, %v2799
        %v2873 = vadd.f32 %v2595, %v2802
        %v2874 = vadd.f32 %v2596, %v2805
        %v2875 = vadd.f32 %v2597, %v2808
        %v2876 = vadd.f32 %v2598, %v2811
        %v2877 = vadd.f32 %v2599, %v2814
        %v2878 = vadd.f32 %v2600, %v2817
        %v2879 = vadd.f32 %v2601, %v2820
        %v2880 = vadd.f32 %v2602, %v2823
        %v2881 = vadd.f32 %v2603, %v2826
        %v2882 = vadd.f32 %v2604, %v2829
        %v2883 = vadd.f32 %v2605, %v2832
        %v2884 = vadd.f32 %v2606, %v2835
        %v2885 = vadd.f32 %v2607, %v2838
        %v2886 = vadd.f32 %v2608, %v2841
        %v2887 = vadd.f32 %v2609, %v2844
        %v2888 = vadd.f32 %v2610, %v2847
        %v2889 = vadd.f32 %v2611, %v2850
        %v2890 = vadd.f32 %v2612, %v2853
        %v2891 = vadd.f32 %v2613, %v2856
        %v2892 = vadd.f32 %v2614, %v2859
        %v2893 = vld [vmem:[%s2] sm:$0x1]
        %v2895 = vperm.slane %v2893, 0
        %v2897 = vadd.f32 %v2861, %v2895
        %v2898 = vadd.f32 %v2862, %v2895
        %v2899 = vadd.f32 %v2863, %v2895
        %v2900 = vadd.f32 %v2864, %v2895
        %v2901 = vadd.f32 %v2865, %v2895
        %v2902 = vadd.f32 %v2866, %v2895
        %v2903 = vadd.f32 %v2867, %v2895
        %v2904 = vadd.f32 %v2868, %v2895
        %v2905 = vadd.f32 %v2869, %v2895
        %v2906 = vadd.f32 %v2870, %v2895
        %v2907 = vadd.f32 %v2871, %v2895
        %v2908 = vadd.f32 %v2872, %v2895
        %v2909 = vadd.f32 %v2873, %v2895
        %v2910 = vadd.f32 %v2874, %v2895
        %v2911 = vadd.f32 %v2875, %v2895
        %v2912 = vadd.f32 %v2876, %v2895
        %v2913 = vadd.f32 %v2877, %v2895
        %v2914 = vadd.f32 %v2878, %v2895
        %v2915 = vadd.f32 %v2879, %v2895
        %v2916 = vadd.f32 %v2880, %v2895
        %v2917 = vadd.f32 %v2881, %v2895
        %v2918 = vadd.f32 %v2882, %v2895
        %v2919 = vadd.f32 %v2883, %v2895
        %v2920 = vadd.f32 %v2884, %v2895
        %v2921 = vadd.f32 %v2885, %v2895
        %v2922 = vadd.f32 %v2886, %v2895
        %v2923 = vadd.f32 %v2887, %v2895
        %v2924 = vadd.f32 %v2888, %v2895
        %v2925 = vadd.f32 %v2889, %v2895
        %v2926 = vadd.f32 %v2890, %v2895
        %v2927 = vadd.f32 %v2891, %v2895
        %v2928 = vadd.f32 %v2892, %v2895
        %v2929 = vmax.f32 %v2897, 0.0
        %v2930 = vmax.f32 %v2898, 0.0
        %v2931 = vmax.f32 %v2899, 0.0
        %v2932 = vmax.f32 %v2900, 0.0
        %v2933 = vmax.f32 %v2901, 0.0
        %v2934 = vmax.f32 %v2902, 0.0
        %v2935 = vmax.f32 %v2903, 0.0
        %v2936 = vmax.f32 %v2904, 0.0
        %v2937 = vmax.f32 %v2905, 0.0
        %v2938 = vmax.f32 %v2906, 0.0
        %v2939 = vmax.f32 %v2907, 0.0
        %v2940 = vmax.f32 %v2908, 0.0
        %v2941 = vmax.f32 %v2909, 0.0
        %v2942 = vmax.f32 %v2910, 0.0
        %v2943 = vmax.f32 %v2911, 0.0
        %v2944 = vmax.f32 %v2912, 0.0
        %v2945 = vmax.f32 %v2913, 0.0
        %v2946 = vmax.f32 %v2914, 0.0
        %v2947 = vmax.f32 %v2915, 0.0
        %v2948 = vmax.f32 %v2916, 0.0
        %v2949 = vmax.f32 %v2917, 0.0
        %v2950 = vmax.f32 %v2918, 0.0
        %v2951 = vmax.f32 %v2919, 0.0
        %v2952 = vmax.f32 %v2920, 0.0
        %v2953 = vmax.f32 %v2921, 0.0
        %v2954 = vmax.f32 %v2922, 0.0
        %v2955 = vmax.f32 %v2923, 0.0
        %v2956 = vmax.f32 %v2924, 0.0
        %v2957 = vmax.f32 %v2925, 0.0
        %v2958 = vmax.f32 %v2926, 0.0
        %v2959 = vmax.f32 %v2927, 0.0
        %v2960 = vmax.f32 %v2928, 0.0
        %s2961 = scalar_lea.vmem [#allocation3], 24
        %2962 = vst.msk [vmem:[%s2961 + $0x1] sm:$0xff] %vm333, %v2929
        %2963 = vst.msk [vmem:[%s2961 + $0x9] sm:$0xff] %vm333, %v2930
        %2964 = vst.msk [vmem:[%s2961 + $0x19] sm:$0xff] %vm333, %v2931
        %2965 = vst.msk [vmem:[%s2961 + $0x21] sm:$0xff] %vm333, %v2932
        %2966 = vst.msk [vmem:[%s2961 + $0x31] sm:$0xff] %vm333, %v2933
        %2967 = vst.msk [vmem:[%s2961 + $0x39] sm:$0xff] %vm333, %v2934
        %2968 = vst.msk [vmem:[%s2961 + $0x49] sm:$0xff] %vm333, %v2935
        %2969 = vst.msk [vmem:[%s2961 + $0x51] sm:$0xff] %vm333, %v2936
        %2970 = vst.msk [vmem:[%s2961 + $0x61] sm:$0xff] %vm333, %v2937
        %2971 = vst.msk [vmem:[%s2961 + $0x69] sm:$0xff] %vm333, %v2938
        %2972 = vst.msk [vmem:[%s2961 + $0x79] sm:$0xff] %vm333, %v2939
        %2973 = vst.msk [vmem:[%s2961 + $0x81] sm:$0xff] %vm333, %v2940
        %2974 = vst.msk [vmem:[%s2961 + $0x91] sm:$0xff] %vm333, %v2941
        %2975 = vst.msk [vmem:[%s2961 + $0x99] sm:$0xff] %vm333, %v2942
        %2976 = vst.msk [vmem:[%s2961 + $0xa9] sm:$0xff] %vm333, %v2943
        %2977 = vst.msk [vmem:[%s2961 + $0xb1] sm:$0xff] %vm333, %v2944
        %2978 = vst.msk [vmem:[%s2961 + $0xc1] sm:$0xff] %vm333, %v2945
        %2979 = vst.msk [vmem:[%s2961 + $0xc9] sm:$0xff] %vm333, %v2946
        %2980 = vst.msk [vmem:[%s2961 + $0xd9] sm:$0xff] %vm333, %v2947
        %2981 = vst.msk [vmem:[%s2961 + $0xe1] sm:$0xff] %vm333, %v2948
        %2982 = vst.msk [vmem:[%s2961 + $0xf1] sm:$0xff] %vm333, %v2949
        %2983 = vst.msk [vmem:[%s2961 + $0xf9] sm:$0xff] %vm333, %v2950
        %2984 = vst.msk [vmem:[%s2961 + $0x109] sm:$0xff] %vm333, %v2951
        %2985 = vst.msk [vmem:[%s2961 + $0x111] sm:$0xff] %vm333, %v2952
        %2986 = vst.msk [vmem:[%s2961 + $0x121] sm:$0xff] %vm333, %v2953
        %2987 = vst.msk [vmem:[%s2961 + $0x129] sm:$0xff] %vm333, %v2954
        %2988 = vst.msk [vmem:[%s2961 + $0x139] sm:$0xff] %vm333, %v2955
        %2989 = vst.msk [vmem:[%s2961 + $0x141] sm:$0xff] %vm333, %v2956
        %2990 = vst.msk [vmem:[%s2961 + $0x151] sm:$0xff] %vm333, %v2957
        %2991 = vst.msk [vmem:[%s2961 + $0x159] sm:$0xff] %vm333, %v2958
        %2992 = vst.msk [vmem:[%s2961 + $0x169] sm:$0xff] %vm333, %v2959
        %2993 = vst.msk [vmem:[%s2961 + $0x171] sm:$0xff] %vm333, %v2960
        %v2994 = vld [vmem:[#allocation3] sm:$0xff]
        %v2995 = vld [vmem:[#allocation3 + $0x8] sm:$0xff]
        %v2996 = vld [vmem:[#allocation3 + $0x18] sm:$0xff]
        %v2997 = vld [vmem:[#allocation3 + $0x20] sm:$0xff]
        %v2998 = vld [vmem:[#allocation3 + $0x30] sm:$0xff]
        %v2999 = vld [vmem:[#allocation3 + $0x38] sm:$0xff]
        %v3000 = vld [vmem:[#allocation3 + $0x48] sm:$0xff]
        %v3001 = vld [vmem:[#allocation3 + $0x50] sm:$0xff]
        %v3002 = vld [vmem:[#allocation3 + $0x60] sm:$0xff]
        %v3003 = vld [vmem:[#allocation3 + $0x68] sm:$0xff]
        %v3004 = vld [vmem:[#allocation3 + $0x78] sm:$0xff]
        %v3005 = vld [vmem:[#allocation3 + $0x80] sm:$0xff]
        %v3006 = vld [vmem:[#allocation3 + $0x90] sm:$0xff]
        %v3007 = vld [vmem:[#allocation3 + $0x98] sm:$0xff]
        %v3008 = vld [vmem:[#allocation3 + $0xa8] sm:$0xff]
        %v3009 = vld [vmem:[#allocation3 + $0xb0] sm:$0xff]
        %v3010 = vld [vmem:[#allocation3 + $0xc0] sm:$0xff]
        %v3011 = vld [vmem:[#allocation3 + $0xc8] sm:$0xff]
        %v3012 = vld [vmem:[#allocation3 + $0xd8] sm:$0xff]
        %v3013 = vld [vmem:[#allocation3 + $0xe0] sm:$0xff]
        %v3014 = vld [vmem:[#allocation3 + $0xf0] sm:$0xff]
        %v3015 = vld [vmem:[#allocation3 + $0xf8] sm:$0xff]
        %v3016 = vld [vmem:[#allocation3 + $0x108] sm:$0xff]
        %v3017 = vld [vmem:[#allocation3 + $0x110] sm:$0xff]
        %v3018 = vld [vmem:[#allocation3 + $0x120] sm:$0xff]
        %v3019 = vld [vmem:[#allocation3 + $0x128] sm:$0xff]
        %v3020 = vld [vmem:[#allocation3 + $0x138] sm:$0xff]
        %v3021 = vld [vmem:[#allocation3 + $0x140] sm:$0xff]
        %v3022 = vld [vmem:[#allocation3 + $0x150] sm:$0xff]
        %v3023 = vld [vmem:[#allocation3 + $0x158] sm:$0xff]
        %v3024 = vld [vmem:[#allocation3 + $0x168] sm:$0xff]
        %v3025 = vld [vmem:[#allocation3 + $0x170] sm:$0xff]
        %v3026 = vld [vmem:[%s3] sm:$0xff]
        %v3027 = vld [vmem:[#allocation3 + $0x1] sm:$0xff]
        %v3028 = vld [vmem:[#allocation3 + $0x9] sm:$0xff]
        %v3029 = vld [vmem:[#allocation3 + $0x19] sm:$0xff]
        %v3030 = vld [vmem:[#allocation3 + $0x21] sm:$0xff]
        %v3031 = vld [vmem:[#allocation3 + $0x31] sm:$0xff]
        %v3032 = vld [vmem:[#allocation3 + $0x39] sm:$0xff]
        %v3033 = vld [vmem:[#allocation3 + $0x49] sm:$0xff]
        %v3034 = vld [vmem:[#allocation3 + $0x51] sm:$0xff]
        %v3035 = vld [vmem:[#allocation3 + $0x61] sm:$0xff]
        %v3036 = vld [vmem:[#allocation3 + $0x69] sm:$0xff]
        %v3037 = vld [vmem:[#allocation3 + $0x79] sm:$0xff]
        %v3038 = vld [vmem:[#allocation3 + $0x81] sm:$0xff]
        %v3039 = vld [vmem:[#allocation3 + $0x91] sm:$0xff]
        %v3040 = vld [vmem:[#allocation3 + $0x99] sm:$0xff]
        %v3041 = vld [vmem:[#allocation3 + $0xa9] sm:$0xff]
        %v3042 = vld [vmem:[#allocation3 + $0xb1] sm:$0xff]
        %v3043 = vld [vmem:[#allocation3 + $0xc1] sm:$0xff]
        %v3044 = vld [vmem:[#allocation3 + $0xc9] sm:$0xff]
        %v3045 = vld [vmem:[#allocation3 + $0xd9] sm:$0xff]
        %v3046 = vld [vmem:[#allocation3 + $0xe1] sm:$0xff]
        %v3047 = vld [vmem:[#allocation3 + $0xf1] sm:$0xff]
        %v3048 = vld [vmem:[#allocation3 + $0xf9] sm:$0xff]
        %v3049 = vld [vmem:[#allocation3 + $0x109] sm:$0xff]
        %v3050 = vld [vmem:[#allocation3 + $0x111] sm:$0xff]
        %v3051 = vld [vmem:[#allocation3 + $0x121] sm:$0xff]
        %v3052 = vld [vmem:[#allocation3 + $0x129] sm:$0xff]
        %v3053 = vld [vmem:[#allocation3 + $0x139] sm:$0xff]
        %v3054 = vld [vmem:[#allocation3 + $0x141] sm:$0xff]
        %v3055 = vld [vmem:[#allocation3 + $0x151] sm:$0xff]
        %v3056 = vld [vmem:[#allocation3 + $0x159] sm:$0xff]
        %v3057 = vld [vmem:[#allocation3 + $0x169] sm:$0xff]
        %v3058 = vld [vmem:[#allocation3 + $0x171] sm:$0xff]
        %s3059 = scalar_lea.vmem %s3, 8
        %v3060 = vld [vmem:[%s3059] sm:$0xff]
        %v3062 = vsel %vm333, %v3027, 0
        %v3065 = vsel %vm333, %v3028, 0
        %v3068 = vsel %vm333, %v3029, 0
        %v3071 = vsel %vm333, %v3030, 0
        %v3074 = vsel %vm333, %v3031, 0
        %v3077 = vsel %vm333, %v3032, 0
        %v3080 = vsel %vm333, %v3033, 0
        %v3083 = vsel %vm333, %v3034, 0
        %v3086 = vsel %vm333, %v3035, 0
        %v3089 = vsel %vm333, %v3036, 0
        %v3092 = vsel %vm333, %v3037, 0
        %v3095 = vsel %vm333, %v3038, 0
        %v3098 = vsel %vm333, %v3039, 0
        %v3101 = vsel %vm333, %v3040, 0
        %v3104 = vsel %vm333, %v3041, 0
        %v3107 = vsel %vm333, %v3042, 0
        %v3110 = vsel %vm333, %v3043, 0
        %v3113 = vsel %vm333, %v3044, 0
        %v3116 = vsel %vm333, %v3045, 0
        %v3119 = vsel %vm333, %v3046, 0
        %v3122 = vsel %vm333, %v3047, 0
        %v3125 = vsel %vm333, %v3048, 0
        %v3128 = vsel %vm333, %v3049, 0
        %v3131 = vsel %vm333, %v3050, 0
        %v3134 = vsel %vm333, %v3051, 0
        %v3137 = vsel %vm333, %v3052, 0
        %v3140 = vsel %vm333, %v3053, 0
        %v3143 = vsel %vm333, %v3054, 0
        %v3146 = vsel %vm333, %v3055, 0
        %v3149 = vsel %vm333, %v3056, 0
        %v3152 = vsel %vm333, %v3057, 0
        %v3155 = vsel %vm333, %v3058, 0
        %3157 = vmatpush.msra.mxu0 0.0
        %3158 = vmatpush.msra.mxu0 0.0
        %3159 = vmatpush.msra.mxu0 0.0
        %3160 = vmatpush.msra.mxu0 0.0
        %3161 = vmatpush.msra.mxu0 0.0
        %3162 = vmatpush.msra.mxu0 0.0
        %3163 = vmatpush.msra.mxu0 0.0
        %3164 = vmatpush.msra.mxu0 0.0
        %3165 = vmatpush.msra.mxu0 0.0
        %3166 = vmatpush.msra.mxu0 0.0
        %3167 = vmatpush.msra.mxu0 0.0
        %3168 = vmatpush.msra.mxu0 0.0
        %3169 = vmatpush.msra.mxu0 0.0
        %3170 = vmatpush.msra.mxu0 0.0
        %3171 = vmatpush.msra.mxu0 0.0
        %3172 = vmatpush.msra.mxu0 %v3060
        %3173 = vmatmul.f32.gmra.mxu0 %v3062
        %v3174 = vpop.f32.mrf.mxu0
        %v3175 = vadd.f32 0.0, %v3174
        %3176 = vmatmul.f32.gmra.mxu0 %v3065
        %v3177 = vpop.f32.mrf.mxu0
        %v3178 = vadd.f32 0.0, %v3177
        %3179 = vmatmul.f32.gmra.mxu0 %v3068
        %v3180 = vpop.f32.mrf.mxu0
        %v3181 = vadd.f32 0.0, %v3180
        %3182 = vmatmul.f32.gmra.mxu0 %v3071
        %v3183 = vpop.f32.mrf.mxu0
        %v3184 = vadd.f32 0.0, %v3183
        %3185 = vmatmul.f32.gmra.mxu0 %v3074
        %v3186 = vpop.f32.mrf.mxu0
        %v3187 = vadd.f32 0.0, %v3186
        %3188 = vmatmul.f32.gmra.mxu0 %v3077
        %v3189 = vpop.f32.mrf.mxu0
        %v3190 = vadd.f32 0.0, %v3189
        %3191 = vmatmul.f32.gmra.mxu0 %v3080
        %v3192 = vpop.f32.mrf.mxu0
        %v3193 = vadd.f32 0.0, %v3192
        %3194 = vmatmul.f32.gmra.mxu0 %v3083
        %v3195 = vpop.f32.mrf.mxu0
        %v3196 = vadd.f32 0.0, %v3195
        %3197 = vmatmul.f32.gmra.mxu0 %v3086
        %v3198 = vpop.f32.mrf.mxu0
        %v3199 = vadd.f32 0.0, %v3198
        %3200 = vmatmul.f32.gmra.mxu0 %v3089
        %v3201 = vpop.f32.mrf.mxu0
        %v3202 = vadd.f32 0.0, %v3201
        %3203 = vmatmul.f32.gmra.mxu0 %v3092
        %v3204 = vpop.f32.mrf.mxu0
        %v3205 = vadd.f32 0.0, %v3204
        %3206 = vmatmul.f32.gmra.mxu0 %v3095
        %v3207 = vpop.f32.mrf.mxu0
        %v3208 = vadd.f32 0.0, %v3207
        %3209 = vmatmul.f32.gmra.mxu0 %v3098
        %v3210 = vpop.f32.mrf.mxu0
        %v3211 = vadd.f32 0.0, %v3210
        %3212 = vmatmul.f32.gmra.mxu0 %v3101
        %v3213 = vpop.f32.mrf.mxu0
        %v3214 = vadd.f32 0.0, %v3213
        %3215 = vmatmul.f32.gmra.mxu0 %v3104
        %v3216 = vpop.f32.mrf.mxu0
        %v3217 = vadd.f32 0.0, %v3216
        %3218 = vmatmul.f32.gmra.mxu0 %v3107
        %v3219 = vpop.f32.mrf.mxu0
        %v3220 = vadd.f32 0.0, %v3219
        %3221 = vmatmul.f32.gmra.mxu0 %v3110
        %v3222 = vpop.f32.mrf.mxu0
        %v3223 = vadd.f32 0.0, %v3222
        %3224 = vmatmul.f32.gmra.mxu0 %v3113
        %v3225 = vpop.f32.mrf.mxu0
        %v3226 = vadd.f32 0.0, %v3225
        %3227 = vmatmul.f32.gmra.mxu0 %v3116
        %v3228 = vpop.f32.mrf.mxu0
        %v3229 = vadd.f32 0.0, %v3228
        %3230 = vmatmul.f32.gmra.mxu0 %v3119
        %v3231 = vpop.f32.mrf.mxu0
        %v3232 = vadd.f32 0.0, %v3231
        %3233 = vmatmul.f32.gmra.mxu0 %v3122
        %v3234 = vpop.f32.mrf.mxu0
        %v3235 = vadd.f32 0.0, %v3234
        %3236 = vmatmul.f32.gmra.mxu0 %v3125
        %v3237 = vpop.f32.mrf.mxu0
        %v3238 = vadd.f32 0.0, %v3237
        %3239 = vmatmul.f32.gmra.mxu0 %v3128
        %v3240 = vpop.f32.mrf.mxu0
        %v3241 = vadd.f32 0.0, %v3240
        %3242 = vmatmul.f32.gmra.mxu0 %v3131
        %v3243 = vpop.f32.mrf.mxu0
        %v3244 = vadd.f32 0.0, %v3243
        %3245 = vmatmul.f32.gmra.mxu0 %v3134
        %v3246 = vpop.f32.mrf.mxu0
        %v3247 = vadd.f32 0.0, %v3246
        %3248 = vmatmul.f32.gmra.mxu0 %v3137
        %v3249 = vpop.f32.mrf.mxu0
        %v3250 = vadd.f32 0.0, %v3249
        %3251 = vmatmul.f32.gmra.mxu0 %v3140
        %v3252 = vpop.f32.mrf.mxu0
        %v3253 = vadd.f32 0.0, %v3252
        %3254 = vmatmul.f32.gmra.mxu0 %v3143
        %v3255 = vpop.f32.mrf.mxu0
        %v3256 = vadd.f32 0.0, %v3255
        %3257 = vmatmul.f32.gmra.mxu0 %v3146
        %v3258 = vpop.f32.mrf.mxu0
        %v3259 = vadd.f32 0.0, %v3258
        %3260 = vmatmul.f32.gmra.mxu0 %v3149
        %v3261 = vpop.f32.mrf.mxu0
        %v3262 = vadd.f32 0.0, %v3261
        %3263 = vmatmul.f32.gmra.mxu0 %v3152
        %v3264 = vpop.f32.mrf.mxu0
        %v3265 = vadd.f32 0.0, %v3264
        %3266 = vmatmul.f32.gmra.mxu0 %v3155
        %v3267 = vpop.f32.mrf.mxu0
        %v3268 = vadd.f32 0.0, %v3267
        %3269 = vdwg.mxu0
        %v3271 = vsel %vm333, %v2994, 0
        %v3274 = vsel %vm333, %v2995, 0
        %v3277 = vsel %vm333, %v2996, 0
        %v3280 = vsel %vm333, %v2997, 0
        %v3283 = vsel %vm333, %v2998, 0
        %v3286 = vsel %vm333, %v2999, 0
        %v3289 = vsel %vm333, %v3000, 0
        %v3292 = vsel %vm333, %v3001, 0
        %v3295 = vsel %vm333, %v3002, 0
        %v3298 = vsel %vm333, %v3003, 0
        %v3301 = vsel %vm333, %v3004, 0
        %v3304 = vsel %vm333, %v3005, 0
        %v3307 = vsel %vm333, %v3006, 0
        %v3310 = vsel %vm333, %v3007, 0
        %v3313 = vsel %vm333, %v3008, 0
        %v3316 = vsel %vm333, %v3009, 0
        %v3319 = vsel %vm333, %v3010, 0
        %v3322 = vsel %vm333, %v3011, 0
        %v3325 = vsel %vm333, %v3012, 0
        %v3328 = vsel %vm333, %v3013, 0
        %v3331 = vsel %vm333, %v3014, 0
        %v3334 = vsel %vm333, %v3015, 0
        %v3337 = vsel %vm333, %v3016, 0
        %v3340 = vsel %vm333, %v3017, 0
        %v3343 = vsel %vm333, %v3018, 0
        %v3346 = vsel %vm333, %v3019, 0
        %v3349 = vsel %vm333, %v3020, 0
        %v3352 = vsel %vm333, %v3021, 0
        %v3355 = vsel %vm333, %v3022, 0
        %v3358 = vsel %vm333, %v3023, 0
        %v3361 = vsel %vm333, %v3024, 0
        %v3364 = vsel %vm333, %v3025, 0
        %3366 = vmatpush.msra.mxu0 0.0
        %3367 = vmatpush.msra.mxu0 0.0
        %3368 = vmatpush.msra.mxu0 0.0
        %3369 = vmatpush.msra.mxu0 0.0
        %3370 = vmatpush.msra.mxu0 0.0
        %3371 = vmatpush.msra.mxu0 0.0
        %3372 = vmatpush.msra.mxu0 0.0
        %3373 = vmatpush.msra.mxu0 0.0
        %3374 = vmatpush.msra.mxu0 0.0
        %3375 = vmatpush.msra.mxu0 0.0
        %3376 = vmatpush.msra.mxu0 0.0
        %3377 = vmatpush.msra.mxu0 0.0
        %3378 = vmatpush.msra.mxu0 0.0
        %3379 = vmatpush.msra.mxu0 0.0
        %3380 = vmatpush.msra.mxu0 0.0
        %3381 = vmatpush.msra.mxu0 %v3026
        %3382 = vmatmul.f32.gmra.mxu0 %v3271
        %v3383 = vpop.f32.mrf.mxu0
        %v3384 = vadd.f32 %v3175, %v3383
        %3385 = vmatmul.f32.gmra.mxu0 %v3274
        %v3386 = vpop.f32.mrf.mxu0
        %v3387 = vadd.f32 %v3178, %v3386
        %3388 = vmatmul.f32.gmra.mxu0 %v3277
        %v3389 = vpop.f32.mrf.mxu0
        %v3390 = vadd.f32 %v3181, %v3389
        %3391 = vmatmul.f32.gmra.mxu0 %v3280
        %v3392 = vpop.f32.mrf.mxu0
        %v3393 = vadd.f32 %v3184, %v3392
        %3394 = vmatmul.f32.gmra.mxu0 %v3283
        %v3395 = vpop.f32.mrf.mxu0
        %v3396 = vadd.f32 %v3187, %v3395
        %3397 = vmatmul.f32.gmra.mxu0 %v3286
        %v3398 = vpop.f32.mrf.mxu0
        %v3399 = vadd.f32 %v3190, %v3398
        %3400 = vmatmul.f32.gmra.mxu0 %v3289
        %v3401 = vpop.f32.mrf.mxu0
        %v3402 = vadd.f32 %v3193, %v3401
        %3403 = vmatmul.f32.gmra.mxu0 %v3292
        %v3404 = vpop.f32.mrf.mxu0
        %v3405 = vadd.f32 %v3196, %v3404
        %3406 = vmatmul.f32.gmra.mxu0 %v3295
        %v3407 = vpop.f32.mrf.mxu0
        %v3408 = vadd.f32 %v3199, %v3407
        %3409 = vmatmul.f32.gmra.mxu0 %v3298
        %v3410 = vpop.f32.mrf.mxu0
        %v3411 = vadd.f32 %v3202, %v3410
        %3412 = vmatmul.f32.gmra.mxu0 %v3301
        %v3413 = vpop.f32.mrf.mxu0
        %v3414 = vadd.f32 %v3205, %v3413
        %3415 = vmatmul.f32.gmra.mxu0 %v3304
        %v3416 = vpop.f32.mrf.mxu0
        %v3417 = vadd.f32 %v3208, %v3416
        %3418 = vmatmul.f32.gmra.mxu0 %v3307
        %v3419 = vpop.f32.mrf.mxu0
        %v3420 = vadd.f32 %v3211, %v3419
        %3421 = vmatmul.f32.gmra.mxu0 %v3310
        %v3422 = vpop.f32.mrf.mxu0
        %v3423 = vadd.f32 %v3214, %v3422
        %3424 = vmatmul.f32.gmra.mxu0 %v3313
        %v3425 = vpop.f32.mrf.mxu0
        %v3426 = vadd.f32 %v3217, %v3425
        %3427 = vmatmul.f32.gmra.mxu0 %v3316
        %v3428 = vpop.f32.mrf.mxu0
        %v3429 = vadd.f32 %v3220, %v3428
        %3430 = vmatmul.f32.gmra.mxu0 %v3319
        %v3431 = vpop.f32.mrf.mxu0
        %v3432 = vadd.f32 %v3223, %v3431
        %3433 = vmatmul.f32.gmra.mxu0 %v3322
        %v3434 = vpop.f32.mrf.mxu0
        %v3435 = vadd.f32 %v3226, %v3434
        %3436 = vmatmul.f32.gmra.mxu0 %v3325
        %v3437 = vpop.f32.mrf.mxu0
        %v3438 = vadd.f32 %v3229, %v3437
        %3439 = vmatmul.f32.gmra.mxu0 %v3328
        %v3440 = vpop.f32.mrf.mxu0
        %v3441 = vadd.f32 %v3232, %v3440
        %3442 = vmatmul.f32.gmra.mxu0 %v3331
        %v3443 = vpop.f32.mrf.mxu0
        %v3444 = vadd.f32 %v3235, %v3443
        %3445 = vmatmul.f32.gmra.mxu0 %v3334
        %v3446 = vpop.f32.mrf.mxu0
        %v3447 = vadd.f32 %v3238, %v3446
        %3448 = vmatmul.f32.gmra.mxu0 %v3337
        %v3449 = vpop.f32.mrf.mxu0
        %v3450 = vadd.f32 %v3241, %v3449
        %3451 = vmatmul.f32.gmra.mxu0 %v3340
        %v3452 = vpop.f32.mrf.mxu0
        %v3453 = vadd.f32 %v3244, %v3452
        %3454 = vmatmul.f32.gmra.mxu0 %v3343
        %v3455 = vpop.f32.mrf.mxu0
        %v3456 = vadd.f32 %v3247, %v3455
        %3457 = vmatmul.f32.gmra.mxu0 %v3346
        %v3458 = vpop.f32.mrf.mxu0
        %v3459 = vadd.f32 %v3250, %v3458
        %3460 = vmatmul.f32.gmra.mxu0 %v3349
        %v3461 = vpop.f32.mrf.mxu0
        %v3462 = vadd.f32 %v3253, %v3461
        %3463 = vmatmul.f32.gmra.mxu0 %v3352
        %v3464 = vpop.f32.mrf.mxu0
        %v3465 = vadd.f32 %v3256, %v3464
        %3466 = vmatmul.f32.gmra.mxu0 %v3355
        %v3467 = vpop.f32.mrf.mxu0
        %v3468 = vadd.f32 %v3259, %v3467
        %3469 = vmatmul.f32.gmra.mxu0 %v3358
        %v3470 = vpop.f32.mrf.mxu0
        %v3471 = vadd.f32 %v3262, %v3470
        %3472 = vmatmul.f32.gmra.mxu0 %v3361
        %v3473 = vpop.f32.mrf.mxu0
        %v3474 = vadd.f32 %v3265, %v3473
        %3475 = vmatmul.f32.gmra.mxu0 %v3364
        %v3476 = vpop.f32.mrf.mxu0
        %v3477 = vadd.f32 %v3268, %v3476
        %3478 = vdwg.mxu0
        %v3479 = vld [vmem:[#allocation3 + $0x2] sm:$0xff]
        %v3480 = vld [vmem:[#allocation3 + $0xa] sm:$0xff]
        %v3481 = vld [vmem:[#allocation3 + $0x1a] sm:$0xff]
        %v3482 = vld [vmem:[#allocation3 + $0x22] sm:$0xff]
        %v3483 = vld [vmem:[#allocation3 + $0x32] sm:$0xff]
        %v3484 = vld [vmem:[#allocation3 + $0x3a] sm:$0xff]
        %v3485 = vld [vmem:[#allocation3 + $0x4a] sm:$0xff]
        %v3486 = vld [vmem:[#allocation3 + $0x52] sm:$0xff]
        %v3487 = vld [vmem:[#allocation3 + $0x62] sm:$0xff]
        %v3488 = vld [vmem:[#allocation3 + $0x6a] sm:$0xff]
        %v3489 = vld [vmem:[#allocation3 + $0x7a] sm:$0xff]
        %v3490 = vld [vmem:[#allocation3 + $0x82] sm:$0xff]
        %v3491 = vld [vmem:[#allocation3 + $0x92] sm:$0xff]
        %v3492 = vld [vmem:[#allocation3 + $0x9a] sm:$0xff]
        %v3493 = vld [vmem:[#allocation3 + $0xaa] sm:$0xff]
        %v3494 = vld [vmem:[#allocation3 + $0xb2] sm:$0xff]
        %v3495 = vld [vmem:[#allocation3 + $0xc2] sm:$0xff]
        %v3496 = vld [vmem:[#allocation3 + $0xca] sm:$0xff]
        %v3497 = vld [vmem:[#allocation3 + $0xda] sm:$0xff]
        %v3498 = vld [vmem:[#allocation3 + $0xe2] sm:$0xff]
        %v3499 = vld [vmem:[#allocation3 + $0xf2] sm:$0xff]
        %v3500 = vld [vmem:[#allocation3 + $0xfa] sm:$0xff]
        %v3501 = vld [vmem:[#allocation3 + $0x10a] sm:$0xff]
        %v3502 = vld [vmem:[#allocation3 + $0x112] sm:$0xff]
        %v3503 = vld [vmem:[#allocation3 + $0x122] sm:$0xff]
        %v3504 = vld [vmem:[#allocation3 + $0x12a] sm:$0xff]
        %v3505 = vld [vmem:[#allocation3 + $0x13a] sm:$0xff]
        %v3506 = vld [vmem:[#allocation3 + $0x142] sm:$0xff]
        %v3507 = vld [vmem:[#allocation3 + $0x152] sm:$0xff]
        %v3508 = vld [vmem:[#allocation3 + $0x15a] sm:$0xff]
        %v3509 = vld [vmem:[#allocation3 + $0x16a] sm:$0xff]
        %v3510 = vld [vmem:[#allocation3 + $0x172] sm:$0xff]
        %s3511 = scalar_lea.vmem %s3, 16
        %v3512 = vld [vmem:[%s3511] sm:$0xff]
        %v3514 = vsel %vm333, %v3479, 0
        %v3517 = vsel %vm333, %v3480, 0
        %v3520 = vsel %vm333, %v3481, 0
        %v3523 = vsel %vm333, %v3482, 0
        %v3526 = vsel %vm333, %v3483, 0
        %v3529 = vsel %vm333, %v3484, 0
        %v3532 = vsel %vm333, %v3485, 0
        %v3535 = vsel %vm333, %v3486, 0
        %v3538 = vsel %vm333, %v3487, 0
        %v3541 = vsel %vm333, %v3488, 0
        %v3544 = vsel %vm333, %v3489, 0
        %v3547 = vsel %vm333, %v3490, 0
        %v3550 = vsel %vm333, %v3491, 0
        %v3553 = vsel %vm333, %v3492, 0
        %v3556 = vsel %vm333, %v3493, 0
        %v3559 = vsel %vm333, %v3494, 0
        %v3562 = vsel %vm333, %v3495, 0
        %v3565 = vsel %vm333, %v3496, 0
        %v3568 = vsel %vm333, %v3497, 0
        %v3571 = vsel %vm333, %v3498, 0
        %v3574 = vsel %vm333, %v3499, 0
        %v3577 = vsel %vm333, %v3500, 0
        %v3580 = vsel %vm333, %v3501, 0
        %v3583 = vsel %vm333, %v3502, 0
        %v3586 = vsel %vm333, %v3503, 0
        %v3589 = vsel %vm333, %v3504, 0
        %v3592 = vsel %vm333, %v3505, 0
        %v3595 = vsel %vm333, %v3506, 0
        %v3598 = vsel %vm333, %v3507, 0
        %v3601 = vsel %vm333, %v3508, 0
        %v3604 = vsel %vm333, %v3509, 0
        %v3607 = vsel %vm333, %v3510, 0
        %3609 = vmatpush.msra.mxu0 0.0
        %3610 = vmatpush.msra.mxu0 0.0
        %3611 = vmatpush.msra.mxu0 0.0
        %3612 = vmatpush.msra.mxu0 0.0
        %3613 = vmatpush.msra.mxu0 0.0
        %3614 = vmatpush.msra.mxu0 0.0
        %3615 = vmatpush.msra.mxu0 0.0
        %3616 = vmatpush.msra.mxu0 0.0
        %3617 = vmatpush.msra.mxu0 0.0
        %3618 = vmatpush.msra.mxu0 0.0
        %3619 = vmatpush.msra.mxu0 0.0
        %3620 = vmatpush.msra.mxu0 0.0
        %3621 = vmatpush.msra.mxu0 0.0
        %3622 = vmatpush.msra.mxu0 0.0
        %3623 = vmatpush.msra.mxu0 0.0
        %3624 = vmatpush.msra.mxu0 %v3512
        %3625 = vmatmul.f32.gmra.mxu0 %v3514
        %v3626 = vpop.f32.mrf.mxu0
        %v3627 = vadd.f32 0.0, %v3626
        %3628 = vmatmul.f32.gmra.mxu0 %v3517
        %v3629 = vpop.f32.mrf.mxu0
        %v3630 = vadd.f32 0.0, %v3629
        %3631 = vmatmul.f32.gmra.mxu0 %v3520
        %v3632 = vpop.f32.mrf.mxu0
        %v3633 = vadd.f32 0.0, %v3632
        %3634 = vmatmul.f32.gmra.mxu0 %v3523
        %v3635 = vpop.f32.mrf.mxu0
        %v3636 = vadd.f32 0.0, %v3635
        %3637 = vmatmul.f32.gmra.mxu0 %v3526
        %v3638 = vpop.f32.mrf.mxu0
        %v3639 = vadd.f32 0.0, %v3638
        %3640 = vmatmul.f32.gmra.mxu0 %v3529
        %v3641 = vpop.f32.mrf.mxu0
        %v3642 = vadd.f32 0.0, %v3641
        %3643 = vmatmul.f32.gmra.mxu0 %v3532
        %v3644 = vpop.f32.mrf.mxu0
        %v3645 = vadd.f32 0.0, %v3644
        %3646 = vmatmul.f32.gmra.mxu0 %v3535
        %v3647 = vpop.f32.mrf.mxu0
        %v3648 = vadd.f32 0.0, %v3647
        %3649 = vmatmul.f32.gmra.mxu0 %v3538
        %v3650 = vpop.f32.mrf.mxu0
        %v3651 = vadd.f32 0.0, %v3650
        %3652 = vmatmul.f32.gmra.mxu0 %v3541
        %v3653 = vpop.f32.mrf.mxu0
        %v3654 = vadd.f32 0.0, %v3653
        %3655 = vmatmul.f32.gmra.mxu0 %v3544
        %v3656 = vpop.f32.mrf.mxu0
        %v3657 = vadd.f32 0.0, %v3656
        %3658 = vmatmul.f32.gmra.mxu0 %v3547
        %v3659 = vpop.f32.mrf.mxu0
        %v3660 = vadd.f32 0.0, %v3659
        %3661 = vmatmul.f32.gmra.mxu0 %v3550
        %v3662 = vpop.f32.mrf.mxu0
        %v3663 = vadd.f32 0.0, %v3662
        %3664 = vmatmul.f32.gmra.mxu0 %v3553
        %v3665 = vpop.f32.mrf.mxu0
        %v3666 = vadd.f32 0.0, %v3665
        %3667 = vmatmul.f32.gmra.mxu0 %v3556
        %v3668 = vpop.f32.mrf.mxu0
        %v3669 = vadd.f32 0.0, %v3668
        %3670 = vmatmul.f32.gmra.mxu0 %v3559
        %v3671 = vpop.f32.mrf.mxu0
        %v3672 = vadd.f32 0.0, %v3671
        %3673 = vmatmul.f32.gmra.mxu0 %v3562
        %v3674 = vpop.f32.mrf.mxu0
        %v3675 = vadd.f32 0.0, %v3674
        %3676 = vmatmul.f32.gmra.mxu0 %v3565
        %v3677 = vpop.f32.mrf.mxu0
        %v3678 = vadd.f32 0.0, %v3677
        %3679 = vmatmul.f32.gmra.mxu0 %v3568
        %v3680 = vpop.f32.mrf.mxu0
        %v3681 = vadd.f32 0.0, %v3680
        %3682 = vmatmul.f32.gmra.mxu0 %v3571
        %v3683 = vpop.f32.mrf.mxu0
        %v3684 = vadd.f32 0.0, %v3683
        %3685 = vmatmul.f32.gmra.mxu0 %v3574
        %v3686 = vpop.f32.mrf.mxu0
        %v3687 = vadd.f32 0.0, %v3686
        %3688 = vmatmul.f32.gmra.mxu0 %v3577
        %v3689 = vpop.f32.mrf.mxu0
        %v3690 = vadd.f32 0.0, %v3689
        %3691 = vmatmul.f32.gmra.mxu0 %v3580
        %v3692 = vpop.f32.mrf.mxu0
        %v3693 = vadd.f32 0.0, %v3692
        %3694 = vmatmul.f32.gmra.mxu0 %v3583
        %v3695 = vpop.f32.mrf.mxu0
        %v3696 = vadd.f32 0.0, %v3695
        %3697 = vmatmul.f32.gmra.mxu0 %v3586
        %v3698 = vpop.f32.mrf.mxu0
        %v3699 = vadd.f32 0.0, %v3698
        %3700 = vmatmul.f32.gmra.mxu0 %v3589
        %v3701 = vpop.f32.mrf.mxu0
        %v3702 = vadd.f32 0.0, %v3701
        %3703 = vmatmul.f32.gmra.mxu0 %v3592
        %v3704 = vpop.f32.mrf.mxu0
        %v3705 = vadd.f32 0.0, %v3704
        %3706 = vmatmul.f32.gmra.mxu0 %v3595
        %v3707 = vpop.f32.mrf.mxu0
        %v3708 = vadd.f32 0.0, %v3707
        %3709 = vmatmul.f32.gmra.mxu0 %v3598
        %v3710 = vpop.f32.mrf.mxu0
        %v3711 = vadd.f32 0.0, %v3710
        %3712 = vmatmul.f32.gmra.mxu0 %v3601
        %v3713 = vpop.f32.mrf.mxu0
        %v3714 = vadd.f32 0.0, %v3713
        %3715 = vmatmul.f32.gmra.mxu0 %v3604
        %v3716 = vpop.f32.mrf.mxu0
        %v3717 = vadd.f32 0.0, %v3716
        %3718 = vmatmul.f32.gmra.mxu0 %v3607
        %v3719 = vpop.f32.mrf.mxu0
        %v3720 = vadd.f32 0.0, %v3719
        %3721 = vdwg.mxu0
        %v3722 = vadd.f32 %v3384, %v3627
        %v3723 = vadd.f32 %v3387, %v3630
        %v3724 = vadd.f32 %v3390, %v3633
        %v3725 = vadd.f32 %v3393, %v3636
        %v3726 = vadd.f32 %v3396, %v3639
        %v3727 = vadd.f32 %v3399, %v3642
        %v3728 = vadd.f32 %v3402, %v3645
        %v3729 = vadd.f32 %v3405, %v3648
        %v3730 = vadd.f32 %v3408, %v3651
        %v3731 = vadd.f32 %v3411, %v3654
        %v3732 = vadd.f32 %v3414, %v3657
        %v3733 = vadd.f32 %v3417, %v3660
        %v3734 = vadd.f32 %v3420, %v3663
        %v3735 = vadd.f32 %v3423, %v3666
        %v3736 = vadd.f32 %v3426, %v3669
        %v3737 = vadd.f32 %v3429, %v3672
        %v3738 = vadd.f32 %v3432, %v3675
        %v3739 = vadd.f32 %v3435, %v3678
        %v3740 = vadd.f32 %v3438, %v3681
        %v3741 = vadd.f32 %v3441, %v3684
        %v3742 = vadd.f32 %v3444, %v3687
        %v3743 = vadd.f32 %v3447, %v3690
        %v3744 = vadd.f32 %v3450, %v3693
        %v3745 = vadd.f32 %v3453, %v3696
        %v3746 = vadd.f32 %v3456, %v3699
        %v3747 = vadd.f32 %v3459, %v3702
        %v3748 = vadd.f32 %v3462, %v3705
        %v3749 = vadd.f32 %v3465, %v3708
        %v3750 = vadd.f32 %v3468, %v3711
        %v3751 = vadd.f32 %v3471, %v3714
        %v3752 = vadd.f32 %v3474, %v3717
        %v3753 = vadd.f32 %v3477, %v3720
        %v3754 = vld [vmem:[%s2961] sm:$0xff]
        %v3755 = vld [vmem:[%s2961 + $0x8] sm:$0xff]
        %v3756 = vld [vmem:[%s2961 + $0x18] sm:$0xff]
        %v3757 = vld [vmem:[%s2961 + $0x20] sm:$0xff]
        %v3758 = vld [vmem:[%s2961 + $0x30] sm:$0xff]
        %v3759 = vld [vmem:[%s2961 + $0x38] sm:$0xff]
        %v3760 = vld [vmem:[%s2961 + $0x48] sm:$0xff]
        %v3761 = vld [vmem:[%s2961 + $0x50] sm:$0xff]
        %v3762 = vld [vmem:[%s2961 + $0x60] sm:$0xff]
        %v3763 = vld [vmem:[%s2961 + $0x68] sm:$0xff]
        %v3764 = vld [vmem:[%s2961 + $0x78] sm:$0xff]
        %v3765 = vld [vmem:[%s2961 + $0x80] sm:$0xff]
        %v3766 = vld [vmem:[%s2961 + $0x90] sm:$0xff]
        %v3767 = vld [vmem:[%s2961 + $0x98] sm:$0xff]
        %v3768 = vld [vmem:[%s2961 + $0xa8] sm:$0xff]
        %v3769 = vld [vmem:[%s2961 + $0xb0] sm:$0xff]
        %v3770 = vld [vmem:[%s2961 + $0xc0] sm:$0xff]
        %v3771 = vld [vmem:[%s2961 + $0xc8] sm:$0xff]
        %v3772 = vld [vmem:[%s2961 + $0xd8] sm:$0xff]
        %v3773 = vld [vmem:[%s2961 + $0xe0] sm:$0xff]
        %v3774 = vld [vmem:[%s2961 + $0xf0] sm:$0xff]
        %v3775 = vld [vmem:[%s2961 + $0xf8] sm:$0xff]
        %v3776 = vld [vmem:[%s2961 + $0x108] sm:$0xff]
        %v3777 = vld [vmem:[%s2961 + $0x110] sm:$0xff]
        %v3778 = vld [vmem:[%s2961 + $0x120] sm:$0xff]
        %v3779 = vld [vmem:[%s2961 + $0x128] sm:$0xff]
        %v3780 = vld [vmem:[%s2961 + $0x138] sm:$0xff]
        %v3781 = vld [vmem:[%s2961 + $0x140] sm:$0xff]
        %v3782 = vld [vmem:[%s2961 + $0x150] sm:$0xff]
        %v3783 = vld [vmem:[%s2961 + $0x158] sm:$0xff]
        %v3784 = vld [vmem:[%s2961 + $0x168] sm:$0xff]
        %v3785 = vld [vmem:[%s2961 + $0x170] sm:$0xff]
        %s3786 = scalar_lea.vmem %s3, 24
        %v3787 = vld [vmem:[%s3786] sm:$0xff]
        %v3789 = vsel %vm333, %v3754, 0
        %v3792 = vsel %vm333, %v3755, 0
        %v3795 = vsel %vm333, %v3756, 0
        %v3798 = vsel %vm333, %v3757, 0
        %v3801 = vsel %vm333, %v3758, 0
        %v3804 = vsel %vm333, %v3759, 0
        %v3807 = vsel %vm333, %v3760, 0
        %v3810 = vsel %vm333, %v3761, 0
        %v3813 = vsel %vm333, %v3762, 0
        %v3816 = vsel %vm333, %v3763, 0
        %v3819 = vsel %vm333, %v3764, 0
        %v3822 = vsel %vm333, %v3765, 0
        %v3825 = vsel %vm333, %v3766, 0
        %v3828 = vsel %vm333, %v3767, 0
        %v3831 = vsel %vm333, %v3768, 0
        %v3834 = vsel %vm333, %v3769, 0
        %v3837 = vsel %vm333, %v3770, 0
        %v3840 = vsel %vm333, %v3771, 0
        %v3843 = vsel %vm333, %v3772, 0
        %v3846 = vsel %vm333, %v3773, 0
        %v3849 = vsel %vm333, %v3774, 0
        %v3852 = vsel %vm333, %v3775, 0
        %v3855 = vsel %vm333, %v3776, 0
        %v3858 = vsel %vm333, %v3777, 0
        %v3861 = vsel %vm333, %v3778, 0
        %v3864 = vsel %vm333, %v3779, 0
        %v3867 = vsel %vm333, %v3780, 0
        %v3870 = vsel %vm333, %v3781, 0
        %v3873 = vsel %vm333, %v3782, 0
        %v3876 = vsel %vm333, %v3783, 0
        %v3879 = vsel %vm333, %v3784, 0
        %v3882 = vsel %vm333, %v3785, 0
        %3884 = vmatpush.msra.mxu0 0.0
        %3885 = vmatpush.msra.mxu0 0.0
        %3886 = vmatpush.msra.mxu0 0.0
        %3887 = vmatpush.msra.mxu0 0.0
        %3888 = vmatpush.msra.mxu0 0.0
        %3889 = vmatpush.msra.mxu0 0.0
        %3890 = vmatpush.msra.mxu0 0.0
        %3891 = vmatpush.msra.mxu0 0.0
        %3892 = vmatpush.msra.mxu0 0.0
        %3893 = vmatpush.msra.mxu0 0.0
        %3894 = vmatpush.msra.mxu0 0.0
        %3895 = vmatpush.msra.mxu0 0.0
        %3896 = vmatpush.msra.mxu0 0.0
        %3897 = vmatpush.msra.mxu0 0.0
        %3898 = vmatpush.msra.mxu0 0.0
        %3899 = vmatpush.msra.mxu0 %v3787
        %3900 = vmatmul.f32.gmra.mxu0 %v3789
        %v3901 = vpop.f32.mrf.mxu0
        %v3902 = vadd.f32 0.0, %v3901
        %3903 = vmatmul.f32.gmra.mxu0 %v3792
        %v3904 = vpop.f32.mrf.mxu0
        %v3905 = vadd.f32 0.0, %v3904
        %3906 = vmatmul.f32.gmra.mxu0 %v3795
        %v3907 = vpop.f32.mrf.mxu0
        %v3908 = vadd.f32 0.0, %v3907
        %3909 = vmatmul.f32.gmra.mxu0 %v3798
        %v3910 = vpop.f32.mrf.mxu0
        %v3911 = vadd.f32 0.0, %v3910
        %3912 = vmatmul.f32.gmra.mxu0 %v3801
        %v3913 = vpop.f32.mrf.mxu0
        %v3914 = vadd.f32 0.0, %v3913
        %3915 = vmatmul.f32.gmra.mxu0 %v3804
        %v3916 = vpop.f32.mrf.mxu0
        %v3917 = vadd.f32 0.0, %v3916
        %3918 = vmatmul.f32.gmra.mxu0 %v3807
        %v3919 = vpop.f32.mrf.mxu0
        %v3920 = vadd.f32 0.0, %v3919
        %3921 = vmatmul.f32.gmra.mxu0 %v3810
        %v3922 = vpop.f32.mrf.mxu0
        %v3923 = vadd.f32 0.0, %v3922
        %3924 = vmatmul.f32.gmra.mxu0 %v3813
        %v3925 = vpop.f32.mrf.mxu0
        %v3926 = vadd.f32 0.0, %v3925
        %3927 = vmatmul.f32.gmra.mxu0 %v3816
        %v3928 = vpop.f32.mrf.mxu0
        %v3929 = vadd.f32 0.0, %v3928
        %3930 = vmatmul.f32.gmra.mxu0 %v3819
        %v3931 = vpop.f32.mrf.mxu0
        %v3932 = vadd.f32 0.0, %v3931
        %3933 = vmatmul.f32.gmra.mxu0 %v3822
        %v3934 = vpop.f32.mrf.mxu0
        %v3935 = vadd.f32 0.0, %v3934
        %3936 = vmatmul.f32.gmra.mxu0 %v3825
        %v3937 = vpop.f32.mrf.mxu0
        %v3938 = vadd.f32 0.0, %v3937
        %3939 = vmatmul.f32.gmra.mxu0 %v3828
        %v3940 = vpop.f32.mrf.mxu0
        %v3941 = vadd.f32 0.0, %v3940
        %3942 = vmatmul.f32.gmra.mxu0 %v3831
        %v3943 = vpop.f32.mrf.mxu0
        %v3944 = vadd.f32 0.0, %v3943
        %3945 = vmatmul.f32.gmra.mxu0 %v3834
        %v3946 = vpop.f32.mrf.mxu0
        %v3947 = vadd.f32 0.0, %v3946
        %3948 = vmatmul.f32.gmra.mxu0 %v3837
        %v3949 = vpop.f32.mrf.mxu0
        %v3950 = vadd.f32 0.0, %v3949
        %3951 = vmatmul.f32.gmra.mxu0 %v3840
        %v3952 = vpop.f32.mrf.mxu0
        %v3953 = vadd.f32 0.0, %v3952
        %3954 = vmatmul.f32.gmra.mxu0 %v3843
        %v3955 = vpop.f32.mrf.mxu0
        %v3956 = vadd.f32 0.0, %v3955
        %3957 = vmatmul.f32.gmra.mxu0 %v3846
        %v3958 = vpop.f32.mrf.mxu0
        %v3959 = vadd.f32 0.0, %v3958
        %3960 = vmatmul.f32.gmra.mxu0 %v3849
        %v3961 = vpop.f32.mrf.mxu0
        %v3962 = vadd.f32 0.0, %v3961
        %3963 = vmatmul.f32.gmra.mxu0 %v3852
        %v3964 = vpop.f32.mrf.mxu0
        %v3965 = vadd.f32 0.0, %v3964
        %3966 = vmatmul.f32.gmra.mxu0 %v3855
        %v3967 = vpop.f32.mrf.mxu0
        %v3968 = vadd.f32 0.0, %v3967
        %3969 = vmatmul.f32.gmra.mxu0 %v3858
        %v3970 = vpop.f32.mrf.mxu0
        %v3971 = vadd.f32 0.0, %v3970
        %3972 = vmatmul.f32.gmra.mxu0 %v3861
        %v3973 = vpop.f32.mrf.mxu0
        %v3974 = vadd.f32 0.0, %v3973
        %3975 = vmatmul.f32.gmra.mxu0 %v3864
        %v3976 = vpop.f32.mrf.mxu0
        %v3977 = vadd.f32 0.0, %v3976
        %3978 = vmatmul.f32.gmra.mxu0 %v3867
        %v3979 = vpop.f32.mrf.mxu0
        %v3980 = vadd.f32 0.0, %v3979
        %3981 = vmatmul.f32.gmra.mxu0 %v3870
        %v3982 = vpop.f32.mrf.mxu0
        %v3983 = vadd.f32 0.0, %v3982
        %3984 = vmatmul.f32.gmra.mxu0 %v3873
        %v3985 = vpop.f32.mrf.mxu0
        %v3986 = vadd.f32 0.0, %v3985
        %3987 = vmatmul.f32.gmra.mxu0 %v3876
        %v3988 = vpop.f32.mrf.mxu0
        %v3989 = vadd.f32 0.0, %v3988
        %3990 = vmatmul.f32.gmra.mxu0 %v3879
        %v3991 = vpop.f32.mrf.mxu0
        %v3992 = vadd.f32 0.0, %v3991
        %3993 = vmatmul.f32.gmra.mxu0 %v3882
        %v3994 = vpop.f32.mrf.mxu0
        %v3995 = vadd.f32 0.0, %v3994
        %3996 = vdwg.mxu0
        %v3997 = vadd.f32 %v3722, %v3902
        %v3998 = vadd.f32 %v3723, %v3905
        %v3999 = vadd.f32 %v3724, %v3908
        %v4000 = vadd.f32 %v3725, %v3911
        %v4001 = vadd.f32 %v3726, %v3914
        %v4002 = vadd.f32 %v3727, %v3917
        %v4003 = vadd.f32 %v3728, %v3920
        %v4004 = vadd.f32 %v3729, %v3923
        %v4005 = vadd.f32 %v3730, %v3926
        %v4006 = vadd.f32 %v3731, %v3929
        %v4007 = vadd.f32 %v3732, %v3932
        %v4008 = vadd.f32 %v3733, %v3935
        %v4009 = vadd.f32 %v3734, %v3938
        %v4010 = vadd.f32 %v3735, %v3941
        %v4011 = vadd.f32 %v3736, %v3944
        %v4012 = vadd.f32 %v3737, %v3947
        %v4013 = vadd.f32 %v3738, %v3950
        %v4014 = vadd.f32 %v3739, %v3953
        %v4015 = vadd.f32 %v3740, %v3956
        %v4016 = vadd.f32 %v3741, %v3959
        %v4017 = vadd.f32 %v3742, %v3962
        %v4018 = vadd.f32 %v3743, %v3965
        %v4019 = vadd.f32 %v3744, %v3968
        %v4020 = vadd.f32 %v3745, %v3971
        %v4021 = vadd.f32 %v3746, %v3974
        %v4022 = vadd.f32 %v3747, %v3977
        %v4023 = vadd.f32 %v3748, %v3980
        %v4024 = vadd.f32 %v3749, %v3983
        %v4025 = vadd.f32 %v3750, %v3986
        %v4026 = vadd.f32 %v3751, %v3989
        %v4027 = vadd.f32 %v3752, %v3992
        %v4028 = vadd.f32 %v3753, %v3995
        %v4029 = vld [vmem:[%s2961 + $0x1] sm:$0xff]
        %v4030 = vld [vmem:[%s2961 + $0x9] sm:$0xff]
        %v4031 = vld [vmem:[%s2961 + $0x19] sm:$0xff]
        %v4032 = vld [vmem:[%s2961 + $0x21] sm:$0xff]
        %v4033 = vld [vmem:[%s2961 + $0x31] sm:$0xff]
        %v4034 = vld [vmem:[%s2961 + $0x39] sm:$0xff]
        %v4035 = vld [vmem:[%s2961 + $0x49] sm:$0xff]
        %v4036 = vld [vmem:[%s2961 + $0x51] sm:$0xff]
        %v4037 = vld [vmem:[%s2961 + $0x61] sm:$0xff]
        %v4038 = vld [vmem:[%s2961 + $0x69] sm:$0xff]
        %v4039 = vld [vmem:[%s2961 + $0x79] sm:$0xff]
        %v4040 = vld [vmem:[%s2961 + $0x81] sm:$0xff]
        %v4041 = vld [vmem:[%s2961 + $0x91] sm:$0xff]
        %v4042 = vld [vmem:[%s2961 + $0x99] sm:$0xff]
        %v4043 = vld [vmem:[%s2961 + $0xa9] sm:$0xff]
        %v4044 = vld [vmem:[%s2961 + $0xb1] sm:$0xff]
        %v4045 = vld [vmem:[%s2961 + $0xc1] sm:$0xff]
        %v4046 = vld [vmem:[%s2961 + $0xc9] sm:$0xff]
        %v4047 = vld [vmem:[%s2961 + $0xd9] sm:$0xff]
        %v4048 = vld [vmem:[%s2961 + $0xe1] sm:$0xff]
        %v4049 = vld [vmem:[%s2961 + $0xf1] sm:$0xff]
        %v4050 = vld [vmem:[%s2961 + $0xf9] sm:$0xff]
        %v4051 = vld [vmem:[%s2961 + $0x109] sm:$0xff]
        %v4052 = vld [vmem:[%s2961 + $0x111] sm:$0xff]
        %v4053 = vld [vmem:[%s2961 + $0x121] sm:$0xff]
        %v4054 = vld [vmem:[%s2961 + $0x129] sm:$0xff]
        %v4055 = vld [vmem:[%s2961 + $0x139] sm:$0xff]
        %v4056 = vld [vmem:[%s2961 + $0x141] sm:$0xff]
        %v4057 = vld [vmem:[%s2961 + $0x151] sm:$0xff]
        %v4058 = vld [vmem:[%s2961 + $0x159] sm:$0xff]
        %v4059 = vld [vmem:[%s2961 + $0x169] sm:$0xff]
        %v4060 = vld [vmem:[%s2961 + $0x171] sm:$0xff]
        %s4061 = scalar_lea.vmem %s3, 32
        %v4062 = vld [vmem:[%s4061] sm:$0xff]
        %v4064 = vsel %vm333, %v4029, 0
        %v4067 = vsel %vm333, %v4030, 0
        %v4070 = vsel %vm333, %v4031, 0
        %v4073 = vsel %vm333, %v4032, 0
        %v4076 = vsel %vm333, %v4033, 0
        %v4079 = vsel %vm333, %v4034, 0
        %v4082 = vsel %vm333, %v4035, 0
        %v4085 = vsel %vm333, %v4036, 0
        %v4088 = vsel %vm333, %v4037, 0
        %v4091 = vsel %vm333, %v4038, 0
        %v4094 = vsel %vm333, %v4039, 0
        %v4097 = vsel %vm333, %v4040, 0
        %v4100 = vsel %vm333, %v4041, 0
        %v4103 = vsel %vm333, %v4042, 0
        %v4106 = vsel %vm333, %v4043, 0
        %v4109 = vsel %vm333, %v4044, 0
        %v4112 = vsel %vm333, %v4045, 0
        %v4115 = vsel %vm333, %v4046, 0
        %v4118 = vsel %vm333, %v4047, 0
        %v4121 = vsel %vm333, %v4048, 0
        %v4124 = vsel %vm333, %v4049, 0
        %v4127 = vsel %vm333, %v4050, 0
        %v4130 = vsel %vm333, %v4051, 0
        %v4133 = vsel %vm333, %v4052, 0
        %v4136 = vsel %vm333, %v4053, 0
        %v4139 = vsel %vm333, %v4054, 0
        %v4142 = vsel %vm333, %v4055, 0
        %v4145 = vsel %vm333, %v4056, 0
        %v4148 = vsel %vm333, %v4057, 0
        %v4151 = vsel %vm333, %v4058, 0
        %v4154 = vsel %vm333, %v4059, 0
        %v4157 = vsel %vm333, %v4060, 0
        %4159 = vmatpush.msra.mxu0 0.0
        %4160 = vmatpush.msra.mxu0 0.0
        %4161 = vmatpush.msra.mxu0 0.0
        %4162 = vmatpush.msra.mxu0 0.0
        %4163 = vmatpush.msra.mxu0 0.0
        %4164 = vmatpush.msra.mxu0 0.0
        %4165 = vmatpush.msra.mxu0 0.0
        %4166 = vmatpush.msra.mxu0 0.0
        %4167 = vmatpush.msra.mxu0 0.0
        %4168 = vmatpush.msra.mxu0 0.0
        %4169 = vmatpush.msra.mxu0 0.0
        %4170 = vmatpush.msra.mxu0 0.0
        %4171 = vmatpush.msra.mxu0 0.0
        %4172 = vmatpush.msra.mxu0 0.0
        %4173 = vmatpush.msra.mxu0 0.0
        %4174 = vmatpush.msra.mxu0 %v4062
        %4175 = vmatmul.f32.gmra.mxu0 %v4064
        %v4176 = vpop.f32.mrf.mxu0
        %v4177 = vadd.f32 0.0, %v4176
        %4178 = vmatmul.f32.gmra.mxu0 %v4067
        %v4179 = vpop.f32.mrf.mxu0
        %v4180 = vadd.f32 0.0, %v4179
        %4181 = vmatmul.f32.gmra.mxu0 %v4070
        %v4182 = vpop.f32.mrf.mxu0
        %v4183 = vadd.f32 0.0, %v4182
        %4184 = vmatmul.f32.gmra.mxu0 %v4073
        %v4185 = vpop.f32.mrf.mxu0
        %v4186 = vadd.f32 0.0, %v4185
        %4187 = vmatmul.f32.gmra.mxu0 %v4076
        %v4188 = vpop.f32.mrf.mxu0
        %v4189 = vadd.f32 0.0, %v4188
        %4190 = vmatmul.f32.gmra.mxu0 %v4079
        %v4191 = vpop.f32.mrf.mxu0
        %v4192 = vadd.f32 0.0, %v4191
        %4193 = vmatmul.f32.gmra.mxu0 %v4082
        %v4194 = vpop.f32.mrf.mxu0
        %v4195 = vadd.f32 0.0, %v4194
        %4196 = vmatmul.f32.gmra.mxu0 %v4085
        %v4197 = vpop.f32.mrf.mxu0
        %v4198 = vadd.f32 0.0, %v4197
        %4199 = vmatmul.f32.gmra.mxu0 %v4088
        %v4200 = vpop.f32.mrf.mxu0
        %v4201 = vadd.f32 0.0, %v4200
        %4202 = vmatmul.f32.gmra.mxu0 %v4091
        %v4203 = vpop.f32.mrf.mxu0
        %v4204 = vadd.f32 0.0, %v4203
        %4205 = vmatmul.f32.gmra.mxu0 %v4094
        %v4206 = vpop.f32.mrf.mxu0
        %v4207 = vadd.f32 0.0, %v4206
        %4208 = vmatmul.f32.gmra.mxu0 %v4097
        %v4209 = vpop.f32.mrf.mxu0
        %v4210 = vadd.f32 0.0, %v4209
        %4211 = vmatmul.f32.gmra.mxu0 %v4100
        %v4212 = vpop.f32.mrf.mxu0
        %v4213 = vadd.f32 0.0, %v4212
        %4214 = vmatmul.f32.gmra.mxu0 %v4103
        %v4215 = vpop.f32.mrf.mxu0
        %v4216 = vadd.f32 0.0, %v4215
        %4217 = vmatmul.f32.gmra.mxu0 %v4106
        %v4218 = vpop.f32.mrf.mxu0
        %v4219 = vadd.f32 0.0, %v4218
        %4220 = vmatmul.f32.gmra.mxu0 %v4109
        %v4221 = vpop.f32.mrf.mxu0
        %v4222 = vadd.f32 0.0, %v4221
        %4223 = vmatmul.f32.gmra.mxu0 %v4112
        %v4224 = vpop.f32.mrf.mxu0
        %v4225 = vadd.f32 0.0, %v4224
        %4226 = vmatmul.f32.gmra.mxu0 %v4115
        %v4227 = vpop.f32.mrf.mxu0
        %v4228 = vadd.f32 0.0, %v4227
        %4229 = vmatmul.f32.gmra.mxu0 %v4118
        %v4230 = vpop.f32.mrf.mxu0
        %v4231 = vadd.f32 0.0, %v4230
        %4232 = vmatmul.f32.gmra.mxu0 %v4121
        %v4233 = vpop.f32.mrf.mxu0
        %v4234 = vadd.f32 0.0, %v4233
        %4235 = vmatmul.f32.gmra.mxu0 %v4124
        %v4236 = vpop.f32.mrf.mxu0
        %v4237 = vadd.f32 0.0, %v4236
        %4238 = vmatmul.f32.gmra.mxu0 %v4127
        %v4239 = vpop.f32.mrf.mxu0
        %v4240 = vadd.f32 0.0, %v4239
        %4241 = vmatmul.f32.gmra.mxu0 %v4130
        %v4242 = vpop.f32.mrf.mxu0
        %v4243 = vadd.f32 0.0, %v4242
        %4244 = vmatmul.f32.gmra.mxu0 %v4133
        %v4245 = vpop.f32.mrf.mxu0
        %v4246 = vadd.f32 0.0, %v4245
        %4247 = vmatmul.f32.gmra.mxu0 %v4136
        %v4248 = vpop.f32.mrf.mxu0
        %v4249 = vadd.f32 0.0, %v4248
        %4250 = vmatmul.f32.gmra.mxu0 %v4139
        %v4251 = vpop.f32.mrf.mxu0
        %v4252 = vadd.f32 0.0, %v4251
        %4253 = vmatmul.f32.gmra.mxu0 %v4142
        %v4254 = vpop.f32.mrf.mxu0
        %v4255 = vadd.f32 0.0, %v4254
        %4256 = vmatmul.f32.gmra.mxu0 %v4145
        %v4257 = vpop.f32.mrf.mxu0
        %v4258 = vadd.f32 0.0, %v4257
        %4259 = vmatmul.f32.gmra.mxu0 %v4148
        %v4260 = vpop.f32.mrf.mxu0
        %v4261 = vadd.f32 0.0, %v4260
        %4262 = vmatmul.f32.gmra.mxu0 %v4151
        %v4263 = vpop.f32.mrf.mxu0
        %v4264 = vadd.f32 0.0, %v4263
        %4265 = vmatmul.f32.gmra.mxu0 %v4154
        %v4266 = vpop.f32.mrf.mxu0
        %v4267 = vadd.f32 0.0, %v4266
        %4268 = vmatmul.f32.gmra.mxu0 %v4157
        %v4269 = vpop.f32.mrf.mxu0
        %v4270 = vadd.f32 0.0, %v4269
        %4271 = vdwg.mxu0
        %v4272 = vadd.f32 %v3997, %v4177
        %v4273 = vadd.f32 %v3998, %v4180
        %v4274 = vadd.f32 %v3999, %v4183
        %v4275 = vadd.f32 %v4000, %v4186
        %v4276 = vadd.f32 %v4001, %v4189
        %v4277 = vadd.f32 %v4002, %v4192
        %v4278 = vadd.f32 %v4003, %v4195
        %v4279 = vadd.f32 %v4004, %v4198
        %v4280 = vadd.f32 %v4005, %v4201
        %v4281 = vadd.f32 %v4006, %v4204
        %v4282 = vadd.f32 %v4007, %v4207
        %v4283 = vadd.f32 %v4008, %v4210
        %v4284 = vadd.f32 %v4009, %v4213
        %v4285 = vadd.f32 %v4010, %v4216
        %v4286 = vadd.f32 %v4011, %v4219
        %v4287 = vadd.f32 %v4012, %v4222
        %v4288 = vadd.f32 %v4013, %v4225
        %v4289 = vadd.f32 %v4014, %v4228
        %v4290 = vadd.f32 %v4015, %v4231
        %v4291 = vadd.f32 %v4016, %v4234
        %v4292 = vadd.f32 %v4017, %v4237
        %v4293 = vadd.f32 %v4018, %v4240
        %v4294 = vadd.f32 %v4019, %v4243
        %v4295 = vadd.f32 %v4020, %v4246
        %v4296 = vadd.f32 %v4021, %v4249
        %v4297 = vadd.f32 %v4022, %v4252
        %v4298 = vadd.f32 %v4023, %v4255
        %v4299 = vadd.f32 %v4024, %v4258
        %v4300 = vadd.f32 %v4025, %v4261
        %v4301 = vadd.f32 %v4026, %v4264
        %v4302 = vadd.f32 %v4027, %v4267
        %v4303 = vadd.f32 %v4028, %v4270
        %v4304 = vld [vmem:[%s2961 + $0x2] sm:$0xff]
        %v4305 = vld [vmem:[%s2961 + $0xa] sm:$0xff]
        %v4306 = vld [vmem:[%s2961 + $0x1a] sm:$0xff]
        %v4307 = vld [vmem:[%s2961 + $0x22] sm:$0xff]
        %v4308 = vld [vmem:[%s2961 + $0x32] sm:$0xff]
        %v4309 = vld [vmem:[%s2961 + $0x3a] sm:$0xff]
        %v4310 = vld [vmem:[%s2961 + $0x4a] sm:$0xff]
        %v4311 = vld [vmem:[%s2961 + $0x52] sm:$0xff]
        %v4312 = vld [vmem:[%s2961 + $0x62] sm:$0xff]
        %v4313 = vld [vmem:[%s2961 + $0x6a] sm:$0xff]
        %v4314 = vld [vmem:[%s2961 + $0x7a] sm:$0xff]
        %v4315 = vld [vmem:[%s2961 + $0x82] sm:$0xff]
        %v4316 = vld [vmem:[%s2961 + $0x92] sm:$0xff]
        %v4317 = vld [vmem:[%s2961 + $0x9a] sm:$0xff]
        %v4318 = vld [vmem:[%s2961 + $0xaa] sm:$0xff]
        %v4319 = vld [vmem:[%s2961 + $0xb2] sm:$0xff]
        %v4320 = vld [vmem:[%s2961 + $0xc2] sm:$0xff]
        %v4321 = vld [vmem:[%s2961 + $0xca] sm:$0xff]
        %v4322 = vld [vmem:[%s2961 + $0xda] sm:$0xff]
        %v4323 = vld [vmem:[%s2961 + $0xe2] sm:$0xff]
        %v4324 = vld [vmem:[%s2961 + $0xf2] sm:$0xff]
        %v4325 = vld [vmem:[%s2961 + $0xfa] sm:$0xff]
        %v4326 = vld [vmem:[%s2961 + $0x10a] sm:$0xff]
        %v4327 = vld [vmem:[%s2961 + $0x112] sm:$0xff]
        %v4328 = vld [vmem:[%s2961 + $0x122] sm:$0xff]
        %v4329 = vld [vmem:[%s2961 + $0x12a] sm:$0xff]
        %v4330 = vld [vmem:[%s2961 + $0x13a] sm:$0xff]
        %v4331 = vld [vmem:[%s2961 + $0x142] sm:$0xff]
        %v4332 = vld [vmem:[%s2961 + $0x152] sm:$0xff]
        %v4333 = vld [vmem:[%s2961 + $0x15a] sm:$0xff]
        %v4334 = vld [vmem:[%s2961 + $0x16a] sm:$0xff]
        %v4335 = vld [vmem:[%s2961 + $0x172] sm:$0xff]
        %s4336 = scalar_lea.vmem %s3, 40
        %v4337 = vld [vmem:[%s4336] sm:$0xff]
        %v4339 = vsel %vm333, %v4304, 0
        %v4342 = vsel %vm333, %v4305, 0
        %v4345 = vsel %vm333, %v4306, 0
        %v4348 = vsel %vm333, %v4307, 0
        %v4351 = vsel %vm333, %v4308, 0
        %v4354 = vsel %vm333, %v4309, 0
        %v4357 = vsel %vm333, %v4310, 0
        %v4360 = vsel %vm333, %v4311, 0
        %v4363 = vsel %vm333, %v4312, 0
        %v4366 = vsel %vm333, %v4313, 0
        %v4369 = vsel %vm333, %v4314, 0
        %v4372 = vsel %vm333, %v4315, 0
        %v4375 = vsel %vm333, %v4316, 0
        %v4378 = vsel %vm333, %v4317, 0
        %v4381 = vsel %vm333, %v4318, 0
        %v4384 = vsel %vm333, %v4319, 0
        %v4387 = vsel %vm333, %v4320, 0
        %v4390 = vsel %vm333, %v4321, 0
        %v4393 = vsel %vm333, %v4322, 0
        %v4396 = vsel %vm333, %v4323, 0
        %v4399 = vsel %vm333, %v4324, 0
        %v4402 = vsel %vm333, %v4325, 0
        %v4405 = vsel %vm333, %v4326, 0
        %v4408 = vsel %vm333, %v4327, 0
        %v4411 = vsel %vm333, %v4328, 0
        %v4414 = vsel %vm333, %v4329, 0
        %v4417 = vsel %vm333, %v4330, 0
        %v4420 = vsel %vm333, %v4331, 0
        %v4423 = vsel %vm333, %v4332, 0
        %v4426 = vsel %vm333, %v4333, 0
        %v4429 = vsel %vm333, %v4334, 0
        %v4432 = vsel %vm333, %v4335, 0
        %4434 = vmatpush.msra.mxu0 0.0
        %4435 = vmatpush.msra.mxu0 0.0
        %4436 = vmatpush.msra.mxu0 0.0
        %4437 = vmatpush.msra.mxu0 0.0
        %4438 = vmatpush.msra.mxu0 0.0
        %4439 = vmatpush.msra.mxu0 0.0
        %4440 = vmatpush.msra.mxu0 0.0
        %4441 = vmatpush.msra.mxu0 0.0
        %4442 = vmatpush.msra.mxu0 0.0
        %4443 = vmatpush.msra.mxu0 0.0
        %4444 = vmatpush.msra.mxu0 0.0
        %4445 = vmatpush.msra.mxu0 0.0
        %4446 = vmatpush.msra.mxu0 0.0
        %4447 = vmatpush.msra.mxu0 0.0
        %4448 = vmatpush.msra.mxu0 0.0
        %4449 = vmatpush.msra.mxu0 %v4337
        %4450 = vmatmul.f32.gmra.mxu0 %v4339
        %v4451 = vpop.f32.mrf.mxu0
        %v4452 = vadd.f32 0.0, %v4451
        %4453 = vmatmul.f32.gmra.mxu0 %v4342
        %v4454 = vpop.f32.mrf.mxu0
        %v4455 = vadd.f32 0.0, %v4454
        %4456 = vmatmul.f32.gmra.mxu0 %v4345
        %v4457 = vpop.f32.mrf.mxu0
        %v4458 = vadd.f32 0.0, %v4457
        %4459 = vmatmul.f32.gmra.mxu0 %v4348
        %v4460 = vpop.f32.mrf.mxu0
        %v4461 = vadd.f32 0.0, %v4460
        %4462 = vmatmul.f32.gmra.mxu0 %v4351
        %v4463 = vpop.f32.mrf.mxu0
        %v4464 = vadd.f32 0.0, %v4463
        %4465 = vmatmul.f32.gmra.mxu0 %v4354
        %v4466 = vpop.f32.mrf.mxu0
        %v4467 = vadd.f32 0.0, %v4466
        %4468 = vmatmul.f32.gmra.mxu0 %v4357
        %v4469 = vpop.f32.mrf.mxu0
        %v4470 = vadd.f32 0.0, %v4469
        %4471 = vmatmul.f32.gmra.mxu0 %v4360
        %v4472 = vpop.f32.mrf.mxu0
        %v4473 = vadd.f32 0.0, %v4472
        %4474 = vmatmul.f32.gmra.mxu0 %v4363
        %v4475 = vpop.f32.mrf.mxu0
        %v4476 = vadd.f32 0.0, %v4475
        %4477 = vmatmul.f32.gmra.mxu0 %v4366
        %v4478 = vpop.f32.mrf.mxu0
        %v4479 = vadd.f32 0.0, %v4478
        %4480 = vmatmul.f32.gmra.mxu0 %v4369
        %v4481 = vpop.f32.mrf.mxu0
        %v4482 = vadd.f32 0.0, %v4481
        %4483 = vmatmul.f32.gmra.mxu0 %v4372
        %v4484 = vpop.f32.mrf.mxu0
        %v4485 = vadd.f32 0.0, %v4484
        %4486 = vmatmul.f32.gmra.mxu0 %v4375
        %v4487 = vpop.f32.mrf.mxu0
        %v4488 = vadd.f32 0.0, %v4487
        %4489 = vmatmul.f32.gmra.mxu0 %v4378
        %v4490 = vpop.f32.mrf.mxu0
        %v4491 = vadd.f32 0.0, %v4490
        %4492 = vmatmul.f32.gmra.mxu0 %v4381
        %v4493 = vpop.f32.mrf.mxu0
        %v4494 = vadd.f32 0.0, %v4493
        %4495 = vmatmul.f32.gmra.mxu0 %v4384
        %v4496 = vpop.f32.mrf.mxu0
        %v4497 = vadd.f32 0.0, %v4496
        %4498 = vmatmul.f32.gmra.mxu0 %v4387
        %v4499 = vpop.f32.mrf.mxu0
        %v4500 = vadd.f32 0.0, %v4499
        %4501 = vmatmul.f32.gmra.mxu0 %v4390
        %v4502 = vpop.f32.mrf.mxu0
        %v4503 = vadd.f32 0.0, %v4502
        %4504 = vmatmul.f32.gmra.mxu0 %v4393
        %v4505 = vpop.f32.mrf.mxu0
        %v4506 = vadd.f32 0.0, %v4505
        %4507 = vmatmul.f32.gmra.mxu0 %v4396
        %v4508 = vpop.f32.mrf.mxu0
        %v4509 = vadd.f32 0.0, %v4508
        %4510 = vmatmul.f32.gmra.mxu0 %v4399
        %v4511 = vpop.f32.mrf.mxu0
        %v4512 = vadd.f32 0.0, %v4511
        %4513 = vmatmul.f32.gmra.mxu0 %v4402
        %v4514 = vpop.f32.mrf.mxu0
        %v4515 = vadd.f32 0.0, %v4514
        %4516 = vmatmul.f32.gmra.mxu0 %v4405
        %v4517 = vpop.f32.mrf.mxu0
        %v4518 = vadd.f32 0.0, %v4517
        %4519 = vmatmul.f32.gmra.mxu0 %v4408
        %v4520 = vpop.f32.mrf.mxu0
        %v4521 = vadd.f32 0.0, %v4520
        %4522 = vmatmul.f32.gmra.mxu0 %v4411
        %v4523 = vpop.f32.mrf.mxu0
        %v4524 = vadd.f32 0.0, %v4523
        %4525 = vmatmul.f32.gmra.mxu0 %v4414
        %v4526 = vpop.f32.mrf.mxu0
        %v4527 = vadd.f32 0.0, %v4526
        %4528 = vmatmul.f32.gmra.mxu0 %v4417
        %v4529 = vpop.f32.mrf.mxu0
        %v4530 = vadd.f32 0.0, %v4529
        %4531 = vmatmul.f32.gmra.mxu0 %v4420
        %v4532 = vpop.f32.mrf.mxu0
        %v4533 = vadd.f32 0.0, %v4532
        %4534 = vmatmul.f32.gmra.mxu0 %v4423
        %v4535 = vpop.f32.mrf.mxu0
        %v4536 = vadd.f32 0.0, %v4535
        %4537 = vmatmul.f32.gmra.mxu0 %v4426
        %v4538 = vpop.f32.mrf.mxu0
        %v4539 = vadd.f32 0.0, %v4538
        %4540 = vmatmul.f32.gmra.mxu0 %v4429
        %v4541 = vpop.f32.mrf.mxu0
        %v4542 = vadd.f32 0.0, %v4541
        %4543 = vmatmul.f32.gmra.mxu0 %v4432
        %v4544 = vpop.f32.mrf.mxu0
        %v4545 = vadd.f32 0.0, %v4544
        %4546 = vdwg.mxu0
        %v4547 = vadd.f32 %v4272, %v4452
        %v4548 = vadd.f32 %v4273, %v4455
        %v4549 = vadd.f32 %v4274, %v4458
        %v4550 = vadd.f32 %v4275, %v4461
        %v4551 = vadd.f32 %v4276, %v4464
        %v4552 = vadd.f32 %v4277, %v4467
        %v4553 = vadd.f32 %v4278, %v4470
        %v4554 = vadd.f32 %v4279, %v4473
        %v4555 = vadd.f32 %v4280, %v4476
        %v4556 = vadd.f32 %v4281, %v4479
        %v4557 = vadd.f32 %v4282, %v4482
        %v4558 = vadd.f32 %v4283, %v4485
        %v4559 = vadd.f32 %v4284, %v4488
        %v4560 = vadd.f32 %v4285, %v4491
        %v4561 = vadd.f32 %v4286, %v4494
        %v4562 = vadd.f32 %v4287, %v4497
        %v4563 = vadd.f32 %v4288, %v4500
        %v4564 = vadd.f32 %v4289, %v4503
        %v4565 = vadd.f32 %v4290, %v4506
        %v4566 = vadd.f32 %v4291, %v4509
        %v4567 = vadd.f32 %v4292, %v4512
        %v4568 = vadd.f32 %v4293, %v4515
        %v4569 = vadd.f32 %v4294, %v4518
        %v4570 = vadd.f32 %v4295, %v4521
        %v4571 = vadd.f32 %v4296, %v4524
        %v4572 = vadd.f32 %v4297, %v4527
        %v4573 = vadd.f32 %v4298, %v4530
        %v4574 = vadd.f32 %v4299, %v4533
        %v4575 = vadd.f32 %v4300, %v4536
        %v4576 = vadd.f32 %v4301, %v4539
        %v4577 = vadd.f32 %v4302, %v4542
        %v4578 = vadd.f32 %v4303, %v4545
        %s4579 = scalar_lea.vmem [#allocation3], 48
        %v4580 = vld [vmem:[%s4579] sm:$0xff]
        %v4581 = vld [vmem:[%s4579 + $0x8] sm:$0xff]
        %v4582 = vld [vmem:[%s4579 + $0x18] sm:$0xff]
        %v4583 = vld [vmem:[%s4579 + $0x20] sm:$0xff]
        %v4584 = vld [vmem:[%s4579 + $0x30] sm:$0xff]
        %v4585 = vld [vmem:[%s4579 + $0x38] sm:$0xff]
        %v4586 = vld [vmem:[%s4579 + $0x48] sm:$0xff]
        %v4587 = vld [vmem:[%s4579 + $0x50] sm:$0xff]
        %v4588 = vld [vmem:[%s4579 + $0x60] sm:$0xff]
        %v4589 = vld [vmem:[%s4579 + $0x68] sm:$0xff]
        %v4590 = vld [vmem:[%s4579 + $0x78] sm:$0xff]
        %v4591 = vld [vmem:[%s4579 + $0x80] sm:$0xff]
        %v4592 = vld [vmem:[%s4579 + $0x90] sm:$0xff]
        %v4593 = vld [vmem:[%s4579 + $0x98] sm:$0xff]
        %v4594 = vld [vmem:[%s4579 + $0xa8] sm:$0xff]
        %v4595 = vld [vmem:[%s4579 + $0xb0] sm:$0xff]
        %v4596 = vld [vmem:[%s4579 + $0xc0] sm:$0xff]
        %v4597 = vld [vmem:[%s4579 + $0xc8] sm:$0xff]
        %v4598 = vld [vmem:[%s4579 + $0xd8] sm:$0xff]
        %v4599 = vld [vmem:[%s4579 + $0xe0] sm:$0xff]
        %v4600 = vld [vmem:[%s4579 + $0xf0] sm:$0xff]
        %v4601 = vld [vmem:[%s4579 + $0xf8] sm:$0xff]
        %v4602 = vld [vmem:[%s4579 + $0x108] sm:$0xff]
        %v4603 = vld [vmem:[%s4579 + $0x110] sm:$0xff]
        %v4604 = vld [vmem:[%s4579 + $0x120] sm:$0xff]
        %v4605 = vld [vmem:[%s4579 + $0x128] sm:$0xff]
        %v4606 = vld [vmem:[%s4579 + $0x138] sm:$0xff]
        %v4607 = vld [vmem:[%s4579 + $0x140] sm:$0xff]
        %v4608 = vld [vmem:[%s4579 + $0x150] sm:$0xff]
        %v4609 = vld [vmem:[%s4579 + $0x158] sm:$0xff]
        %v4610 = vld [vmem:[%s4579 + $0x168] sm:$0xff]
        %v4611 = vld [vmem:[%s4579 + $0x170] sm:$0xff]
        %s4612 = scalar_lea.vmem %s3, 48
        %v4613 = vld [vmem:[%s4612] sm:$0xff]
        %v4615 = vsel %vm333, %v4580, 0
        %v4618 = vsel %vm333, %v4581, 0
        %v4621 = vsel %vm333, %v4582, 0
        %v4624 = vsel %vm333, %v4583, 0
        %v4627 = vsel %vm333, %v4584, 0
        %v4630 = vsel %vm333, %v4585, 0
        %v4633 = vsel %vm333, %v4586, 0
        %v4636 = vsel %vm333, %v4587, 0
        %v4639 = vsel %vm333, %v4588, 0
        %v4642 = vsel %vm333, %v4589, 0
        %v4645 = vsel %vm333, %v4590, 0
        %v4648 = vsel %vm333, %v4591, 0
        %v4651 = vsel %vm333, %v4592, 0
        %v4654 = vsel %vm333, %v4593, 0
        %v4657 = vsel %vm333, %v4594, 0
        %v4660 = vsel %vm333, %v4595, 0
        %v4663 = vsel %vm333, %v4596, 0
        %v4666 = vsel %vm333, %v4597, 0
        %v4669 = vsel %vm333, %v4598, 0
        %v4672 = vsel %vm333, %v4599, 0
        %v4675 = vsel %vm333, %v4600, 0
        %v4678 = vsel %vm333, %v4601, 0
        %v4681 = vsel %vm333, %v4602, 0
        %v4684 = vsel %vm333, %v4603, 0
        %v4687 = vsel %vm333, %v4604, 0
        %v4690 = vsel %vm333, %v4605, 0
        %v4693 = vsel %vm333, %v4606, 0
        %v4696 = vsel %vm333, %v4607, 0
        %v4699 = vsel %vm333, %v4608, 0
        %v4702 = vsel %vm333, %v4609, 0
        %v4705 = vsel %vm333, %v4610, 0
        %v4708 = vsel %vm333, %v4611, 0
        %4710 = vmatpush.msra.mxu0 0.0
        %4711 = vmatpush.msra.mxu0 0.0
        %4712 = vmatpush.msra.mxu0 0.0
        %4713 = vmatpush.msra.mxu0 0.0
        %4714 = vmatpush.msra.mxu0 0.0
        %4715 = vmatpush.msra.mxu0 0.0
        %4716 = vmatpush.msra.mxu0 0.0
        %4717 = vmatpush.msra.mxu0 0.0
        %4718 = vmatpush.msra.mxu0 0.0
        %4719 = vmatpush.msra.mxu0 0.0
        %4720 = vmatpush.msra.mxu0 0.0
        %4721 = vmatpush.msra.mxu0 0.0
        %4722 = vmatpush.msra.mxu0 0.0
        %4723 = vmatpush.msra.mxu0 0.0
        %4724 = vmatpush.msra.mxu0 0.0
        %4725 = vmatpush.msra.mxu0 %v4613
        %4726 = vmatmul.f32.gmra.mxu0 %v4615
        %v4727 = vpop.f32.mrf.mxu0
        %v4728 = vadd.f32 0.0, %v4727
        %4729 = vmatmul.f32.gmra.mxu0 %v4618
        %v4730 = vpop.f32.mrf.mxu0
        %v4731 = vadd.f32 0.0, %v4730
        %4732 = vmatmul.f32.gmra.mxu0 %v4621
        %v4733 = vpop.f32.mrf.mxu0
        %v4734 = vadd.f32 0.0, %v4733
        %4735 = vmatmul.f32.gmra.mxu0 %v4624
        %v4736 = vpop.f32.mrf.mxu0
        %v4737 = vadd.f32 0.0, %v4736
        %4738 = vmatmul.f32.gmra.mxu0 %v4627
        %v4739 = vpop.f32.mrf.mxu0
        %v4740 = vadd.f32 0.0, %v4739
        %4741 = vmatmul.f32.gmra.mxu0 %v4630
        %v4742 = vpop.f32.mrf.mxu0
        %v4743 = vadd.f32 0.0, %v4742
        %4744 = vmatmul.f32.gmra.mxu0 %v4633
        %v4745 = vpop.f32.mrf.mxu0
        %v4746 = vadd.f32 0.0, %v4745
        %4747 = vmatmul.f32.gmra.mxu0 %v4636
        %v4748 = vpop.f32.mrf.mxu0
        %v4749 = vadd.f32 0.0, %v4748
        %4750 = vmatmul.f32.gmra.mxu0 %v4639
        %v4751 = vpop.f32.mrf.mxu0
        %v4752 = vadd.f32 0.0, %v4751
        %4753 = vmatmul.f32.gmra.mxu0 %v4642
        %v4754 = vpop.f32.mrf.mxu0
        %v4755 = vadd.f32 0.0, %v4754
        %4756 = vmatmul.f32.gmra.mxu0 %v4645
        %v4757 = vpop.f32.mrf.mxu0
        %v4758 = vadd.f32 0.0, %v4757
        %4759 = vmatmul.f32.gmra.mxu0 %v4648
        %v4760 = vpop.f32.mrf.mxu0
        %v4761 = vadd.f32 0.0, %v4760
        %4762 = vmatmul.f32.gmra.mxu0 %v4651
        %v4763 = vpop.f32.mrf.mxu0
        %v4764 = vadd.f32 0.0, %v4763
        %4765 = vmatmul.f32.gmra.mxu0 %v4654
        %v4766 = vpop.f32.mrf.mxu0
        %v4767 = vadd.f32 0.0, %v4766
        %4768 = vmatmul.f32.gmra.mxu0 %v4657
        %v4769 = vpop.f32.mrf.mxu0
        %v4770 = vadd.f32 0.0, %v4769
        %4771 = vmatmul.f32.gmra.mxu0 %v4660
        %v4772 = vpop.f32.mrf.mxu0
        %v4773 = vadd.f32 0.0, %v4772
        %4774 = vmatmul.f32.gmra.mxu0 %v4663
        %v4775 = vpop.f32.mrf.mxu0
        %v4776 = vadd.f32 0.0, %v4775
        %4777 = vmatmul.f32.gmra.mxu0 %v4666
        %v4778 = vpop.f32.mrf.mxu0
        %v4779 = vadd.f32 0.0, %v4778
        %4780 = vmatmul.f32.gmra.mxu0 %v4669
        %v4781 = vpop.f32.mrf.mxu0
        %v4782 = vadd.f32 0.0, %v4781
        %4783 = vmatmul.f32.gmra.mxu0 %v4672
        %v4784 = vpop.f32.mrf.mxu0
        %v4785 = vadd.f32 0.0, %v4784
        %4786 = vmatmul.f32.gmra.mxu0 %v4675
        %v4787 = vpop.f32.mrf.mxu0
        %v4788 = vadd.f32 0.0, %v4787
        %4789 = vmatmul.f32.gmra.mxu0 %v4678
        %v4790 = vpop.f32.mrf.mxu0
        %v4791 = vadd.f32 0.0, %v4790
        %4792 = vmatmul.f32.gmra.mxu0 %v4681
        %v4793 = vpop.f32.mrf.mxu0
        %v4794 = vadd.f32 0.0, %v4793
        %4795 = vmatmul.f32.gmra.mxu0 %v4684
        %v4796 = vpop.f32.mrf.mxu0
        %v4797 = vadd.f32 0.0, %v4796
        %4798 = vmatmul.f32.gmra.mxu0 %v4687
        %v4799 = vpop.f32.mrf.mxu0
        %v4800 = vadd.f32 0.0, %v4799
        %4801 = vmatmul.f32.gmra.mxu0 %v4690
        %v4802 = vpop.f32.mrf.mxu0
        %v4803 = vadd.f32 0.0, %v4802
        %4804 = vmatmul.f32.gmra.mxu0 %v4693
        %v4805 = vpop.f32.mrf.mxu0
        %v4806 = vadd.f32 0.0, %v4805
        %4807 = vmatmul.f32.gmra.mxu0 %v4696
        %v4808 = vpop.f32.mrf.mxu0
        %v4809 = vadd.f32 0.0, %v4808
        %4810 = vmatmul.f32.gmra.mxu0 %v4699
        %v4811 = vpop.f32.mrf.mxu0
        %v4812 = vadd.f32 0.0, %v4811
        %4813 = vmatmul.f32.gmra.mxu0 %v4702
        %v4814 = vpop.f32.mrf.mxu0
        %v4815 = vadd.f32 0.0, %v4814
        %4816 = vmatmul.f32.gmra.mxu0 %v4705
        %v4817 = vpop.f32.mrf.mxu0
        %v4818 = vadd.f32 0.0, %v4817
        %4819 = vmatmul.f32.gmra.mxu0 %v4708
        %v4820 = vpop.f32.mrf.mxu0
        %v4821 = vadd.f32 0.0, %v4820
        %4822 = vdwg.mxu0
        %v4823 = vadd.f32 %v4547, %v4728
        %v4824 = vadd.f32 %v4548, %v4731
        %v4825 = vadd.f32 %v4549, %v4734
        %v4826 = vadd.f32 %v4550, %v4737
        %v4827 = vadd.f32 %v4551, %v4740
        %v4828 = vadd.f32 %v4552, %v4743
        %v4829 = vadd.f32 %v4553, %v4746
        %v4830 = vadd.f32 %v4554, %v4749
        %v4831 = vadd.f32 %v4555, %v4752
        %v4832 = vadd.f32 %v4556, %v4755
        %v4833 = vadd.f32 %v4557, %v4758
        %v4834 = vadd.f32 %v4558, %v4761
        %v4835 = vadd.f32 %v4559, %v4764
        %v4836 = vadd.f32 %v4560, %v4767
        %v4837 = vadd.f32 %v4561, %v4770
        %v4838 = vadd.f32 %v4562, %v4773
        %v4839 = vadd.f32 %v4563, %v4776
        %v4840 = vadd.f32 %v4564, %v4779
        %v4841 = vadd.f32 %v4565, %v4782
        %v4842 = vadd.f32 %v4566, %v4785
        %v4843 = vadd.f32 %v4567, %v4788
        %v4844 = vadd.f32 %v4568, %v4791
        %v4845 = vadd.f32 %v4569, %v4794
        %v4846 = vadd.f32 %v4570, %v4797
        %v4847 = vadd.f32 %v4571, %v4800
        %v4848 = vadd.f32 %v4572, %v4803
        %v4849 = vadd.f32 %v4573, %v4806
        %v4850 = vadd.f32 %v4574, %v4809
        %v4851 = vadd.f32 %v4575, %v4812
        %v4852 = vadd.f32 %v4576, %v4815
        %v4853 = vadd.f32 %v4577, %v4818
        %v4854 = vadd.f32 %v4578, %v4821
        %v4855 = vld [vmem:[%s4579 + $0x1] sm:$0xff]
        %v4856 = vld [vmem:[%s4579 + $0x9] sm:$0xff]
        %v4857 = vld [vmem:[%s4579 + $0x19] sm:$0xff]
        %v4858 = vld [vmem:[%s4579 + $0x21] sm:$0xff]
        %v4859 = vld [vmem:[%s4579 + $0x31] sm:$0xff]
        %v4860 = vld [vmem:[%s4579 + $0x39] sm:$0xff]
        %v4861 = vld [vmem:[%s4579 + $0x49] sm:$0xff]
        %v4862 = vld [vmem:[%s4579 + $0x51] sm:$0xff]
        %v4863 = vld [vmem:[%s4579 + $0x61] sm:$0xff]
        %v4864 = vld [vmem:[%s4579 + $0x69] sm:$0xff]
        %v4865 = vld [vmem:[%s4579 + $0x79] sm:$0xff]
        %v4866 = vld [vmem:[%s4579 + $0x81] sm:$0xff]
        %v4867 = vld [vmem:[%s4579 + $0x91] sm:$0xff]
        %v4868 = vld [vmem:[%s4579 + $0x99] sm:$0xff]
        %v4869 = vld [vmem:[%s4579 + $0xa9] sm:$0xff]
        %v4870 = vld [vmem:[%s4579 + $0xb1] sm:$0xff]
        %v4871 = vld [vmem:[%s4579 + $0xc1] sm:$0xff]
        %v4872 = vld [vmem:[%s4579 + $0xc9] sm:$0xff]
        %v4873 = vld [vmem:[%s4579 + $0xd9] sm:$0xff]
        %v4874 = vld [vmem:[%s4579 + $0xe1] sm:$0xff]
        %v4875 = vld [vmem:[%s4579 + $0xf1] sm:$0xff]
        %v4876 = vld [vmem:[%s4579 + $0xf9] sm:$0xff]
        %v4877 = vld [vmem:[%s4579 + $0x109] sm:$0xff]
        %v4878 = vld [vmem:[%s4579 + $0x111] sm:$0xff]
        %v4879 = vld [vmem:[%s4579 + $0x121] sm:$0xff]
        %v4880 = vld [vmem:[%s4579 + $0x129] sm:$0xff]
        %v4881 = vld [vmem:[%s4579 + $0x139] sm:$0xff]
        %v4882 = vld [vmem:[%s4579 + $0x141] sm:$0xff]
        %v4883 = vld [vmem:[%s4579 + $0x151] sm:$0xff]
        %v4884 = vld [vmem:[%s4579 + $0x159] sm:$0xff]
        %v4885 = vld [vmem:[%s4579 + $0x169] sm:$0xff]
        %v4886 = vld [vmem:[%s4579 + $0x171] sm:$0xff]
        %s4887 = scalar_lea.vmem %s3, 56
        %v4888 = vld [vmem:[%s4887] sm:$0xff]
        %v4890 = vsel %vm333, %v4855, 0
        %v4893 = vsel %vm333, %v4856, 0
        %v4896 = vsel %vm333, %v4857, 0
        %v4899 = vsel %vm333, %v4858, 0
        %v4902 = vsel %vm333, %v4859, 0
        %v4905 = vsel %vm333, %v4860, 0
        %v4908 = vsel %vm333, %v4861, 0
        %v4911 = vsel %vm333, %v4862, 0
        %v4914 = vsel %vm333, %v4863, 0
        %v4917 = vsel %vm333, %v4864, 0
        %v4920 = vsel %vm333, %v4865, 0
        %v4923 = vsel %vm333, %v4866, 0
        %v4926 = vsel %vm333, %v4867, 0
        %v4929 = vsel %vm333, %v4868, 0
        %v4932 = vsel %vm333, %v4869, 0
        %v4935 = vsel %vm333, %v4870, 0
        %v4938 = vsel %vm333, %v4871, 0
        %v4941 = vsel %vm333, %v4872, 0
        %v4944 = vsel %vm333, %v4873, 0
        %v4947 = vsel %vm333, %v4874, 0
        %v4950 = vsel %vm333, %v4875, 0
        %v4953 = vsel %vm333, %v4876, 0
        %v4956 = vsel %vm333, %v4877, 0
        %v4959 = vsel %vm333, %v4878, 0
        %v4962 = vsel %vm333, %v4879, 0
        %v4965 = vsel %vm333, %v4880, 0
        %v4968 = vsel %vm333, %v4881, 0
        %v4971 = vsel %vm333, %v4882, 0
        %v4974 = vsel %vm333, %v4883, 0
        %v4977 = vsel %vm333, %v4884, 0
        %v4980 = vsel %vm333, %v4885, 0
        %v4983 = vsel %vm333, %v4886, 0
        %4985 = vmatpush.msra.mxu0 0.0
        %4986 = vmatpush.msra.mxu0 0.0
        %4987 = vmatpush.msra.mxu0 0.0
        %4988 = vmatpush.msra.mxu0 0.0
        %4989 = vmatpush.msra.mxu0 0.0
        %4990 = vmatpush.msra.mxu0 0.0
        %4991 = vmatpush.msra.mxu0 0.0
        %4992 = vmatpush.msra.mxu0 0.0
        %4993 = vmatpush.msra.mxu0 0.0
        %4994 = vmatpush.msra.mxu0 0.0
        %4995 = vmatpush.msra.mxu0 0.0
        %4996 = vmatpush.msra.mxu0 0.0
        %4997 = vmatpush.msra.mxu0 0.0
        %4998 = vmatpush.msra.mxu0 0.0
        %4999 = vmatpush.msra.mxu0 0.0
        %5000 = vmatpush.msra.mxu0 %v4888
        %5001 = vmatmul.f32.gmra.mxu0 %v4890
        %v5002 = vpop.f32.mrf.mxu0
        %v5003 = vadd.f32 0.0, %v5002
        %5004 = vmatmul.f32.gmra.mxu0 %v4893
        %v5005 = vpop.f32.mrf.mxu0
        %v5006 = vadd.f32 0.0, %v5005
        %5007 = vmatmul.f32.gmra.mxu0 %v4896
        %v5008 = vpop.f32.mrf.mxu0
        %v5009 = vadd.f32 0.0, %v5008
        %5010 = vmatmul.f32.gmra.mxu0 %v4899
        %v5011 = vpop.f32.mrf.mxu0
        %v5012 = vadd.f32 0.0, %v5011
        %5013 = vmatmul.f32.gmra.mxu0 %v4902
        %v5014 = vpop.f32.mrf.mxu0
        %v5015 = vadd.f32 0.0, %v5014
        %5016 = vmatmul.f32.gmra.mxu0 %v4905
        %v5017 = vpop.f32.mrf.mxu0
        %v5018 = vadd.f32 0.0, %v5017
        %5019 = vmatmul.f32.gmra.mxu0 %v4908
        %v5020 = vpop.f32.mrf.mxu0
        %v5021 = vadd.f32 0.0, %v5020
        %5022 = vmatmul.f32.gmra.mxu0 %v4911
        %v5023 = vpop.f32.mrf.mxu0
        %v5024 = vadd.f32 0.0, %v5023
        %5025 = vmatmul.f32.gmra.mxu0 %v4914
        %v5026 = vpop.f32.mrf.mxu0
        %v5027 = vadd.f32 0.0, %v5026
        %5028 = vmatmul.f32.gmra.mxu0 %v4917
        %v5029 = vpop.f32.mrf.mxu0
        %v5030 = vadd.f32 0.0, %v5029
        %5031 = vmatmul.f32.gmra.mxu0 %v4920
        %v5032 = vpop.f32.mrf.mxu0
        %v5033 = vadd.f32 0.0, %v5032
        %5034 = vmatmul.f32.gmra.mxu0 %v4923
        %v5035 = vpop.f32.mrf.mxu0
        %v5036 = vadd.f32 0.0, %v5035
        %5037 = vmatmul.f32.gmra.mxu0 %v4926
        %v5038 = vpop.f32.mrf.mxu0
        %v5039 = vadd.f32 0.0, %v5038
        %5040 = vmatmul.f32.gmra.mxu0 %v4929
        %v5041 = vpop.f32.mrf.mxu0
        %v5042 = vadd.f32 0.0, %v5041
        %5043 = vmatmul.f32.gmra.mxu0 %v4932
        %v5044 = vpop.f32.mrf.mxu0
        %v5045 = vadd.f32 0.0, %v5044
        %5046 = vmatmul.f32.gmra.mxu0 %v4935
        %v5047 = vpop.f32.mrf.mxu0
        %v5048 = vadd.f32 0.0, %v5047
        %5049 = vmatmul.f32.gmra.mxu0 %v4938
        %v5050 = vpop.f32.mrf.mxu0
        %v5051 = vadd.f32 0.0, %v5050
        %5052 = vmatmul.f32.gmra.mxu0 %v4941
        %v5053 = vpop.f32.mrf.mxu0
        %v5054 = vadd.f32 0.0, %v5053
        %5055 = vmatmul.f32.gmra.mxu0 %v4944
        %v5056 = vpop.f32.mrf.mxu0
        %v5057 = vadd.f32 0.0, %v5056
        %5058 = vmatmul.f32.gmra.mxu0 %v4947
        %v5059 = vpop.f32.mrf.mxu0
        %v5060 = vadd.f32 0.0, %v5059
        %5061 = vmatmul.f32.gmra.mxu0 %v4950
        %v5062 = vpop.f32.mrf.mxu0
        %v5063 = vadd.f32 0.0, %v5062
        %5064 = vmatmul.f32.gmra.mxu0 %v4953
        %v5065 = vpop.f32.mrf.mxu0
        %v5066 = vadd.f32 0.0, %v5065
        %5067 = vmatmul.f32.gmra.mxu0 %v4956
        %v5068 = vpop.f32.mrf.mxu0
        %v5069 = vadd.f32 0.0, %v5068
        %5070 = vmatmul.f32.gmra.mxu0 %v4959
        %v5071 = vpop.f32.mrf.mxu0
        %v5072 = vadd.f32 0.0, %v5071
        %5073 = vmatmul.f32.gmra.mxu0 %v4962
        %v5074 = vpop.f32.mrf.mxu0
        %v5075 = vadd.f32 0.0, %v5074
        %5076 = vmatmul.f32.gmra.mxu0 %v4965
        %v5077 = vpop.f32.mrf.mxu0
        %v5078 = vadd.f32 0.0, %v5077
        %5079 = vmatmul.f32.gmra.mxu0 %v4968
        %v5080 = vpop.f32.mrf.mxu0
        %v5081 = vadd.f32 0.0, %v5080
        %5082 = vmatmul.f32.gmra.mxu0 %v4971
        %v5083 = vpop.f32.mrf.mxu0
        %v5084 = vadd.f32 0.0, %v5083
        %5085 = vmatmul.f32.gmra.mxu0 %v4974
        %v5086 = vpop.f32.mrf.mxu0
        %v5087 = vadd.f32 0.0, %v5086
        %5088 = vmatmul.f32.gmra.mxu0 %v4977
        %v5089 = vpop.f32.mrf.mxu0
        %v5090 = vadd.f32 0.0, %v5089
        %5091 = vmatmul.f32.gmra.mxu0 %v4980
        %v5092 = vpop.f32.mrf.mxu0
        %v5093 = vadd.f32 0.0, %v5092
        %5094 = vmatmul.f32.gmra.mxu0 %v4983
        %v5095 = vpop.f32.mrf.mxu0
        %v5096 = vadd.f32 0.0, %v5095
        %5097 = vdwg.mxu0
        %v5098 = vadd.f32 %v4823, %v5003
        %v5099 = vadd.f32 %v4824, %v5006
        %v5100 = vadd.f32 %v4825, %v5009
        %v5101 = vadd.f32 %v4826, %v5012
        %v5102 = vadd.f32 %v4827, %v5015
        %v5103 = vadd.f32 %v4828, %v5018
        %v5104 = vadd.f32 %v4829, %v5021
        %v5105 = vadd.f32 %v4830, %v5024
        %v5106 = vadd.f32 %v4831, %v5027
        %v5107 = vadd.f32 %v4832, %v5030
        %v5108 = vadd.f32 %v4833, %v5033
        %v5109 = vadd.f32 %v4834, %v5036
        %v5110 = vadd.f32 %v4835, %v5039
        %v5111 = vadd.f32 %v4836, %v5042
        %v5112 = vadd.f32 %v4837, %v5045
        %v5113 = vadd.f32 %v4838, %v5048
        %v5114 = vadd.f32 %v4839, %v5051
        %v5115 = vadd.f32 %v4840, %v5054
        %v5116 = vadd.f32 %v4841, %v5057
        %v5117 = vadd.f32 %v4842, %v5060
        %v5118 = vadd.f32 %v4843, %v5063
        %v5119 = vadd.f32 %v4844, %v5066
        %v5120 = vadd.f32 %v4845, %v5069
        %v5121 = vadd.f32 %v4846, %v5072
        %v5122 = vadd.f32 %v4847, %v5075
        %v5123 = vadd.f32 %v4848, %v5078
        %v5124 = vadd.f32 %v4849, %v5081
        %v5125 = vadd.f32 %v4850, %v5084
        %v5126 = vadd.f32 %v4851, %v5087
        %v5127 = vadd.f32 %v4852, %v5090
        %v5128 = vadd.f32 %v4853, %v5093
        %v5129 = vadd.f32 %v4854, %v5096
        %v5130 = vld [vmem:[%s4579 + $0x2] sm:$0xff]
        %v5131 = vld [vmem:[%s4579 + $0xa] sm:$0xff]
        %v5132 = vld [vmem:[%s4579 + $0x1a] sm:$0xff]
        %v5133 = vld [vmem:[%s4579 + $0x22] sm:$0xff]
        %v5134 = vld [vmem:[%s4579 + $0x32] sm:$0xff]
        %v5135 = vld [vmem:[%s4579 + $0x3a] sm:$0xff]
        %v5136 = vld [vmem:[%s4579 + $0x4a] sm:$0xff]
        %v5137 = vld [vmem:[%s4579 + $0x52] sm:$0xff]
        %v5138 = vld [vmem:[%s4579 + $0x62] sm:$0xff]
        %v5139 = vld [vmem:[%s4579 + $0x6a] sm:$0xff]
        %v5140 = vld [vmem:[%s4579 + $0x7a] sm:$0xff]
        %v5141 = vld [vmem:[%s4579 + $0x82] sm:$0xff]
        %v5142 = vld [vmem:[%s4579 + $0x92] sm:$0xff]
        %v5143 = vld [vmem:[%s4579 + $0x9a] sm:$0xff]
        %v5144 = vld [vmem:[%s4579 + $0xaa] sm:$0xff]
        %v5145 = vld [vmem:[%s4579 + $0xb2] sm:$0xff]
        %v5146 = vld [vmem:[%s4579 + $0xc2] sm:$0xff]
        %v5147 = vld [vmem:[%s4579 + $0xca] sm:$0xff]
        %v5148 = vld [vmem:[%s4579 + $0xda] sm:$0xff]
        %v5149 = vld [vmem:[%s4579 + $0xe2] sm:$0xff]
        %v5150 = vld [vmem:[%s4579 + $0xf2] sm:$0xff]
        %v5151 = vld [vmem:[%s4579 + $0xfa] sm:$0xff]
        %v5152 = vld [vmem:[%s4579 + $0x10a] sm:$0xff]
        %v5153 = vld [vmem:[%s4579 + $0x112] sm:$0xff]
        %v5154 = vld [vmem:[%s4579 + $0x122] sm:$0xff]
        %v5155 = vld [vmem:[%s4579 + $0x12a] sm:$0xff]
        %v5156 = vld [vmem:[%s4579 + $0x13a] sm:$0xff]
        %v5157 = vld [vmem:[%s4579 + $0x142] sm:$0xff]
        %v5158 = vld [vmem:[%s4579 + $0x152] sm:$0xff]
        %v5159 = vld [vmem:[%s4579 + $0x15a] sm:$0xff]
        %v5160 = vld [vmem:[%s4579 + $0x16a] sm:$0xff]
        %v5161 = vld [vmem:[%s4579 + $0x172] sm:$0xff]
        %s5162 = scalar_lea.vmem %s3, 64
        %v5163 = vld [vmem:[%s5162] sm:$0xff]
        %v5165 = vsel %vm333, %v5130, 0
        %v5168 = vsel %vm333, %v5131, 0
        %v5171 = vsel %vm333, %v5132, 0
        %v5174 = vsel %vm333, %v5133, 0
        %v5177 = vsel %vm333, %v5134, 0
        %v5180 = vsel %vm333, %v5135, 0
        %v5183 = vsel %vm333, %v5136, 0
        %v5186 = vsel %vm333, %v5137, 0
        %v5189 = vsel %vm333, %v5138, 0
        %v5192 = vsel %vm333, %v5139, 0
        %v5195 = vsel %vm333, %v5140, 0
        %v5198 = vsel %vm333, %v5141, 0
        %v5201 = vsel %vm333, %v5142, 0
        %v5204 = vsel %vm333, %v5143, 0
        %v5207 = vsel %vm333, %v5144, 0
        %v5210 = vsel %vm333, %v5145, 0
        %v5213 = vsel %vm333, %v5146, 0
        %v5216 = vsel %vm333, %v5147, 0
        %v5219 = vsel %vm333, %v5148, 0
        %v5222 = vsel %vm333, %v5149, 0
        %v5225 = vsel %vm333, %v5150, 0
        %v5228 = vsel %vm333, %v5151, 0
        %v5231 = vsel %vm333, %v5152, 0
        %v5234 = vsel %vm333, %v5153, 0
        %v5237 = vsel %vm333, %v5154, 0
        %v5240 = vsel %vm333, %v5155, 0
        %v5243 = vsel %vm333, %v5156, 0
        %v5246 = vsel %vm333, %v5157, 0
        %v5249 = vsel %vm333, %v5158, 0
        %v5252 = vsel %vm333, %v5159, 0
        %v5255 = vsel %vm333, %v5160, 0
        %v5258 = vsel %vm333, %v5161, 0
        %5260 = vmatpush.msra.mxu0 0.0
        %5261 = vmatpush.msra.mxu0 0.0
        %5262 = vmatpush.msra.mxu0 0.0
        %5263 = vmatpush.msra.mxu0 0.0
        %5264 = vmatpush.msra.mxu0 0.0
        %5265 = vmatpush.msra.mxu0 0.0
        %5266 = vmatpush.msra.mxu0 0.0
        %5267 = vmatpush.msra.mxu0 0.0
        %5268 = vmatpush.msra.mxu0 0.0
        %5269 = vmatpush.msra.mxu0 0.0
        %5270 = vmatpush.msra.mxu0 0.0
        %5271 = vmatpush.msra.mxu0 0.0
        %5272 = vmatpush.msra.mxu0 0.0
        %5273 = vmatpush.msra.mxu0 0.0
        %5274 = vmatpush.msra.mxu0 0.0
        %5275 = vmatpush.msra.mxu0 %v5163
        %5276 = vmatmul.f32.gmra.mxu0 %v5165
        %v5277 = vpop.f32.mrf.mxu0
        %v5278 = vadd.f32 0.0, %v5277
        %5279 = vmatmul.f32.gmra.mxu0 %v5168
        %v5280 = vpop.f32.mrf.mxu0
        %v5281 = vadd.f32 0.0, %v5280
        %5282 = vmatmul.f32.gmra.mxu0 %v5171
        %v5283 = vpop.f32.mrf.mxu0
        %v5284 = vadd.f32 0.0, %v5283
        %5285 = vmatmul.f32.gmra.mxu0 %v5174
        %v5286 = vpop.f32.mrf.mxu0
        %v5287 = vadd.f32 0.0, %v5286
        %5288 = vmatmul.f32.gmra.mxu0 %v5177
        %v5289 = vpop.f32.mrf.mxu0
        %v5290 = vadd.f32 0.0, %v5289
        %5291 = vmatmul.f32.gmra.mxu0 %v5180
        %v5292 = vpop.f32.mrf.mxu0
        %v5293 = vadd.f32 0.0, %v5292
        %5294 = vmatmul.f32.gmra.mxu0 %v5183
        %v5295 = vpop.f32.mrf.mxu0
        %v5296 = vadd.f32 0.0, %v5295
        %5297 = vmatmul.f32.gmra.mxu0 %v5186
        %v5298 = vpop.f32.mrf.mxu0
        %v5299 = vadd.f32 0.0, %v5298
        %5300 = vmatmul.f32.gmra.mxu0 %v5189
        %v5301 = vpop.f32.mrf.mxu0
        %v5302 = vadd.f32 0.0, %v5301
        %5303 = vmatmul.f32.gmra.mxu0 %v5192
        %v5304 = vpop.f32.mrf.mxu0
        %v5305 = vadd.f32 0.0, %v5304
        %5306 = vmatmul.f32.gmra.mxu0 %v5195
        %v5307 = vpop.f32.mrf.mxu0
        %v5308 = vadd.f32 0.0, %v5307
        %5309 = vmatmul.f32.gmra.mxu0 %v5198
        %v5310 = vpop.f32.mrf.mxu0
        %v5311 = vadd.f32 0.0, %v5310
        %5312 = vmatmul.f32.gmra.mxu0 %v5201
        %v5313 = vpop.f32.mrf.mxu0
        %v5314 = vadd.f32 0.0, %v5313
        %5315 = vmatmul.f32.gmra.mxu0 %v5204
        %v5316 = vpop.f32.mrf.mxu0
        %v5317 = vadd.f32 0.0, %v5316
        %5318 = vmatmul.f32.gmra.mxu0 %v5207
        %v5319 = vpop.f32.mrf.mxu0
        %v5320 = vadd.f32 0.0, %v5319
        %5321 = vmatmul.f32.gmra.mxu0 %v5210
        %v5322 = vpop.f32.mrf.mxu0
        %v5323 = vadd.f32 0.0, %v5322
        %5324 = vmatmul.f32.gmra.mxu0 %v5213
        %v5325 = vpop.f32.mrf.mxu0
        %v5326 = vadd.f32 0.0, %v5325
        %5327 = vmatmul.f32.gmra.mxu0 %v5216
        %v5328 = vpop.f32.mrf.mxu0
        %v5329 = vadd.f32 0.0, %v5328
        %5330 = vmatmul.f32.gmra.mxu0 %v5219
        %v5331 = vpop.f32.mrf.mxu0
        %v5332 = vadd.f32 0.0, %v5331
        %5333 = vmatmul.f32.gmra.mxu0 %v5222
        %v5334 = vpop.f32.mrf.mxu0
        %v5335 = vadd.f32 0.0, %v5334
        %5336 = vmatmul.f32.gmra.mxu0 %v5225
        %v5337 = vpop.f32.mrf.mxu0
        %v5338 = vadd.f32 0.0, %v5337
        %5339 = vmatmul.f32.gmra.mxu0 %v5228
        %v5340 = vpop.f32.mrf.mxu0
        %v5341 = vadd.f32 0.0, %v5340
        %5342 = vmatmul.f32.gmra.mxu0 %v5231
        %v5343 = vpop.f32.mrf.mxu0
        %v5344 = vadd.f32 0.0, %v5343
        %5345 = vmatmul.f32.gmra.mxu0 %v5234
        %v5346 = vpop.f32.mrf.mxu0
        %v5347 = vadd.f32 0.0, %v5346
        %5348 = vmatmul.f32.gmra.mxu0 %v5237
        %v5349 = vpop.f32.mrf.mxu0
        %v5350 = vadd.f32 0.0, %v5349
        %5351 = vmatmul.f32.gmra.mxu0 %v5240
        %v5352 = vpop.f32.mrf.mxu0
        %v5353 = vadd.f32 0.0, %v5352
        %5354 = vmatmul.f32.gmra.mxu0 %v5243
        %v5355 = vpop.f32.mrf.mxu0
        %v5356 = vadd.f32 0.0, %v5355
        %5357 = vmatmul.f32.gmra.mxu0 %v5246
        %v5358 = vpop.f32.mrf.mxu0
        %v5359 = vadd.f32 0.0, %v5358
        %5360 = vmatmul.f32.gmra.mxu0 %v5249
        %v5361 = vpop.f32.mrf.mxu0
        %v5362 = vadd.f32 0.0, %v5361
        %5363 = vmatmul.f32.gmra.mxu0 %v5252
        %v5364 = vpop.f32.mrf.mxu0
        %v5365 = vadd.f32 0.0, %v5364
        %5366 = vmatmul.f32.gmra.mxu0 %v5255
        %v5367 = vpop.f32.mrf.mxu0
        %v5368 = vadd.f32 0.0, %v5367
        %5369 = vmatmul.f32.gmra.mxu0 %v5258
        %v5370 = vpop.f32.mrf.mxu0
        %v5371 = vadd.f32 0.0, %v5370
        %5372 = vdwg.mxu0
        %v5373 = vadd.f32 %v5098, %v5278
        %v5374 = vadd.f32 %v5099, %v5281
        %v5375 = vadd.f32 %v5100, %v5284
        %v5376 = vadd.f32 %v5101, %v5287
        %v5377 = vadd.f32 %v5102, %v5290
        %v5378 = vadd.f32 %v5103, %v5293
        %v5379 = vadd.f32 %v5104, %v5296
        %v5380 = vadd.f32 %v5105, %v5299
        %v5381 = vadd.f32 %v5106, %v5302
        %v5382 = vadd.f32 %v5107, %v5305
        %v5383 = vadd.f32 %v5108, %v5308
        %v5384 = vadd.f32 %v5109, %v5311
        %v5385 = vadd.f32 %v5110, %v5314
        %v5386 = vadd.f32 %v5111, %v5317
        %v5387 = vadd.f32 %v5112, %v5320
        %v5388 = vadd.f32 %v5113, %v5323
        %v5389 = vadd.f32 %v5114, %v5326
        %v5390 = vadd.f32 %v5115, %v5329
        %v5391 = vadd.f32 %v5116, %v5332
        %v5392 = vadd.f32 %v5117, %v5335
        %v5393 = vadd.f32 %v5118, %v5338
        %v5394 = vadd.f32 %v5119, %v5341
        %v5395 = vadd.f32 %v5120, %v5344
        %v5396 = vadd.f32 %v5121, %v5347
        %v5397 = vadd.f32 %v5122, %v5350
        %v5398 = vadd.f32 %v5123, %v5353
        %v5399 = vadd.f32 %v5124, %v5356
        %v5400 = vadd.f32 %v5125, %v5359
        %v5401 = vadd.f32 %v5126, %v5362
        %v5402 = vadd.f32 %v5127, %v5365
        %v5403 = vadd.f32 %v5128, %v5368
        %v5404 = vadd.f32 %v5129, %v5371
        %v5405 = vld [vmem:[%s4] sm:$0x1]
        %v5407 = vperm.slane %v5405, 0
        %v5409 = vadd.f32 %v5373, %v5407
        %v5410 = vadd.f32 %v5374, %v5407
        %v5411 = vadd.f32 %v5375, %v5407
        %v5412 = vadd.f32 %v5376, %v5407
        %v5413 = vadd.f32 %v5377, %v5407
        %v5414 = vadd.f32 %v5378, %v5407
        %v5415 = vadd.f32 %v5379, %v5407
        %v5416 = vadd.f32 %v5380, %v5407
        %v5417 = vadd.f32 %v5381, %v5407
        %v5418 = vadd.f32 %v5382, %v5407
        %v5419 = vadd.f32 %v5383, %v5407
        %v5420 = vadd.f32 %v5384, %v5407
        %v5421 = vadd.f32 %v5385, %v5407
        %v5422 = vadd.f32 %v5386, %v5407
        %v5423 = vadd.f32 %v5387, %v5407
        %v5424 = vadd.f32 %v5388, %v5407
        %v5425 = vadd.f32 %v5389, %v5407
        %v5426 = vadd.f32 %v5390, %v5407
        %v5427 = vadd.f32 %v5391, %v5407
        %v5428 = vadd.f32 %v5392, %v5407
        %v5429 = vadd.f32 %v5393, %v5407
        %v5430 = vadd.f32 %v5394, %v5407
        %v5431 = vadd.f32 %v5395, %v5407
        %v5432 = vadd.f32 %v5396, %v5407
        %v5433 = vadd.f32 %v5397, %v5407
        %v5434 = vadd.f32 %v5398, %v5407
        %v5435 = vadd.f32 %v5399, %v5407
        %v5436 = vadd.f32 %v5400, %v5407
        %v5437 = vadd.f32 %v5401, %v5407
        %v5438 = vadd.f32 %v5402, %v5407
        %v5439 = vadd.f32 %v5403, %v5407
        %v5440 = vadd.f32 %v5404, %v5407
        %v5441 = vmax.f32 %v5409, 0.0
        %v5442 = vmax.f32 %v5410, 0.0
        %v5443 = vmax.f32 %v5411, 0.0
        %v5444 = vmax.f32 %v5412, 0.0
        %v5445 = vmax.f32 %v5413, 0.0
        %v5446 = vmax.f32 %v5414, 0.0
        %v5447 = vmax.f32 %v5415, 0.0
        %v5448 = vmax.f32 %v5416, 0.0
        %v5449 = vmax.f32 %v5417, 0.0
        %v5450 = vmax.f32 %v5418, 0.0
        %v5451 = vmax.f32 %v5419, 0.0
        %v5452 = vmax.f32 %v5420, 0.0
        %v5453 = vmax.f32 %v5421, 0.0
        %v5454 = vmax.f32 %v5422, 0.0
        %v5455 = vmax.f32 %v5423, 0.0
        %v5456 = vmax.f32 %v5424, 0.0
        %v5457 = vmax.f32 %v5425, 0.0
        %v5458 = vmax.f32 %v5426, 0.0
        %v5459 = vmax.f32 %v5427, 0.0
        %v5460 = vmax.f32 %v5428, 0.0
        %v5461 = vmax.f32 %v5429, 0.0
        %v5462 = vmax.f32 %v5430, 0.0
        %v5463 = vmax.f32 %v5431, 0.0
        %v5464 = vmax.f32 %v5432, 0.0
        %v5465 = vmax.f32 %v5433, 0.0
        %v5466 = vmax.f32 %v5434, 0.0
        %v5467 = vmax.f32 %v5435, 0.0
        %v5468 = vmax.f32 %v5436, 0.0
        %v5469 = vmax.f32 %v5437, 0.0
        %v5470 = vmax.f32 %v5438, 0.0
        %v5471 = vmax.f32 %v5439, 0.0
        %v5472 = vmax.f32 %v5440, 0.0
        %v5473 = vld [vmem:[%s5] sm:$0xff]
        %v5474 = vld [vmem:[%s6] sm:$0xff]
        %5476 = vset.pattern.permute.xlu0 0
        %5477 = vperm.xlu0 %5476, %v5474
        %v5478 = vpop.permute.xlu0 %5477
        %v5481 = vsel %vm333, %v5473, 0
        %v5484 = vsel %vm333, %v5441, 0
        %v5487 = vsel %vm333, %v5442, 0
        %v5490 = vsel %vm333, %v5443, 0
        %v5493 = vsel %vm333, %v5444, 0
        %v5496 = vsel %vm333, %v5445, 0
        %v5499 = vsel %vm333, %v5446, 0
        %v5502 = vsel %vm333, %v5447, 0
        %v5505 = vsel %vm333, %v5448, 0
        %v5508 = vsel %vm333, %v5449, 0
        %v5511 = vsel %vm333, %v5450, 0
        %v5514 = vsel %vm333, %v5451, 0
        %v5517 = vsel %vm333, %v5452, 0
        %v5520 = vsel %vm333, %v5453, 0
        %v5523 = vsel %vm333, %v5454, 0
        %v5526 = vsel %vm333, %v5455, 0
        %v5529 = vsel %vm333, %v5456, 0
        %v5532 = vsel %vm333, %v5457, 0
        %v5535 = vsel %vm333, %v5458, 0
        %v5538 = vsel %vm333, %v5459, 0
        %v5541 = vsel %vm333, %v5460, 0
        %v5544 = vsel %vm333, %v5461, 0
        %v5547 = vsel %vm333, %v5462, 0
        %v5550 = vsel %vm333, %v5463, 0
        %v5553 = vsel %vm333, %v5464, 0
        %v5556 = vsel %vm333, %v5465, 0
        %v5559 = vsel %vm333, %v5466, 0
        %v5562 = vsel %vm333, %v5467, 0
        %v5565 = vsel %vm333, %v5468, 0
        %v5568 = vsel %vm333, %v5469, 0
        %v5571 = vsel %vm333, %v5470, 0
        %v5574 = vsel %vm333, %v5471, 0
        %v5577 = vsel %vm333, %v5472, 0
        %5579 = vmatpush.xpose.msra.mxu0 %v5529
        %5580 = vmatpush.xpose.msra.mxu0 %v5526
        %5581 = vmatpush.xpose.msra.mxu0 %v5523
        %5582 = vmatpush.xpose.msra.mxu0 %v5520
        %5583 = vmatpush.xpose.msra.mxu0 %v5517
        %5584 = vmatpush.xpose.msra.mxu0 %v5514
        %5585 = vmatpush.xpose.msra.mxu0 %v5511
        %5586 = vmatpush.xpose.msra.mxu0 %v5508
        %5587 = vmatpush.xpose.msra.mxu0 %v5505
        %5588 = vmatpush.xpose.msra.mxu0 %v5502
        %5589 = vmatpush.xpose.msra.mxu0 %v5499
        %5590 = vmatpush.xpose.msra.mxu0 %v5496
        %5591 = vmatpush.xpose.msra.mxu0 %v5493
        %5592 = vmatpush.xpose.msra.mxu0 %v5490
        %5593 = vmatpush.xpose.msra.mxu0 %v5487
        %5594 = vmatpush.xpose.msra.mxu0 %v5484
        %5595 = vmatmul.f32.gmra.mxu0 %v5481
        %v5596 = vpop.f32.mrf.mxu0
        %v5597 = vadd.f32 %v5478, %v5596
        %5598 = vdwg.mxu0
        %5599 = vmatpush.xpose.msra.mxu0 %v5577
        %5600 = vmatpush.xpose.msra.mxu0 %v5574
        %5601 = vmatpush.xpose.msra.mxu0 %v5571
        %5602 = vmatpush.xpose.msra.mxu0 %v5568
        %5603 = vmatpush.xpose.msra.mxu0 %v5565
        %5604 = vmatpush.xpose.msra.mxu0 %v5562
        %5605 = vmatpush.xpose.msra.mxu0 %v5559
        %5606 = vmatpush.xpose.msra.mxu0 %v5556
        %5607 = vmatpush.xpose.msra.mxu0 %v5553
        %5608 = vmatpush.xpose.msra.mxu0 %v5550
        %5609 = vmatpush.xpose.msra.mxu0 %v5547
        %5610 = vmatpush.xpose.msra.mxu0 %v5544
        %5611 = vmatpush.xpose.msra.mxu0 %v5541
        %5612 = vmatpush.xpose.msra.mxu0 %v5538
        %5613 = vmatpush.xpose.msra.mxu0 %v5535
        %5614 = vmatpush.xpose.msra.mxu0 %v5532
        %5615 = vmatmul.f32.gmra.mxu0 %v5481
        %v5616 = vpop.f32.mrf.mxu0
        %v5617 = vadd.f32 %v5478, %v5616
        %5618 = vdwg.mxu0
        %v5619 = vmax.f32 %v5597, 0.0
        %v5620 = vmax.f32 %v5617, 0.0
        %5621 = vst [vmem:[%s271] sm:$0xff] %v5619
        %5622 = vst [vmem:[%s271 + $0x8] sm:$0xff] %v5620
        %s5623 = sand.u32 %s181, 1
        %s5624 = scalar_lea.sflag [#allocation5], %s5623
        %s5625 = sand.u32 %s181, 1
        %s5626 = smul.addr %s5625, 16
        %s5627 = scalar_lea.vmem [#allocation4], %s5626
        // Predicated region
        $region49: #{tpu_custom_call.1} parent=47 // pred_check
          %p5628 = pneg %p191
        $region50: #{tpu_custom_call.1} parent=47 // pred_check_branch
          %5630 = sbr.rel (%p5628) target = $region52
        $region51: #{tpu_custom_call.1} parent=47 // pred_region
          %5632 = vsyncadd %s5624, 0
          %s5633 = smul.addr %s21, 2
          %s5634 = smul.addr %s5633, 8
          %s5635 = scalar_lea.hbm %s7, %s5634
          %s5637 = sshll.u32 %s5627, 4
          %s5638 = int_to_ptr.vmem [resolvable:$true] %s5637
          %s5639 = sshll.u32 %s5635, 4
          %s5640 = int_to_ptr.hbm [resolvable:$true] %s5639
          %5642 = dma.vmem_to_hbm [thread:$0]  %s5638, 256, %s5640, %s5624
        $region52: #{tpu_custom_call.1} parent=47 // pred_fallthru
          _
      $region48: #{tpu_custom_call.1} parent=5 // pred_fallthru
        _
      %p5643 = scmp.le.s32.totalorder 2, %s16
      // Predicated region
      $region53: #{tpu_custom_call.1} parent=5 // pred_check
        %p5644 = pneg %p5643
      $region54: #{tpu_custom_call.1} parent=5 // pred_check_branch
        %5646 = sbr.rel (%p5644) target = $region56
      $region55: #{tpu_custom_call.1} parent=5 // pred_region
        %s5647 = ssub.s32 %s16, 2
        // Predicated region
        $region57: #{tpu_custom_call.1} parent=55 // pred_check
          %p5648 = pneg %p197
        $region58: #{tpu_custom_call.1} parent=55 // pred_check_branch
          %5650 = sbr.rel (%p5648) target = $region60
        $region59: #{tpu_custom_call.1} parent=55 // pred_region
          %s5651 = sand.u32 %s182, 1
          %s5652 = scalar_lea.sflag [#allocation5], %s5651
          %s5653 = sand.u32 %s182, 1
          %s5654 = smul.addr %s5653, 16
          %s5655 = scalar_lea.vmem [#allocation4], %s5654
          %5657 = dma.done %s5652, 256
        $region60: #{tpu_custom_call.1} parent=55 // pred_fallthru
          _
      $region56: #{tpu_custom_call.1} parent=5 // pred_fallthru
        _
    $region6: #{tpu_custom_call.1} parent=1 // loop_footer
      %s20 = sadd.s32 1, %s16
    $region7: #{tpu_custom_call.1} parent=1 // loop_footer_branch
      %15 = sbr.rel target = $region3
    $region8: #{tpu_custom_call.1} parent=1 // loop_exit
      _
    %5658 = vsyncpa [#allocation5], 1
    %s5659 = scalar_lea.sflag [#allocation5], 1
    %5660 = vsyncpa %s5659, 1

</llo_original>
